<compile_context>
chip_gen: v5e
topology: v5e:2x2
jax: 0.10.0
libtpu: 0.0.40
codegen_flags: <defaults>
</compile_context>

<pallas_src>
import jax
import jax.numpy as jnp
import numpy as np
from jax.experimental import pallas as pl
from jax.experimental.pallas import tpu as pltpu

_HIGHEST = jax.lax.Precision.HIGHEST


def _dot(a, b):
    return jax.lax.dot(a, b, precision=_HIGHEST, preferred_element_type=jnp.float32)


# ---------------------------------------------------------------------------
# Fused per-image kernel (one grid step == one image)
# ---------------------------------------------------------------------------
def _cnn_kernel(x_ref,
                m1_ref, su32_ref, sd32_ref, b1_ref, sel32_ref, csel1_ref,
                m2_ref, su16_ref, sd16_ref, b2_ref, sel16_ref, csel2_ref,
                wbig_ref, diag_ref, fold_ref, blp_ref,
                out_ref):
    # ---- conv1 (1->4, 3x3, pad 1) + bias + ReLU ------------------------------------
    x_img = x_ref[0, 0]                                     # [32, 32]
    y1 = _dot(x_img, m1_ref[...])                           # [32, 384]  (kh = 0 | 1 | 2)
    a1 = (_dot(su32_ref[...], y1[:, 0:128])                 # kh=0 tap (rows from h-1)
          + y1[:, 128:256]                                  # kh=1 tap
          + _dot(sd32_ref[...], y1[:, 256:384]))            # kh=2 tap (rows from h+1)
    a1 = jnp.maximum(a1 + b1_ref[...], 0.0)                 # [32, 128], lanes = c*32 + w

    # ---- maxpool 2x2 -> [16, 64], lanes = c*16 + w ----------------------------------
    t1 = _dot(sel32_ref[...], a1)                           # even rows | odd rows
    u1 = _dot(t1, csel1_ref[...])                           # even cols | odd cols
    p1 = jnp.maximum(jnp.maximum(u1[:16, :64], u1[:16, 64:]),
                     jnp.maximum(u1[16:, :64], u1[16:, 64:]))

    # ---- conv2 (4->8, 3x3, pad 1) + bias + ReLU --------------------------------------
    y2 = _dot(p1, m2_ref[...])                              # [16, 384]
    a2 = (_dot(su16_ref[...], y2[:, 0:128])
          + y2[:, 128:256]
          + _dot(sd16_ref[...], y2[:, 256:384]))
    a2 = jnp.maximum(a2 + b2_ref[...], 0.0)                 # [16, 128], lanes = co*16 + w

    # ---- maxpool 2x2 -> [8, 64], lanes = co*8 + w ------------------------------------
    t2 = _dot(sel16_ref[...], a2)
    u2 = _dot(t2, csel2_ref[...])
    p2 = jnp.maximum(jnp.maximum(u2[:8, :64], u2[:8, 64:]),
                     jnp.maximum(u2[8:, :64], u2[8:, 64:]))

    # ---- linear 512 -> 10 (output padded to 128 lanes) -------------------------------
    # Block-expanded weight: z[h, h'*16+n] = lane contraction as if the sublane were h';
    # the diagonal mask keeps h'==h, FOLD collapses the 8 blocks onto lanes 0..9 and the
    # sublane sum finishes the contraction over pooled rows.  The NCHW flatten of the
    # PyTorch view(-1, 512) is folded into WBIG on the host.
    z = _dot(p2, wbig_ref[...]) * diag_ref[...]             # [8, 128]
    out = jnp.sum(_dot(z, fold_ref[...]), axis=0, keepdims=True) + blp_ref[...]  # [1, 128]
    out_ref[...] = out.reshape(1, 1, 128)                   # single lane-dense store


# ---------------------------------------------------------------------------
# Host-side one-time parameter re-layout (weights only; no per-forward work)
# ---------------------------------------------------------------------------
def _shift_mats(n):
    su = np.zeros((n, n), np.float32)   # (su @ y)[h] = y[h-1], zero at h = 0
    sd = np.zeros((n, n), np.float32)   # (sd @ y)[h] = y[h+1], zero at h = n-1
    i = np.arange(n - 1)
    su[i + 1, i] = 1.0
    sd[i, i + 1] = 1.0
    return su, sd


def _row_pool_sel(h_out):
    """[2*h_out, 2*h_out]: top half picks even rows, bottom half picks odd rows."""
    s = np.zeros((2 * h_out, 2 * h_out), np.float32)
    r = np.arange(h_out)
    s[r, 2 * r] = 1.0
    s[h_out + r, 2 * r + 1] = 1.0
    return s


def _col_pool_sel(n_ch, w_in):
    """[n_ch*w_in, n_ch*w_in]: left half picks even cols, right half odd cols (per block)."""
    w_out = w_in // 2
    half = n_ch * w_out
    s = np.zeros((n_ch * w_in, 2 * half), np.float32)
    j = np.arange(w_out)
    for c in range(n_ch):
        s[c * w_in + 2 * j, c * w_out + j] = 1.0
        s[c * w_in + 2 * j + 1, half + c * w_out + j] = 1.0
    return s


def _banded_conv_weight(w, s_in):
    """w: [Cout, Cin, 3, 3] -> M: [Cin*s_in, 3*Cout*s_in] with
    M[ci*s_in + w_in, kh*Cout*s_in + co*s_in + w_out] = w[co, ci, kh, w_in - w_out + 1]."""
    cout, cin = w.shape[0], w.shape[1]
    m = np.zeros((cin, s_in, 3, cout, s_in), np.float32)
    for kh in range(3):
        for kw in range(3):
            for w_out in range(s_in):
                w_in = w_out + kw - 1
                if 0 <= w_in < s_in:
                    m[:, w_in, kh, :, w_out] = w[:, :, kh, kw].T
    return m.reshape(cin * s_in, 3 * cout * s_in)


def prepare_params(params):
    w1 = np.asarray(params["w1"], np.float32)   # [4, 1, 3, 3]
    b1 = np.asarray(params["b1"], np.float32)   # [4]
    w2 = np.asarray(params["w2"], np.float32)   # [8, 4, 3, 3]
    b2 = np.asarray(params["b2"], np.float32)   # [8]
    wl = np.asarray(params["wl"], np.float32)   # [10, 512]
    bl = np.asarray(params["bl"], np.float32)   # [10]

    su32, sd32 = _shift_mats(32)
    su16, sd16 = _shift_mats(16)

    # Linear stage constants (NCHW flatten c*64 + h*8 + w folded into WBIG).
    wl_r = wl.reshape(10, 8, 8, 8)                          # [n, co, h, w]
    wbig = np.zeros((8, 8, 8, 16), np.float32)              # [co, w, h, n(padded to 16)]
    wbig[:, :, :, :10] = np.transpose(wl_r, (1, 3, 2, 0))
    wbig = wbig.reshape(64, 128)

    diag = np.zeros((8, 128), np.float32)
    for h in range(8):
        diag[h, h * 16:(h + 1) * 16] = 1.0

    fold = np.zeros((128, 128), np.float32)
    for h in range(8):
        fold[h * 16 + np.arange(10), np.arange(10)] = 1.0

    blp = np.zeros((1, 128), np.float32)
    blp[0, :10] = bl

    return {
        "M1": _banded_conv_weight(w1, 32),                  # [32, 384]
        "SU32": su32, "SD32": sd32,                         # [32, 32] each
        "B1": np.repeat(b1, 32)[None, :],                   # [1, 128]
        "SEL32": _row_pool_sel(16),                         # [32, 32]
        "CSEL1": _col_pool_sel(4, 32),                      # [128, 128]
        "M2": _banded_conv_weight(w2, 16),                  # [64, 384]
        "SU16": su16, "SD16": sd16,                         # [16, 16] each
        "B2": np.repeat(b2, 16)[None, :],                   # [1, 128]
        "SEL16": _row_pool_sel(8),                          # [16, 16]
        "CSEL2": _col_pool_sel(8, 16),                      # [128, 128]
        "WBIG": wbig,                                       # [64, 128]
        "DIAG": diag,                                       # [8, 128]
        "FOLD": fold,                                       # [128, 128]
        "BLP": blp,                                         # [1, 128]
    }


_PREP_ORDER = ("M1", "SU32", "SD32", "B1", "SEL32", "CSEL1",
               "M2", "SU16", "SD16", "B2", "SEL16", "CSEL2",
               "WBIG", "DIAG", "FOLD", "BLP")


def _const_spec(arr):
    nd = arr.ndim
    return pl.BlockSpec(tuple(arr.shape), lambda i, _n=nd: (0,) * _n)


# ---------------------------------------------------------------------------
# Forward pass: a single fused pallas_call, gridded over the batch
# ---------------------------------------------------------------------------
@jax.jit
def cnn_forward(x_nchw, prep):
    B = x_nchw.shape[0]
    assert x_nchw.shape[1:] == (1, 32, 32), x_nchw.shape
    consts = [prep[k] for k in _PREP_ORDER]

    out_padded = pl.pallas_call(
        _cnn_kernel,
        out_shape=jax.ShapeDtypeStruct((B, 1, 128), jnp.float32),
        grid=(B,),
        in_specs=[pl.BlockSpec((1, 1, 32, 32), lambda i: (i, 0, 0, 0))]
                 + [_const_spec(c) for c in consts],
        out_specs=pl.BlockSpec((1, 1, 128), lambda i: (i, 0, 0)),
        compiler_params=pltpu.CompilerParams(
            dimension_semantics=("parallel",)),
    )(x_nchw, *consts)
    return out_padded[:, 0, :10]


# ---------------------------------------------------------------------------
# Pure-JAX reference (mirrors the PyTorch module), parameters, driver
# ---------------------------------------------------------------------------
def reference_forward(x, params):
    dn = ("NCHW", "OIHW", "NCHW")
    y = jax.lax.conv_general_dilated(x, params["w1"], (1, 1), ((1, 1), (1, 1)),
                                     dimension_numbers=dn, precision=_HIGHEST)
    y = jax.nn.relu(y + params["b1"][None, :, None, None])
    y = jax.lax.reduce_window(y, -jnp.inf, jax.lax.max, (1, 1, 2, 2), (1, 1, 2, 2), "VALID")
    z = jax.lax.conv_general_dilated(y, params["w2"], (1, 1), ((1, 1), (1, 1)),
                                     dimension_numbers=dn, precision=_HIGHEST)
    z = jax.nn.relu(z + params["b2"][None, :, None, None])
    z = jax.lax.reduce_window(z, -jnp.inf, jax.lax.max, (1, 1, 2, 2), (1, 1, 2, 2), "VALID")
    zf = z.reshape(z.shape[0], -1)                          # NCHW flatten == x.view(-1, 512)
    return jnp.dot(zf, params["wl"].T, precision=_HIGHEST) + params["bl"]


def init_params(key):
    k1, k2, k3, k4, k5, k6 = jax.random.split(key, 6)
    return {
        "w1": 0.1 * jax.random.normal(k1, (4, 1, 3, 3), jnp.float32),
        "b1": 0.1 * jax.random.normal(k2, (4,), jnp.float32),
        "w2": 0.1 * jax.random.normal(k3, (8, 4, 3, 3), jnp.float32),
        "b2": 0.1 * jax.random.normal(k4, (8,), jnp.float32),
        "wl": 0.1 * jax.random.normal(k5, (10, 8 * 8 * 8), jnp.float32),
        "bl": 0.1 * jax.random.normal(k6, (10,), jnp.float32),
    }


if __name__ == "__main__":
    root = jax.random.PRNGKey(0)
    kx, kp = jax.random.split(root)
    # The 8*8*8 linear after two 2x2 pools implies a 32x32 single-channel input.
    x = jax.random.normal(kx, (2, 1, 32, 32), jnp.float32)
    params = init_params(kp)
    prep = prepare_params(params)

    out = cnn_forward(x, prep)
    out = jax.block_until_ready(out)
    assert out.shape == (2, 10), out.shape

    ref = reference_forward(x, params)
    err = float(jnp.max(jnp.abs(out - ref)))
    assert err < 1e-4, f"kernel/reference mismatch: max abs err = {err}"
    print("KERNEL_OK")
</pallas_src>

<mosaic_0001>
module attributes {stable_mosaic.version = 11 : i64} {
  func.func @_cnn_kernel(%arg0: i32, %arg1: memref<1x1x32x32xf32, #tpu.memory_space<vmem>>, %arg2: memref<32x384xf32, #tpu.memory_space<vmem>>, %arg3: memref<32x32xf32, #tpu.memory_space<vmem>>, %arg4: memref<32x32xf32, #tpu.memory_space<vmem>>, %arg5: memref<1x128xf32, #tpu.memory_space<vmem>>, %arg6: memref<32x32xf32, #tpu.memory_space<vmem>>, %arg7: memref<128x128xf32, #tpu.memory_space<vmem>>, %arg8: memref<64x384xf32, #tpu.memory_space<vmem>>, %arg9: memref<16x16xf32, #tpu.memory_space<vmem>>, %arg10: memref<16x16xf32, #tpu.memory_space<vmem>>, %arg11: memref<1x128xf32, #tpu.memory_space<vmem>>, %arg12: memref<16x16xf32, #tpu.memory_space<vmem>>, %arg13: memref<128x128xf32, #tpu.memory_space<vmem>>, %arg14: memref<64x128xf32, #tpu.memory_space<vmem>>, %arg15: memref<8x128xf32, #tpu.memory_space<vmem>>, %arg16: memref<128x128xf32, #tpu.memory_space<vmem>>, %arg17: memref<1x128xf32, #tpu.memory_space<vmem>>, %arg18: memref<1x1x128xf32, #tpu.memory_space<vmem>>) attributes {dimension_semantics = [#tpu.dimension_semantics<parallel>], iteration_bounds = array<i64: 2>, scalar_prefetch = 0 : i64, scratch_operands = 0 : i64, tpu.core_type = #tpu.core_type<tc>, window_params = [{transform_indices = @transform_0, window_bounds = array<i64: 1, 1, 32, 32>}, {pipeline_mode = #tpu.pipeline_mode<synchronous>, transform_indices = @transform_1, window_bounds = array<i64: 32, 384>}, {pipeline_mode = #tpu.pipeline_mode<synchronous>, transform_indices = @transform_2, window_bounds = array<i64: 32, 32>}, {pipeline_mode = #tpu.pipeline_mode<synchronous>, transform_indices = @transform_3, window_bounds = array<i64: 32, 32>}, {pipeline_mode = #tpu.pipeline_mode<synchronous>, transform_indices = @transform_4, window_bounds = array<i64: 1, 128>}, {pipeline_mode = #tpu.pipeline_mode<synchronous>, transform_indices = @transform_5, window_bounds = array<i64: 32, 32>}, {pipeline_mode = #tpu.pipeline_mode<synchronous>, transform_indices = @transform_6, window_bounds = array<i64: 128, 128>}, {pipeline_mode = #tpu.pipeline_mode<synchronous>, transform_indices = @transform_7, window_bounds = array<i64: 64, 384>}, {pipeline_mode = #tpu.pipeline_mode<synchronous>, transform_indices = @transform_8, window_bounds = array<i64: 16, 16>}, {pipeline_mode = #tpu.pipeline_mode<synchronous>, transform_indices = @transform_9, window_bounds = array<i64: 16, 16>}, {pipeline_mode = #tpu.pipeline_mode<synchronous>, transform_indices = @transform_10, window_bounds = array<i64: 1, 128>}, {pipeline_mode = #tpu.pipeline_mode<synchronous>, transform_indices = @transform_11, window_bounds = array<i64: 16, 16>}, {pipeline_mode = #tpu.pipeline_mode<synchronous>, transform_indices = @transform_12, window_bounds = array<i64: 128, 128>}, {pipeline_mode = #tpu.pipeline_mode<synchronous>, transform_indices = @transform_13, window_bounds = array<i64: 64, 128>}, {pipeline_mode = #tpu.pipeline_mode<synchronous>, transform_indices = @transform_14, window_bounds = array<i64: 8, 128>}, {pipeline_mode = #tpu.pipeline_mode<synchronous>, transform_indices = @transform_15, window_bounds = array<i64: 128, 128>}, {pipeline_mode = #tpu.pipeline_mode<synchronous>, transform_indices = @transform_16, window_bounds = array<i64: 1, 128>}, {transform_indices = @transform_17, window_bounds = array<i64: 1, 1, 128>}]} {
    %c0 = arith.constant 0 : index
    %c0_0 = arith.constant 0 : index
    %c0_1 = arith.constant 0 : index
    %c0_2 = arith.constant 0 : index
    %0 = vector.load %arg1[%c0, %c0_0, %c0_1, %c0_2] : memref<1x1x32x32xf32, #tpu.memory_space<vmem>>, vector<1x1x32x32xf32>
    %1 = vector.shape_cast %0 : vector<1x1x32x32xf32> to vector<32x32xf32>
    %c0_3 = arith.constant 0 : index
    %c0_4 = arith.constant 0 : index
    %2 = vector.load %arg2[%c0_3, %c0_4] : memref<32x384xf32, #tpu.memory_space<vmem>>, vector<32x384xf32>
    %cst = arith.constant dense<0.000000e+00> : vector<32x384xf32>
    %3 = tpu.matmul %1, %2, %cst {dimension_numbers = #tpu.dot_dimension_numbers<[1], [0], [0], [1], [0, 0, 1, 1], [], []>, precision = #tpu.contract_precision<fp32>} : vector<32x32xf32>, vector<32x384xf32>, vector<32x384xf32> -> vector<32x384xf32>
    %c0_5 = arith.constant 0 : index
    %c0_6 = arith.constant 0 : index
    %4 = vector.load %arg3[%c0_5, %c0_6] : memref<32x32xf32, #tpu.memory_space<vmem>>, vector<32x32xf32>
    %5 = vector.extract_strided_slice %3 {offsets = [0, 0], sizes = [32, 128], strides = [1, 1]} : vector<32x384xf32> to vector<32x128xf32>
    %cst_7 = arith.constant dense<0.000000e+00> : vector<32x128xf32>
    %6 = tpu.matmul %4, %5, %cst_7 {dimension_numbers = #tpu.dot_dimension_numbers<[1], [0], [0], [1], [0, 0, 1, 1], [], []>, precision = #tpu.contract_precision<fp32>} : vector<32x32xf32>, vector<32x128xf32>, vector<32x128xf32> -> vector<32x128xf32>
    %7 = vector.extract_strided_slice %3 {offsets = [0, 128], sizes = [32, 128], strides = [1, 1]} : vector<32x384xf32> to vector<32x128xf32>
    %8 = arith.addf %6, %7 : vector<32x128xf32>
    %c0_8 = arith.constant 0 : index
    %c0_9 = arith.constant 0 : index
    %9 = vector.load %arg4[%c0_8, %c0_9] : memref<32x32xf32, #tpu.memory_space<vmem>>, vector<32x32xf32>
    %10 = vector.extract_strided_slice %3 {offsets = [0, 256], sizes = [32, 128], strides = [1, 1]} : vector<32x384xf32> to vector<32x128xf32>
    %cst_10 = arith.constant dense<0.000000e+00> : vector<32x128xf32>
    %11 = tpu.matmul %9, %10, %cst_10 {dimension_numbers = #tpu.dot_dimension_numbers<[1], [0], [0], [1], [0, 0, 1, 1], [], []>, precision = #tpu.contract_precision<fp32>} : vector<32x32xf32>, vector<32x128xf32>, vector<32x128xf32> -> vector<32x128xf32>
    %12 = arith.addf %8, %11 : vector<32x128xf32>
    %c0_11 = arith.constant 0 : index
    %c0_12 = arith.constant 0 : index
    %13 = vector.load %arg5[%c0_11, %c0_12] : memref<1x128xf32, #tpu.memory_space<vmem>>, vector<1x128xf32>
    %14 = vector.broadcast %13 : vector<1x128xf32> to vector<32x128xf32>
    %15 = arith.addf %12, %14 : vector<32x128xf32>
    %cst_13 = arith.constant 0.000000e+00 : f32
    %16 = vector.broadcast %cst_13 : f32 to vector<32x128xf32>
    %17 = arith.maximumf %15, %16 : vector<32x128xf32>
    %c0_14 = arith.constant 0 : index
    %c0_15 = arith.constant 0 : index
    %18 = vector.load %arg6[%c0_14, %c0_15] : memref<32x32xf32, #tpu.memory_space<vmem>>, vector<32x32xf32>
    %cst_16 = arith.constant dense<0.000000e+00> : vector<32x128xf32>
    %19 = tpu.matmul %18, %17, %cst_16 {dimension_numbers = #tpu.dot_dimension_numbers<[1], [0], [0], [1], [0, 0, 1, 1], [], []>, precision = #tpu.contract_precision<fp32>} : vector<32x32xf32>, vector<32x128xf32>, vector<32x128xf32> -> vector<32x128xf32>
    %c0_17 = arith.constant 0 : index
    %c0_18 = arith.constant 0 : index
    %20 = vector.load %arg7[%c0_17, %c0_18] : memref<128x128xf32, #tpu.memory_space<vmem>>, vector<128x128xf32>
    %cst_19 = arith.constant dense<0.000000e+00> : vector<32x128xf32>
    %21 = tpu.matmul %19, %20, %cst_19 {dimension_numbers = #tpu.dot_dimension_numbers<[1], [0], [0], [1], [0, 0, 1, 1], [], []>, precision = #tpu.contract_precision<fp32>} : vector<32x128xf32>, vector<128x128xf32>, vector<32x128xf32> -> vector<32x128xf32>
    %22 = vector.extract_strided_slice %21 {offsets = [0, 0], sizes = [16, 64], strides = [1, 1]} : vector<32x128xf32> to vector<16x64xf32>
    %23 = vector.extract_strided_slice %21 {offsets = [0, 64], sizes = [16, 64], strides = [1, 1]} : vector<32x128xf32> to vector<16x64xf32>
    %24 = arith.maximumf %22, %23 : vector<16x64xf32>
    %25 = vector.extract_strided_slice %21 {offsets = [16, 0], sizes = [16, 64], strides = [1, 1]} : vector<32x128xf32> to vector<16x64xf32>
    %26 = vector.extract_strided_slice %21 {offsets = [16, 64], sizes = [16, 64], strides = [1, 1]} : vector<32x128xf32> to vector<16x64xf32>
    %27 = arith.maximumf %25, %26 : vector<16x64xf32>
    %28 = arith.maximumf %24, %27 : vector<16x64xf32>
    %c0_20 = arith.constant 0 : index
    %c0_21 = arith.constant 0 : index
    %29 = vector.load %arg8[%c0_20, %c0_21] : memref<64x384xf32, #tpu.memory_space<vmem>>, vector<64x384xf32>
    %cst_22 = arith.constant dense<0.000000e+00> : vector<16x384xf32>
    %30 = tpu.matmul %28, %29, %cst_22 {dimension_numbers = #tpu.dot_dimension_numbers<[1], [0], [0], [1], [0, 0, 1, 1], [], []>, precision = #tpu.contract_precision<fp32>} : vector<16x64xf32>, vector<64x384xf32>, vector<16x384xf32> -> vector<16x384xf32>
    %c0_23 = arith.constant 0 : index
    %c0_24 = arith.constant 0 : index
    %31 = vector.load %arg9[%c0_23, %c0_24] : memref<16x16xf32, #tpu.memory_space<vmem>>, vector<16x16xf32>
    %32 = vector.extract_strided_slice %30 {offsets = [0, 0], sizes = [16, 128], strides = [1, 1]} : vector<16x384xf32> to vector<16x128xf32>
    %cst_25 = arith.constant dense<0.000000e+00> : vector<16x128xf32>
    %33 = tpu.matmul %31, %32, %cst_25 {dimension_numbers = #tpu.dot_dimension_numbers<[1], [0], [0], [1], [0, 0, 1, 1], [], []>, precision = #tpu.contract_precision<fp32>} : vector<16x16xf32>, vector<16x128xf32>, vector<16x128xf32> -> vector<16x128xf32>
    %34 = vector.extract_strided_slice %30 {offsets = [0, 128], sizes = [16, 128], strides = [1, 1]} : vector<16x384xf32> to vector<16x128xf32>
    %35 = arith.addf %33, %34 : vector<16x128xf32>
    %c0_26 = arith.constant 0 : index
    %c0_27 = arith.constant 0 : index
    %36 = vector.load %arg10[%c0_26, %c0_27] : memref<16x16xf32, #tpu.memory_space<vmem>>, vector<16x16xf32>
    %37 = vector.extract_strided_slice %30 {offsets = [0, 256], sizes = [16, 128], strides = [1, 1]} : vector<16x384xf32> to vector<16x128xf32>
    %cst_28 = arith.constant dense<0.000000e+00> : vector<16x128xf32>
    %38 = tpu.matmul %36, %37, %cst_28 {dimension_numbers = #tpu.dot_dimension_numbers<[1], [0], [0], [1], [0, 0, 1, 1], [], []>, precision = #tpu.contract_precision<fp32>} : vector<16x16xf32>, vector<16x128xf32>, vector<16x128xf32> -> vector<16x128xf32>
    %39 = arith.addf %35, %38 : vector<16x128xf32>
    %c0_29 = arith.constant 0 : index
    %c0_30 = arith.constant 0 : index
    %40 = vector.load %arg11[%c0_29, %c0_30] : memref<1x128xf32, #tpu.memory_space<vmem>>, vector<1x128xf32>
    %41 = vector.broadcast %40 : vector<1x128xf32> to vector<16x128xf32>
    %42 = arith.addf %39, %41 : vector<16x128xf32>
    %cst_31 = arith.constant 0.000000e+00 : f32
    %43 = vector.broadcast %cst_31 : f32 to vector<16x128xf32>
    %44 = arith.maximumf %42, %43 : vector<16x128xf32>
    %c0_32 = arith.constant 0 : index
    %c0_33 = arith.constant 0 : index
    %45 = vector.load %arg12[%c0_32, %c0_33] : memref<16x16xf32, #tpu.memory_space<vmem>>, vector<16x16xf32>
    %cst_34 = arith.constant dense<0.000000e+00> : vector<16x128xf32>
    %46 = tpu.matmul %45, %44, %cst_34 {dimension_numbers = #tpu.dot_dimension_numbers<[1], [0], [0], [1], [0, 0, 1, 1], [], []>, precision = #tpu.contract_precision<fp32>} : vector<16x16xf32>, vector<16x128xf32>, vector<16x128xf32> -> vector<16x128xf32>
    %c0_35 = arith.constant 0 : index
    %c0_36 = arith.constant 0 : index
    %47 = vector.load %arg13[%c0_35, %c0_36] : memref<128x128xf32, #tpu.memory_space<vmem>>, vector<128x128xf32>
    %cst_37 = arith.constant dense<0.000000e+00> : vector<16x128xf32>
    %48 = tpu.matmul %46, %47, %cst_37 {dimension_numbers = #tpu.dot_dimension_numbers<[1], [0], [0], [1], [0, 0, 1, 1], [], []>, precision = #tpu.contract_precision<fp32>} : vector<16x128xf32>, vector<128x128xf32>, vector<16x128xf32> -> vector<16x128xf32>
    %49 = vector.extract_strided_slice %48 {offsets = [0, 0], sizes = [8, 64], strides = [1, 1]} : vector<16x128xf32> to vector<8x64xf32>
    %50 = vector.extract_strided_slice %48 {offsets = [0, 64], sizes = [8, 64], strides = [1, 1]} : vector<16x128xf32> to vector<8x64xf32>
    %51 = arith.maximumf %49, %50 : vector<8x64xf32>
    %52 = vector.extract_strided_slice %48 {offsets = [8, 0], sizes = [8, 64], strides = [1, 1]} : vector<16x128xf32> to vector<8x64xf32>
    %53 = vector.extract_strided_slice %48 {offsets = [8, 64], sizes = [8, 64], strides = [1, 1]} : vector<16x128xf32> to vector<8x64xf32>
    %54 = arith.maximumf %52, %53 : vector<8x64xf32>
    %55 = arith.maximumf %51, %54 : vector<8x64xf32>
    %c0_38 = arith.constant 0 : index
    %c0_39 = arith.constant 0 : index
    %56 = vector.load %arg14[%c0_38, %c0_39] : memref<64x128xf32, #tpu.memory_space<vmem>>, vector<64x128xf32>
    %cst_40 = arith.constant dense<0.000000e+00> : vector<8x128xf32>
    %57 = tpu.matmul %55, %56, %cst_40 {dimension_numbers = #tpu.dot_dimension_numbers<[1], [0], [0], [1], [0, 0, 1, 1], [], []>, precision = #tpu.contract_precision<fp32>} : vector<8x64xf32>, vector<64x128xf32>, vector<8x128xf32> -> vector<8x128xf32>
    %c0_41 = arith.constant 0 : index
    %c0_42 = arith.constant 0 : index
    %58 = vector.load %arg15[%c0_41, %c0_42] : memref<8x128xf32, #tpu.memory_space<vmem>>, vector<8x128xf32>
    %59 = arith.mulf %57, %58 : vector<8x128xf32>
    %c0_43 = arith.constant 0 : index
    %c0_44 = arith.constant 0 : index
    %60 = vector.load %arg16[%c0_43, %c0_44] : memref<128x128xf32, #tpu.memory_space<vmem>>, vector<128x128xf32>
    %cst_45 = arith.constant dense<0.000000e+00> : vector<8x128xf32>
    %61 = tpu.matmul %59, %60, %cst_45 {dimension_numbers = #tpu.dot_dimension_numbers<[1], [0], [0], [1], [0, 0, 1, 1], [], []>, precision = #tpu.contract_precision<fp32>} : vector<8x128xf32>, vector<128x128xf32>, vector<8x128xf32> -> vector<8x128xf32>
    %cst_46 = arith.constant dense<0.000000e+00> : vector<128xf32>
    %62 = vector.multi_reduction <add>, %61, %cst_46 [0] : vector<8x128xf32> to vector<128xf32>
    %63 = vector.shape_cast %62 : vector<128xf32> to vector<1x128xf32>
    %c0_47 = arith.constant 0 : index
    %c0_48 = arith.constant 0 : index
    %64 = vector.load %arg17[%c0_47, %c0_48] : memref<1x128xf32, #tpu.memory_space<vmem>>, vector<1x128xf32>
    %65 = arith.addf %63, %64 : vector<1x128xf32>
    %66 = vector.shape_cast %65 : vector<1x128xf32> to vector<1x1x128xf32>
    %c0_49 = arith.constant 0 : index
    %c0_50 = arith.constant 0 : index
    %c0_51 = arith.constant 0 : index
    %67 = vector.load %arg18[%c0_49, %c0_50, %c0_51] : memref<1x1x128xf32, #tpu.memory_space<vmem>>, vector<1x1x128xf32>
    tpu.vector_store %arg18[%c0_49, %c0_50, %c0_51], %66 {strides = array<i32>} : memref<1x1x128xf32, #tpu.memory_space<vmem>>, vector<1x1x128xf32>,
    return
  }
  func.func @transform_0(%arg0: i32) -> (i32, i32, i32, i32) {
    %c0_i32 = arith.constant 0 : i32
    %c0_i32_0 = arith.constant 0 : i32
    %c0_i32_1 = arith.constant 0 : i32
    %c0_i32_2 = arith.constant 0 : i32
    return %arg0, %c0_i32, %c0_i32_0, %c0_i32_1 : i32, i32, i32, i32
  }
  func.func @transform_1(%arg0: i32) -> (i32, i32) {
    %c0_i32 = arith.constant 0 : i32
    %c0_i32_0 = arith.constant 0 : i32
    %c0_i32_1 = arith.constant 0 : i32
    return %c0_i32, %c0_i32_0 : i32, i32
  }
  func.func @transform_2(%arg0: i32) -> (i32, i32) {
    %c0_i32 = arith.constant 0 : i32
    %c0_i32_0 = arith.constant 0 : i32
    %c0_i32_1 = arith.constant 0 : i32
    return %c0_i32, %c0_i32_0 : i32, i32
  }
  func.func @transform_3(%arg0: i32) -> (i32, i32) {
    %c0_i32 = arith.constant 0 : i32
    %c0_i32_0 = arith.constant 0 : i32
    %c0_i32_1 = arith.constant 0 : i32
    return %c0_i32, %c0_i32_0 : i32, i32
  }
  func.func @transform_4(%arg0: i32) -> (i32, i32) {
    %c0_i32 = arith.constant 0 : i32
    %c0_i32_0 = arith.constant 0 : i32
    %c0_i32_1 = arith.constant 0 : i32
    return %c0_i32, %c0_i32_0 : i32, i32
  }
  func.func @transform_5(%arg0: i32) -> (i32, i32) {
    %c0_i32 = arith.constant 0 : i32
    %c0_i32_0 = arith.constant 0 : i32
    %c0_i32_1 = arith.constant 0 : i32
    return %c0_i32, %c0_i32_0 : i32, i32
  }
  func.func @transform_6(%arg0: i32) -> (i32, i32) {
    %c0_i32 = arith.constant 0 : i32
    %c0_i32_0 = arith.constant 0 : i32
    %c0_i32_1 = arith.constant 0 : i32
    return %c0_i32, %c0_i32_0 : i32, i32
  }
  func.func @transform_7(%arg0: i32) -> (i32, i32) {
    %c0_i32 = arith.constant 0 : i32
    %c0_i32_0 = arith.constant 0 : i32
    %c0_i32_1 = arith.constant 0 : i32
    return %c0_i32, %c0_i32_0 : i32, i32
  }
  func.func @transform_8(%arg0: i32) -> (i32, i32) {
    %c0_i32 = arith.constant 0 : i32
    %c0_i32_0 = arith.constant 0 : i32
    %c0_i32_1 = arith.constant 0 : i32
    return %c0_i32, %c0_i32_0 : i32, i32
  }
  func.func @transform_9(%arg0: i32) -> (i32, i32) {
    %c0_i32 = arith.constant 0 : i32
    %c0_i32_0 = arith.constant 0 : i32
    %c0_i32_1 = arith.constant 0 : i32
    return %c0_i32, %c0_i32_0 : i32, i32
  }
  func.func @transform_10(%arg0: i32) -> (i32, i32) {
    %c0_i32 = arith.constant 0 : i32
    %c0_i32_0 = arith.constant 0 : i32
    %c0_i32_1 = arith.constant 0 : i32
    return %c0_i32, %c0_i32_0 : i32, i32
  }
  func.func @transform_11(%arg0: i32) -> (i32, i32) {
    %c0_i32 = arith.constant 0 : i32
    %c0_i32_0 = arith.constant 0 : i32
    %c0_i32_1 = arith.constant 0 : i32
    return %c0_i32, %c0_i32_0 : i32, i32
  }
  func.func @transform_12(%arg0: i32) -> (i32, i32) {
    %c0_i32 = arith.constant 0 : i32
    %c0_i32_0 = arith.constant 0 : i32
    %c0_i32_1 = arith.constant 0 : i32
    return %c0_i32, %c0_i32_0 : i32, i32
  }
  func.func @transform_13(%arg0: i32) -> (i32, i32) {
    %c0_i32 = arith.constant 0 : i32
    %c0_i32_0 = arith.constant 0 : i32
    %c0_i32_1 = arith.constant 0 : i32
    return %c0_i32, %c0_i32_0 : i32, i32
  }
  func.func @transform_14(%arg0: i32) -> (i32, i32) {
    %c0_i32 = arith.constant 0 : i32
    %c0_i32_0 = arith.constant 0 : i32
    %c0_i32_1 = arith.constant 0 : i32
    return %c0_i32, %c0_i32_0 : i32, i32
  }
  func.func @transform_15(%arg0: i32) -> (i32, i32) {
    %c0_i32 = arith.constant 0 : i32
    %c0_i32_0 = arith.constant 0 : i32
    %c0_i32_1 = arith.constant 0 : i32
    return %c0_i32, %c0_i32_0 : i32, i32
  }
  func.func @transform_16(%arg0: i32) -> (i32, i32) {
    %c0_i32 = arith.constant 0 : i32
    %c0_i32_0 = arith.constant 0 : i32
    %c0_i32_1 = arith.constant 0 : i32
    return %c0_i32, %c0_i32_0 : i32, i32
  }
  func.func @transform_17(%arg0: i32) -> (i32, i32, i32) {
    %c0_i32 = arith.constant 0 : i32
    %c0_i32_0 = arith.constant 0 : i32
    %c0_i32_1 = arith.constant 0 : i32
    return %arg0, %c0_i32, %c0_i32_0 : i32, i32, i32
  }
}

</mosaic_0001>

<llo_original>
// kernel: cnn_forward.1
$region0: #{cnn_forward.1}
  #allocation0 [shape = 'u32[]', space=smem, size = 0x4, offset = 0x4, fixed_abs, tag = 'smem constant byte address 0x4 - core index']
  #allocation1 [shape = 'u32[72,128]{1,0:T(1,128)}', space=vmem, size = 0x9000, scoped, tag = 'internal scratch']
  %s0 = inlined_call_operand.hbm [shape: f32[2,1,32,32], index: 0, kind: input, shape index: {}]
  %s1 = inlined_call_operand.hbm [shape: f32[32,384], index: 1, kind: input, shape index: {}]
  %s2 = inlined_call_operand.hbm [shape: f32[32,32], index: 2, kind: input, shape index: {}]
  %s3 = inlined_call_operand.hbm [shape: f32[32,32], index: 3, kind: input, shape index: {}]
  %s4 = inlined_call_operand.hbm [shape: f32[1,128], index: 4, kind: input, shape index: {}]
  %s5 = inlined_call_operand.hbm [shape: f32[32,32], index: 5, kind: input, shape index: {}]
  %s6 = inlined_call_operand.hbm [shape: f32[128,128], index: 6, kind: input, shape index: {}]
  %s7 = inlined_call_operand.hbm [shape: f32[64,384], index: 7, kind: input, shape index: {}]
  %s8 = inlined_call_operand.hbm [shape: f32[16,16], index: 8, kind: input, shape index: {}]
  %s9 = inlined_call_operand.hbm [shape: f32[16,16], index: 9, kind: input, shape index: {}]
  %s10 = inlined_call_operand.vmem [shape: f32[1,128], index: 10, kind: input, shape index: {}]
  %s11 = inlined_call_operand.hbm [shape: f32[16,16], index: 11, kind: input, shape index: {}]
  %s12 = inlined_call_operand.hbm [shape: f32[128,128], index: 12, kind: input, shape index: {}]
  %s13 = inlined_call_operand.hbm [shape: f32[64,128], index: 13, kind: input, shape index: {}]
  %s14 = inlined_call_operand.hbm [shape: f32[8,128], index: 14, kind: input, shape index: {}]
  %s15 = inlined_call_operand.hbm [shape: f32[128,128], index: 15, kind: input, shape index: {}]
  %s16 = inlined_call_operand.vmem [shape: f32[1,128], index: 16, kind: input, shape index: {}]
  %s17 = inlined_call_operand.hbm [shape: f32[2,1,128], index: 17, kind: output, shape index: {}]
  %s18 = sld [smem:[#allocation0]]
  $region161: #{cnn_forward.1} parent=0
    _
  %s20 = ssub.s32 1, %s18
  %s21 = scalar_select 0, %s20, %s18
  $region1: #{cnn_forward.1} parent=0
    #allocation2 [shape = 'u8[32768]{0}', space=vmem, size = 0x8000, scoped, tag = 'input window, operand 0']
    #allocation3 [shape = 's32[2]{0}', space=sflag, size = 0x8, scoped, tag = 'scoped memory for cnn_forward.1']
    #allocation4 [shape = 's32[2]{0}', space=sflag, size = 0x8, scoped, tag = 'scoped memory for cnn_forward.1']
    #allocation5 [shape = 'u8[49152]{0}', space=vmem, size = 0xc000, scoped, tag = 'input window, operand 1, single buffered']
    #allocation6 [shape = 's32[1]{0}', space=sflag, size = 0x4, scoped, tag = 'scoped memory for cnn_forward.1']
    #allocation7 [shape = 'u8[16384]{0}', space=vmem, size = 0x4000, scoped, tag = 'input window, operand 2, single buffered']
    #allocation8 [shape = 'u8[16384]{0}', space=vmem, size = 0x4000, scoped, tag = 'input window, operand 3, single buffered']
    #allocation9 [shape = 's32[1]{0}', space=sflag, size = 0x4, scoped, tag = 'scoped memory for cnn_forward.1']
    #allocation10 [shape = 'u8[512]{0}', space=vmem, size = 0x400, scoped, tag = 'input window, operand 4, single buffered']
    #allocation11 [shape = 'u8[16384]{0}', space=vmem, size = 0x4000, scoped, tag = 'input window, operand 5, single buffered']
    #allocation12 [shape = 's32[1]{0}', space=sflag, size = 0x4, scoped, tag = 'scoped memory for cnn_forward.1']
    #allocation13 [shape = 'u8[65536]{0}', space=vmem, size = 0x10000, scoped, tag = 'input window, operand 6, single buffered']
    #allocation14 [shape = 'u8[98304]{0}', space=vmem, size = 0x18000, scoped, tag = 'input window, operand 7, single buffered']
    #allocation15 [shape = 's32[1]{0}', space=sflag, size = 0x4, scoped, tag = 'scoped memory for cnn_forward.1']
    #allocation16 [shape = 'u8[8192]{0}', space=vmem, size = 0x2000, scoped, tag = 'input window, operand 8, single buffered']
    #allocation17 [shape = 'u8[8192]{0}', space=vmem, size = 0x2000, scoped, tag = 'input window, operand 9, single buffered']
    #allocation18 [shape = 's32[1]{0}', space=sflag, size = 0x4, scoped, tag = 'scoped memory for cnn_forward.1']
    #allocation19 [shape = 'u8[8192]{0}', space=vmem, size = 0x2000, scoped, tag = 'input window, operand 11, single buffered']
    #allocation20 [shape = 'u8[65536]{0}', space=vmem, size = 0x10000, scoped, tag = 'input window, operand 12, single buffered']
    #allocation21 [shape = 's32[1]{0}', space=sflag, size = 0x4, scoped, tag = 'scoped memory for cnn_forward.1']
    #allocation22 [shape = 'u8[32768]{0}', space=vmem, size = 0x8000, scoped, tag = 'input window, operand 13, single buffered']
    #allocation23 [shape = 'u8[4096]{0}', space=vmem, size = 0x1000, scoped, tag = 'input window, operand 14, single buffered']
    #allocation24 [shape = 's32[1]{0}', space=sflag, size = 0x4, scoped, tag = 'scoped memory for cnn_forward.1']
    #allocation25 [shape = 'u8[65536]{0}', space=vmem, size = 0x10000, scoped, tag = 'input window, operand 15, single buffered']
    #allocation26 [shape = 'u8[1024]{0}', space=vmem, size = 0x400, scoped, tag = 'output window, operand 0']
    %22 = vsyncpa [#allocation3], 0
    %s23 = scalar_lea.sflag [#allocation3], 1
    %24 = vsyncpa %s23, 0
    %25 = vsyncpa [#allocation6], 0
    %26 = vsyncpa [#allocation9], 0
    %27 = vsyncpa [#allocation12], 0
    %28 = vsyncpa [#allocation15], 0
    %29 = vsyncpa [#allocation18], 0
    %30 = vsyncpa [#allocation21], 0
    %31 = vsyncpa [#allocation24], 0
    %32 = vsyncpa [#allocation4], 0
    %s33 = scalar_lea.sflag [#allocation4], 1
    %34 = vsyncpa %s33, 0
    loop: start=0, step=1, limit=4
    $region2: #{cnn_forward.1} parent=1 // loop_pre_header
      _
    $region3: #{cnn_forward.1} parent=1 // loop_header
      %s36 = sphi 0, %s40
      %p37 = scmp.ge.s32.totalorder %s36, 4
      %s46 = sphi 0, %s48
      %s49 = sphi 0, %s46
      %s50 = sphi 0, %s49
      %s66 = sphi 0, %s50
      %s70 = sphi 0, %s70
      %s72 = sphi 0, %s70
      %s73 = sphi 0, %s72
      %s87 = sphi 0, %s73
      %s91 = sphi 0, %s91
      %s93 = sphi 0, %s91
      %s94 = sphi 0, %s93
      %s108 = sphi 0, %s94
      %s112 = sphi 0, %s112
      %s114 = sphi 0, %s112
      %s115 = sphi 0, %s114
      %s129 = sphi 0, %s115
      %s133 = sphi 0, %s133
      %s135 = sphi 0, %s133
      %s136 = sphi 0, %s135
      %s150 = sphi 0, %s136
      %s154 = sphi 0, %s154
      %s156 = sphi 0, %s154
      %s157 = sphi 0, %s156
      %s171 = sphi 0, %s157
      %s175 = sphi 0, %s175
      %s177 = sphi 0, %s175
      %s178 = sphi 0, %s177
      %s192 = sphi 0, %s178
      %s196 = sphi 0, %s196
      %s198 = sphi 0, %s196
      %s199 = sphi 0, %s198
      %s213 = sphi 0, %s199
      %s217 = sphi 0, %s217
      %s219 = sphi 0, %s217
      %s220 = sphi 0, %s219
      %s234 = sphi 0, %s220
      %s238 = sphi 0, %s238
      %s240 = sphi 0, %s238
      %s241 = sphi 0, %s240
      %s255 = sphi 0, %s241
      %s259 = sphi 0, %s259
      %s261 = sphi 0, %s259
      %s262 = sphi 0, %s261
      %s276 = sphi 0, %s262
      %s280 = sphi 0, %s280
      %s282 = sphi 0, %s280
      %s283 = sphi 0, %s282
      %s297 = sphi 0, %s283
      %s301 = sphi 0, %s301
      %s303 = sphi 0, %s301
      %s304 = sphi 0, %s303
      %s318 = sphi 0, %s304
      %s322 = sphi 0, %s322
      %s324 = sphi 0, %s322
      %s325 = sphi 0, %s324
      %s339 = sphi 0, %s325
      %s343 = sphi 0, %s343
      %s345 = sphi 0, %s343
      %s346 = sphi 0, %s345
      %s360 = sphi 0, %s346
      %s364 = sphi 0, %s364
      %s366 = sphi 0, %s364
      %s367 = sphi 0, %s366
      %s381 = sphi 0, %s367
      %s385 = sphi 0, %s385
      %s387 = sphi 0, %s385
      %s388 = sphi 0, %s387
      %s402 = sphi 0, %s388
      %s408 = sphi 0, %s410
      %s411 = sphi 0, %s408
      %s412 = sphi 0, %s411
      %s428 = sphi 0, %s412
    $region4: #{cnn_forward.1} parent=1 // loop_header_branch
      %39 = sbr.rel (%p37) target = $region8
    $region5: #{cnn_forward.1} parent=1 // loop_body
      %s41 = ssub.s32 %s36, 1
      %s42 = ssub.s32 %s36, 2
      %s43 = sadd.s32 %s36, 1
      %s44 = ssub.s32 %s36, %s43
      %p45 = scmp.eq.s32.totalorder %s44, 0
      %s47 = sadd.s32 %s46, 1
      %s48 = scalar_select %p45, %s46, %s47
      %p51 = pneg %p45
      %p52 = scmp.eq.s32.totalorder %s36, 1
      %p53 = por %p51, %p52
      %p54 = scmp.ne.s32.totalorder %s46, %s49
      %p55 = scmp.eq.s32.totalorder %s36, 0
      %p56 = por %p54, %p55
      %p57 = scmp.ne.s32.totalorder %s46, %s49
      %p58 = scmp.eq.s32.totalorder %s41, 1
      %p59 = por %p57, %p58
      %p60 = scmp.ne.s32.totalorder %s49, %s50
      %p61 = scmp.eq.s32.totalorder %s41, 0
      %p62 = por %p60, %p61
      %p63 = scmp.ne.s32.totalorder %s49, %s50
      %p64 = scmp.eq.s32.totalorder %s42, 1
      %p65 = por %p63, %p64
      %p67 = scmp.ne.s32.totalorder %s50, %s66
      %p68 = scmp.eq.s32.totalorder %s42, 0
      %p69 = por %p67, %p68
      %s71 = sadd.s32 %s70, 1
      %p74 = scmp.eq.s32.totalorder %s36, 1
      %p75 = scmp.ne.s32.totalorder %s70, %s72
      %p76 = scmp.eq.s32.totalorder %s36, 0
      %p77 = por %p75, %p76
      %p78 = scmp.ne.s32.totalorder %s70, %s72
      %p79 = scmp.eq.s32.totalorder %s41, 1
      %p80 = por %p78, %p79
      %p81 = scmp.ne.s32.totalorder %s72, %s73
      %p82 = scmp.eq.s32.totalorder %s41, 0
      %p83 = por %p81, %p82
      %p84 = scmp.ne.s32.totalorder %s72, %s73
      %p85 = scmp.eq.s32.totalorder %s42, 1
      %p86 = por %p84, %p85
      %p88 = scmp.ne.s32.totalorder %s73, %s87
      %p89 = scmp.eq.s32.totalorder %s42, 0
      %p90 = por %p88, %p89
      %s92 = sadd.s32 %s91, 1
      %p95 = scmp.eq.s32.totalorder %s36, 1
      %p96 = scmp.ne.s32.totalorder %s91, %s93
      %p97 = scmp.eq.s32.totalorder %s36, 0
      %p98 = por %p96, %p97
      %p99 = scmp.ne.s32.totalorder %s91, %s93
      %p100 = scmp.eq.s32.totalorder %s41, 1
      %p101 = por %p99, %p100
      %p102 = scmp.ne.s32.totalorder %s93, %s94
      %p103 = scmp.eq.s32.totalorder %s41, 0
      %p104 = por %p102, %p103
      %p105 = scmp.ne.s32.totalorder %s93, %s94
      %p106 = scmp.eq.s32.totalorder %s42, 1
      %p107 = por %p105, %p106
      %p109 = scmp.ne.s32.totalorder %s94, %s108
      %p110 = scmp.eq.s32.totalorder %s42, 0
      %p111 = por %p109, %p110
      %s113 = sadd.s32 %s112, 1
      %p116 = scmp.eq.s32.totalorder %s36, 1
      %p117 = scmp.ne.s32.totalorder %s112, %s114
      %p118 = scmp.eq.s32.totalorder %s36, 0
      %p119 = por %p117, %p118
      %p120 = scmp.ne.s32.totalorder %s112, %s114
      %p121 = scmp.eq.s32.totalorder %s41, 1
      %p122 = por %p120, %p121
      %p123 = scmp.ne.s32.totalorder %s114, %s115
      %p124 = scmp.eq.s32.totalorder %s41, 0
      %p125 = por %p123, %p124
      %p126 = scmp.ne.s32.totalorder %s114, %s115
      %p127 = scmp.eq.s32.totalorder %s42, 1
      %p128 = por %p126, %p127
      %p130 = scmp.ne.s32.totalorder %s115, %s129
      %p131 = scmp.eq.s32.totalorder %s42, 0
      %p132 = por %p130, %p131
      %s134 = sadd.s32 %s133, 1
      %p137 = scmp.eq.s32.totalorder %s36, 1
      %p138 = scmp.ne.s32.totalorder %s133, %s135
      %p139 = scmp.eq.s32.totalorder %s36, 0
      %p140 = por %p138, %p139
      %p141 = scmp.ne.s32.totalorder %s133, %s135
      %p142 = scmp.eq.s32.totalorder %s41, 1
      %p143 = por %p141, %p142
      %p144 = scmp.ne.s32.totalorder %s135, %s136
      %p145 = scmp.eq.s32.totalorder %s41, 0
      %p146 = por %p144, %p145
      %p147 = scmp.ne.s32.totalorder %s135, %s136
      %p148 = scmp.eq.s32.totalorder %s42, 1
      %p149 = por %p147, %p148
      %p151 = scmp.ne.s32.totalorder %s136, %s150
      %p152 = scmp.eq.s32.totalorder %s42, 0
      %p153 = por %p151, %p152
      %s155 = sadd.s32 %s154, 1
      %p158 = scmp.eq.s32.totalorder %s36, 1
      %p159 = scmp.ne.s32.totalorder %s154, %s156
      %p160 = scmp.eq.s32.totalorder %s36, 0
      %p161 = por %p159, %p160
      %p162 = scmp.ne.s32.totalorder %s154, %s156
      %p163 = scmp.eq.s32.totalorder %s41, 1
      %p164 = por %p162, %p163
      %p165 = scmp.ne.s32.totalorder %s156, %s157
      %p166 = scmp.eq.s32.totalorder %s41, 0
      %p167 = por %p165, %p166
      %p168 = scmp.ne.s32.totalorder %s156, %s157
      %p169 = scmp.eq.s32.totalorder %s42, 1
      %p170 = por %p168, %p169
      %p172 = scmp.ne.s32.totalorder %s157, %s171
      %p173 = scmp.eq.s32.totalorder %s42, 0
      %p174 = por %p172, %p173
      %s176 = sadd.s32 %s175, 1
      %p179 = scmp.eq.s32.totalorder %s36, 1
      %p180 = scmp.ne.s32.totalorder %s175, %s177
      %p181 = scmp.eq.s32.totalorder %s36, 0
      %p182 = por %p180, %p181
      %p183 = scmp.ne.s32.totalorder %s175, %s177
      %p184 = scmp.eq.s32.totalorder %s41, 1
      %p185 = por %p183, %p184
      %p186 = scmp.ne.s32.totalorder %s177, %s178
      %p187 = scmp.eq.s32.totalorder %s41, 0
      %p188 = por %p186, %p187
      %p189 = scmp.ne.s32.totalorder %s177, %s178
      %p190 = scmp.eq.s32.totalorder %s42, 1
      %p191 = por %p189, %p190
      %p193 = scmp.ne.s32.totalorder %s178, %s192
      %p194 = scmp.eq.s32.totalorder %s42, 0
      %p195 = por %p193, %p194
      %s197 = sadd.s32 %s196, 1
      %p200 = scmp.eq.s32.totalorder %s36, 1
      %p201 = scmp.ne.s32.totalorder %s196, %s198
      %p202 = scmp.eq.s32.totalorder %s36, 0
      %p203 = por %p201, %p202
      %p204 = scmp.ne.s32.totalorder %s196, %s198
      %p205 = scmp.eq.s32.totalorder %s41, 1
      %p206 = por %p204, %p205
      %p207 = scmp.ne.s32.totalorder %s198, %s199
      %p208 = scmp.eq.s32.totalorder %s41, 0
      %p209 = por %p207, %p208
      %p210 = scmp.ne.s32.totalorder %s198, %s199
      %p211 = scmp.eq.s32.totalorder %s42, 1
      %p212 = por %p210, %p211
      %p214 = scmp.ne.s32.totalorder %s199, %s213
      %p215 = scmp.eq.s32.totalorder %s42, 0
      %p216 = por %p214, %p215
      %s218 = sadd.s32 %s217, 1
      %p221 = scmp.eq.s32.totalorder %s36, 1
      %p222 = scmp.ne.s32.totalorder %s217, %s219
      %p223 = scmp.eq.s32.totalorder %s36, 0
      %p224 = por %p222, %p223
      %p225 = scmp.ne.s32.totalorder %s217, %s219
      %p226 = scmp.eq.s32.totalorder %s41, 1
      %p227 = por %p225, %p226
      %p228 = scmp.ne.s32.totalorder %s219, %s220
      %p229 = scmp.eq.s32.totalorder %s41, 0
      %p230 = por %p228, %p229
      %p231 = scmp.ne.s32.totalorder %s219, %s220
      %p232 = scmp.eq.s32.totalorder %s42, 1
      %p233 = por %p231, %p232
      %p235 = scmp.ne.s32.totalorder %s220, %s234
      %p236 = scmp.eq.s32.totalorder %s42, 0
      %p237 = por %p235, %p236
      %s239 = sadd.s32 %s238, 1
      %p242 = scmp.eq.s32.totalorder %s36, 1
      %p243 = scmp.ne.s32.totalorder %s238, %s240
      %p244 = scmp.eq.s32.totalorder %s36, 0
      %p245 = por %p243, %p244
      %p246 = scmp.ne.s32.totalorder %s238, %s240
      %p247 = scmp.eq.s32.totalorder %s41, 1
      %p248 = por %p246, %p247
      %p249 = scmp.ne.s32.totalorder %s240, %s241
      %p250 = scmp.eq.s32.totalorder %s41, 0
      %p251 = por %p249, %p250
      %p252 = scmp.ne.s32.totalorder %s240, %s241
      %p253 = scmp.eq.s32.totalorder %s42, 1
      %p254 = por %p252, %p253
      %p256 = scmp.ne.s32.totalorder %s241, %s255
      %p257 = scmp.eq.s32.totalorder %s42, 0
      %p258 = por %p256, %p257
      %s260 = sadd.s32 %s259, 1
      %p263 = scmp.eq.s32.totalorder %s36, 1
      %p264 = scmp.ne.s32.totalorder %s259, %s261
      %p265 = scmp.eq.s32.totalorder %s36, 0
      %p266 = por %p264, %p265
      %p267 = scmp.ne.s32.totalorder %s259, %s261
      %p268 = scmp.eq.s32.totalorder %s41, 1
      %p269 = por %p267, %p268
      %p270 = scmp.ne.s32.totalorder %s261, %s262
      %p271 = scmp.eq.s32.totalorder %s41, 0
      %p272 = por %p270, %p271
      %p273 = scmp.ne.s32.totalorder %s261, %s262
      %p274 = scmp.eq.s32.totalorder %s42, 1
      %p275 = por %p273, %p274
      %p277 = scmp.ne.s32.totalorder %s262, %s276
      %p278 = scmp.eq.s32.totalorder %s42, 0
      %p279 = por %p277, %p278
      %s281 = sadd.s32 %s280, 1
      %p284 = scmp.eq.s32.totalorder %s36, 1
      %p285 = scmp.ne.s32.totalorder %s280, %s282
      %p286 = scmp.eq.s32.totalorder %s36, 0
      %p287 = por %p285, %p286
      %p288 = scmp.ne.s32.totalorder %s280, %s282
      %p289 = scmp.eq.s32.totalorder %s41, 1
      %p290 = por %p288, %p289
      %p291 = scmp.ne.s32.totalorder %s282, %s283
      %p292 = scmp.eq.s32.totalorder %s41, 0
      %p293 = por %p291, %p292
      %p294 = scmp.ne.s32.totalorder %s282, %s283
      %p295 = scmp.eq.s32.totalorder %s42, 1
      %p296 = por %p294, %p295
      %p298 = scmp.ne.s32.totalorder %s283, %s297
      %p299 = scmp.eq.s32.totalorder %s42, 0
      %p300 = por %p298, %p299
      %s302 = sadd.s32 %s301, 1
      %p305 = scmp.eq.s32.totalorder %s36, 1
      %p306 = scmp.ne.s32.totalorder %s301, %s303
      %p307 = scmp.eq.s32.totalorder %s36, 0
      %p308 = por %p306, %p307
      %p309 = scmp.ne.s32.totalorder %s301, %s303
      %p310 = scmp.eq.s32.totalorder %s41, 1
      %p311 = por %p309, %p310
      %p312 = scmp.ne.s32.totalorder %s303, %s304
      %p313 = scmp.eq.s32.totalorder %s41, 0
      %p314 = por %p312, %p313
      %p315 = scmp.ne.s32.totalorder %s303, %s304
      %p316 = scmp.eq.s32.totalorder %s42, 1
      %p317 = por %p315, %p316
      %p319 = scmp.ne.s32.totalorder %s304, %s318
      %p320 = scmp.eq.s32.totalorder %s42, 0
      %p321 = por %p319, %p320
      %s323 = sadd.s32 %s322, 1
      %p326 = scmp.eq.s32.totalorder %s36, 1
      %p327 = scmp.ne.s32.totalorder %s322, %s324
      %p328 = scmp.eq.s32.totalorder %s36, 0
      %p329 = por %p327, %p328
      %p330 = scmp.ne.s32.totalorder %s322, %s324
      %p331 = scmp.eq.s32.totalorder %s41, 1
      %p332 = por %p330, %p331
      %p333 = scmp.ne.s32.totalorder %s324, %s325
      %p334 = scmp.eq.s32.totalorder %s41, 0
      %p335 = por %p333, %p334
      %p336 = scmp.ne.s32.totalorder %s324, %s325
      %p337 = scmp.eq.s32.totalorder %s42, 1
      %p338 = por %p336, %p337
      %p340 = scmp.ne.s32.totalorder %s325, %s339
      %p341 = scmp.eq.s32.totalorder %s42, 0
      %p342 = por %p340, %p341
      %s344 = sadd.s32 %s343, 1
      %p347 = scmp.eq.s32.totalorder %s36, 1
      %p348 = scmp.ne.s32.totalorder %s343, %s345
      %p349 = scmp.eq.s32.totalorder %s36, 0
      %p350 = por %p348, %p349
      %p351 = scmp.ne.s32.totalorder %s343, %s345
      %p352 = scmp.eq.s32.totalorder %s41, 1
      %p353 = por %p351, %p352
      %p354 = scmp.ne.s32.totalorder %s345, %s346
      %p355 = scmp.eq.s32.totalorder %s41, 0
      %p356 = por %p354, %p355
      %p357 = scmp.ne.s32.totalorder %s345, %s346
      %p358 = scmp.eq.s32.totalorder %s42, 1
      %p359 = por %p357, %p358
      %p361 = scmp.ne.s32.totalorder %s346, %s360
      %p362 = scmp.eq.s32.totalorder %s42, 0
      %p363 = por %p361, %p362
      %s365 = sadd.s32 %s364, 1
      %p368 = scmp.eq.s32.totalorder %s36, 1
      %p369 = scmp.ne.s32.totalorder %s364, %s366
      %p370 = scmp.eq.s32.totalorder %s36, 0
      %p371 = por %p369, %p370
      %p372 = scmp.ne.s32.totalorder %s364, %s366
      %p373 = scmp.eq.s32.totalorder %s41, 1
      %p374 = por %p372, %p373
      %p375 = scmp.ne.s32.totalorder %s366, %s367
      %p376 = scmp.eq.s32.totalorder %s41, 0
      %p377 = por %p375, %p376
      %p378 = scmp.ne.s32.totalorder %s366, %s367
      %p379 = scmp.eq.s32.totalorder %s42, 1
      %p380 = por %p378, %p379
      %p382 = scmp.ne.s32.totalorder %s367, %s381
      %p383 = scmp.eq.s32.totalorder %s42, 0
      %p384 = por %p382, %p383
      %s386 = sadd.s32 %s385, 1
      %p389 = scmp.eq.s32.totalorder %s36, 1
      %p390 = scmp.ne.s32.totalorder %s385, %s387
      %p391 = scmp.eq.s32.totalorder %s36, 0
      %p392 = por %p390, %p391
      %p393 = scmp.ne.s32.totalorder %s385, %s387
      %p394 = scmp.eq.s32.totalorder %s41, 1
      %p395 = por %p393, %p394
      %p396 = scmp.ne.s32.totalorder %s387, %s388
      %p397 = scmp.eq.s32.totalorder %s41, 0
      %p398 = por %p396, %p397
      %p399 = scmp.ne.s32.totalorder %s387, %s388
      %p400 = scmp.eq.s32.totalorder %s42, 1
      %p401 = por %p399, %p400
      %p403 = scmp.ne.s32.totalorder %s388, %s402
      %p404 = scmp.eq.s32.totalorder %s42, 0
      %p405 = por %p403, %p404
      %s406 = ssub.s32 %s36, %s43
      %p407 = scmp.eq.s32.totalorder %s406, 0
      %s409 = sadd.s32 %s408, 1
      %s410 = scalar_select %p407, %s408, %s409
      %p413 = pneg %p407
      %p414 = scmp.eq.s32.totalorder %s36, 1
      %p415 = por %p413, %p414
      %p416 = scmp.ne.s32.totalorder %s408, %s411
      %p417 = scmp.eq.s32.totalorder %s36, 0
      %p418 = por %p416, %p417
      %p419 = scmp.ne.s32.totalorder %s408, %s411
      %p420 = scmp.eq.s32.totalorder %s41, 1
      %p421 = por %p419, %p420
      %p422 = scmp.ne.s32.totalorder %s411, %s412
      %p423 = scmp.eq.s32.totalorder %s41, 0
      %p424 = por %p422, %p423
      %p425 = scmp.ne.s32.totalorder %s411, %s412
      %p426 = scmp.eq.s32.totalorder %s42, 1
      %p427 = por %p425, %p426
      %p429 = scmp.ne.s32.totalorder %s412, %s428
      %p430 = scmp.eq.s32.totalorder %s42, 0
      %p431 = por %p429, %p430
      %p432 = scmp.le.s32.totalorder 1, %s36
      %p433 = scmp.lt.s32.totalorder %s36, 3
      %p434 = pnand %p432, %p433
      %p435 = pneg %p434
      // Predicated region
      $region9: #{cnn_forward.1} parent=5 // pred_check
        _
      $region10: #{cnn_forward.1} parent=5 // pred_check_branch
        %437 = sbr.rel (%p434) target = $region12
      $region11: #{cnn_forward.1} parent=5 // pred_region
        %s438 = ssub.s32 %s36, 1
        // Predicated region
        $region13: #{cnn_forward.1} parent=11 // pred_check
          %p439 = pneg %p83
        $region14: #{cnn_forward.1} parent=11 // pred_check_branch
          %441 = sbr.rel (%p439) target = $region16
        $region15: #{cnn_forward.1} parent=11 // pred_region
          %443 = vsyncadd [#allocation6], 0
          %s444 = sshll.u32 %s1, 4
          %s445 = int_to_ptr.hbm [resolvable:$true] %s444
          %s446 = sshll.u32 [#allocation5], 4
          %s447 = int_to_ptr.vmem [resolvable:$true] %s446
          %452 = dma.hbm_to_vmem [thread:$0]  %s445, 1536, %s447, [#allocation6], 384, 384, 24
        $region16: #{cnn_forward.1} parent=11 // pred_fallthru
          _
        // Predicated region
        $region17: #{cnn_forward.1} parent=11 // pred_check
          %p453 = pneg %p104
        $region18: #{cnn_forward.1} parent=11 // pred_check_branch
          %455 = sbr.rel (%p453) target = $region20
        $region19: #{cnn_forward.1} parent=11 // pred_region
          %457 = vsyncadd [#allocation6], 0
          %s458 = sshll.u32 %s2, 4
          %s459 = int_to_ptr.hbm [resolvable:$true] %s458
          %s460 = sshll.u32 [#allocation7], 4
          %s461 = int_to_ptr.vmem [resolvable:$true] %s460
          %466 = dma.hbm_to_vmem [thread:$0]  %s459, 512, %s461, [#allocation6], 128, 128, 8
        $region20: #{cnn_forward.1} parent=11 // pred_fallthru
          _
        // Predicated region
        $region21: #{cnn_forward.1} parent=11 // pred_check
          %p467 = pneg %p125
        $region22: #{cnn_forward.1} parent=11 // pred_check_branch
          %469 = sbr.rel (%p467) target = $region24
        $region23: #{cnn_forward.1} parent=11 // pred_region
          %471 = vsyncadd [#allocation9], 0
          %s472 = sshll.u32 %s3, 4
          %s473 = int_to_ptr.hbm [resolvable:$true] %s472
          %s474 = sshll.u32 [#allocation8], 4
          %s475 = int_to_ptr.vmem [resolvable:$true] %s474
          %480 = dma.hbm_to_vmem [thread:$0]  %s473, 512, %s475, [#allocation9], 128, 128, 8
        $region24: #{cnn_forward.1} parent=11 // pred_fallthru
          _
        // Predicated region
        $region25: #{cnn_forward.1} parent=11 // pred_check
          %p481 = pneg %p146
        $region26: #{cnn_forward.1} parent=11 // pred_check_branch
          %483 = sbr.rel (%p481) target = $region28
        $region27: #{cnn_forward.1} parent=11 // pred_region
          %485 = vsyncadd [#allocation9], 0
          %s487 = sshll.u32 %s4, 4
          %s488 = int_to_ptr.hbm [resolvable:$true] %s487
          %s489 = sshll.u32 [#allocation10], 4
          %s490 = int_to_ptr.vmem [resolvable:$true] %s489
          %492 = dma.hbm_to_vmem [thread:$0]  %s488, 16, %s490, [#allocation9]
        $region28: #{cnn_forward.1} parent=11 // pred_fallthru
          _
        // Predicated region
        $region29: #{cnn_forward.1} parent=11 // pred_check
          %p493 = pneg %p167
        $region30: #{cnn_forward.1} parent=11 // pred_check_branch
          %495 = sbr.rel (%p493) target = $region32
        $region31: #{cnn_forward.1} parent=11 // pred_region
          %497 = vsyncadd [#allocation12], 0
          %s498 = sshll.u32 %s5, 4
          %s499 = int_to_ptr.hbm [resolvable:$true] %s498
          %s500 = sshll.u32 [#allocation11], 4
          %s501 = int_to_ptr.vmem [resolvable:$true] %s500
          %506 = dma.hbm_to_vmem [thread:$0]  %s499, 512, %s501, [#allocation12], 128, 128, 8
        $region32: #{cnn_forward.1} parent=11 // pred_fallthru
          _
        // Predicated region
        $region33: #{cnn_forward.1} parent=11 // pred_check
          %p507 = pneg %p188
        $region34: #{cnn_forward.1} parent=11 // pred_check_branch
          %509 = sbr.rel (%p507) target = $region36
        $region35: #{cnn_forward.1} parent=11 // pred_region
          %511 = vsyncadd [#allocation12], 0
          %s512 = sshll.u32 %s6, 4
          %s513 = int_to_ptr.hbm [resolvable:$true] %s512
          %s514 = sshll.u32 [#allocation13], 4
          %s515 = int_to_ptr.vmem [resolvable:$true] %s514
          %520 = dma.hbm_to_vmem [thread:$0]  %s513, 2048, %s515, [#allocation12], 128, 128, 8
        $region36: #{cnn_forward.1} parent=11 // pred_fallthru
          _
        // Predicated region
        $region37: #{cnn_forward.1} parent=11 // pred_check
          %p521 = pneg %p209
        $region38: #{cnn_forward.1} parent=11 // pred_check_branch
          %523 = sbr.rel (%p521) target = $region40
        $region39: #{cnn_forward.1} parent=11 // pred_region
          %525 = vsyncadd [#allocation15], 0
          %s526 = sshll.u32 %s7, 4
          %s527 = int_to_ptr.hbm [resolvable:$true] %s526
          %s528 = sshll.u32 [#allocation14], 4
          %s529 = int_to_ptr.vmem [resolvable:$true] %s528
          %534 = dma.hbm_to_vmem [thread:$0]  %s527, 3072, %s529, [#allocation15], 384, 384, 24
        $region40: #{cnn_forward.1} parent=11 // pred_fallthru
          _
        // Predicated region
        $region41: #{cnn_forward.1} parent=11 // pred_check
          %p535 = pneg %p230
        $region42: #{cnn_forward.1} parent=11 // pred_check_branch
          %537 = sbr.rel (%p535) target = $region44
        $region43: #{cnn_forward.1} parent=11 // pred_region
          %539 = vsyncadd [#allocation15], 0
          %s540 = sshll.u32 %s8, 4
          %s541 = int_to_ptr.hbm [resolvable:$true] %s540
          %s542 = sshll.u32 [#allocation16], 4
          %s543 = int_to_ptr.vmem [resolvable:$true] %s542
          %548 = dma.hbm_to_vmem [thread:$0]  %s541, 256, %s543, [#allocation15], 128, 128, 8
        $region44: #{cnn_forward.1} parent=11 // pred_fallthru
          _
        // Predicated region
        $region45: #{cnn_forward.1} parent=11 // pred_check
          %p549 = pneg %p251
        $region46: #{cnn_forward.1} parent=11 // pred_check_branch
          %551 = sbr.rel (%p549) target = $region48
        $region47: #{cnn_forward.1} parent=11 // pred_region
          %553 = vsyncadd [#allocation18], 0
          %s554 = sshll.u32 %s9, 4
          %s555 = int_to_ptr.hbm [resolvable:$true] %s554
          %s556 = sshll.u32 [#allocation17], 4
          %s557 = int_to_ptr.vmem [resolvable:$true] %s556
          %562 = dma.hbm_to_vmem [thread:$0]  %s555, 256, %s557, [#allocation18], 128, 128, 8
        $region48: #{cnn_forward.1} parent=11 // pred_fallthru
          _
        // Predicated region
        $region49: #{cnn_forward.1} parent=11 // pred_check
          %p563 = pneg %p272
        $region50: #{cnn_forward.1} parent=11 // pred_check_branch
          %565 = sbr.rel (%p563) target = $region52
        $region51: #{cnn_forward.1} parent=11 // pred_region
          _
        $region52: #{cnn_forward.1} parent=11 // pred_fallthru
          _
        // Predicated region
        $region53: #{cnn_forward.1} parent=11 // pred_check
          %p566 = pneg %p293
        $region54: #{cnn_forward.1} parent=11 // pred_check_branch
          %568 = sbr.rel (%p566) target = $region56
        $region55: #{cnn_forward.1} parent=11 // pred_region
          %570 = vsyncadd [#allocation18], 0
          %s571 = sshll.u32 %s11, 4
          %s572 = int_to_ptr.hbm [resolvable:$true] %s571
          %s573 = sshll.u32 [#allocation19], 4
          %s574 = int_to_ptr.vmem [resolvable:$true] %s573
          %579 = dma.hbm_to_vmem [thread:$0]  %s572, 256, %s574, [#allocation18], 128, 128, 8
        $region56: #{cnn_forward.1} parent=11 // pred_fallthru
          _
        // Predicated region
        $region57: #{cnn_forward.1} parent=11 // pred_check
          %p580 = pneg %p314
        $region58: #{cnn_forward.1} parent=11 // pred_check_branch
          %582 = sbr.rel (%p580) target = $region60
        $region59: #{cnn_forward.1} parent=11 // pred_region
          %584 = vsyncadd [#allocation21], 0
          %s585 = sshll.u32 %s12, 4
          %s586 = int_to_ptr.hbm [resolvable:$true] %s585
          %s587 = sshll.u32 [#allocation20], 4
          %s588 = int_to_ptr.vmem [resolvable:$true] %s587
          %593 = dma.hbm_to_vmem [thread:$0]  %s586, 2048, %s588, [#allocation21], 128, 128, 8
        $region60: #{cnn_forward.1} parent=11 // pred_fallthru
          _
        // Predicated region
        $region61: #{cnn_forward.1} parent=11 // pred_check
          %p594 = pneg %p335
        $region62: #{cnn_forward.1} parent=11 // pred_check_branch
          %596 = sbr.rel (%p594) target = $region64
        $region63: #{cnn_forward.1} parent=11 // pred_region
          %598 = vsyncadd [#allocation21], 0
          %s599 = sshll.u32 %s13, 4
          %s600 = int_to_ptr.hbm [resolvable:$true] %s599
          %s601 = sshll.u32 [#allocation22], 4
          %s602 = int_to_ptr.vmem [resolvable:$true] %s601
          %607 = dma.hbm_to_vmem [thread:$0]  %s600, 1024, %s602, [#allocation21], 128, 128, 8
        $region64: #{cnn_forward.1} parent=11 // pred_fallthru
          _
        // Predicated region
        $region65: #{cnn_forward.1} parent=11 // pred_check
          %p608 = pneg %p356
        $region66: #{cnn_forward.1} parent=11 // pred_check_branch
          %610 = sbr.rel (%p608) target = $region68
        $region67: #{cnn_forward.1} parent=11 // pred_region
          %612 = vsyncadd [#allocation24], 0
          %s614 = sshll.u32 %s14, 4
          %s615 = int_to_ptr.hbm [resolvable:$true] %s614
          %s616 = sshll.u32 [#allocation23], 4
          %s617 = int_to_ptr.vmem [resolvable:$true] %s616
          %619 = dma.hbm_to_vmem [thread:$0]  %s615, 128, %s617, [#allocation24]
        $region68: #{cnn_forward.1} parent=11 // pred_fallthru
          _
        // Predicated region
        $region69: #{cnn_forward.1} parent=11 // pred_check
          %p620 = pneg %p377
        $region70: #{cnn_forward.1} parent=11 // pred_check_branch
          %622 = sbr.rel (%p620) target = $region72
        $region71: #{cnn_forward.1} parent=11 // pred_region
          %624 = vsyncadd [#allocation24], 0
          %s625 = sshll.u32 %s15, 4
          %s626 = int_to_ptr.hbm [resolvable:$true] %s625
          %s627 = sshll.u32 [#allocation25], 4
          %s628 = int_to_ptr.vmem [resolvable:$true] %s627
          %633 = dma.hbm_to_vmem [thread:$0]  %s626, 2048, %s628, [#allocation24], 128, 128, 8
        $region72: #{cnn_forward.1} parent=11 // pred_fallthru
          _
        // Predicated region
        $region73: #{cnn_forward.1} parent=11 // pred_check
          %p634 = pneg %p398
        $region74: #{cnn_forward.1} parent=11 // pred_check_branch
          %636 = sbr.rel (%p634) target = $region76
        $region75: #{cnn_forward.1} parent=11 // pred_region
          _
        $region76: #{cnn_forward.1} parent=11 // pred_fallthru
          _
      $region12: #{cnn_forward.1} parent=5 // pred_fallthru
        _
      %p637 = scmp.lt.s32.totalorder %s36, 2
      // Predicated region
      $region77: #{cnn_forward.1} parent=5 // pred_check
        %p638 = pneg %p637
      $region78: #{cnn_forward.1} parent=5 // pred_check_branch
        %640 = sbr.rel (%p638) target = $region80
      $region79: #{cnn_forward.1} parent=5 // pred_region
        // Predicated region
        $region81: #{cnn_forward.1} parent=79 // pred_check
          %p641 = pneg %p56
        $region82: #{cnn_forward.1} parent=79 // pred_check_branch
          %643 = sbr.rel (%p641) target = $region84
        $region83: #{cnn_forward.1} parent=79 // pred_region
          %s644 = sand.u32 %s46, 1
          %s645 = scalar_lea.sflag [#allocation3], %s644
          %s646 = sand.u32 %s46, 1
          %s647 = smul.addr %s646, 32
          %s648 = scalar_lea.vmem [#allocation2], %s647
          %650 = vsyncadd %s645, 0
          %s651 = smul.addr %s36, 4
          %s652 = smul.addr %s651, 8
          %s653 = scalar_lea.hbm %s0, %s652
          %s654 = sshll.u32 %s653, 4
          %s655 = int_to_ptr.hbm [resolvable:$true] %s654
          %s656 = sshll.u32 %s648, 4
          %s657 = int_to_ptr.vmem [resolvable:$true] %s656
          %662 = dma.hbm_to_vmem [thread:$0]  %s655, 512, %s657, %s645, 128, 128, 8
        $region84: #{cnn_forward.1} parent=79 // pred_fallthru
          _
      $region80: #{cnn_forward.1} parent=5 // pred_fallthru
        _
      %p663 = scmp.le.s32.totalorder 1, %s36
      %p664 = scmp.lt.s32.totalorder %s36, 3
      %p665 = pnand %p663, %p664
      %p666 = pneg %p665
      // Predicated region
      $region85: #{cnn_forward.1} parent=5 // pred_check
        _
      $region86: #{cnn_forward.1} parent=5 // pred_check_branch
        %668 = sbr.rel (%p665) target = $region88
      $region87: #{cnn_forward.1} parent=5 // pred_region
        %s669 = ssub.s32 %s36, 1
        %s670 = sand.u32 %s49, 1
        %s671 = scalar_lea.sflag [#allocation3], %s670
        %s672 = sand.u32 %s49, 1
        %s673 = smul.addr %s672, 32
        %s674 = scalar_lea.vmem [#allocation2], %s673
        // Predicated region
        $region89: #{cnn_forward.1} parent=87 // pred_check
          %p675 = pneg %p62
        $region90: #{cnn_forward.1} parent=87 // pred_check_branch
          %677 = sbr.rel (%p675) target = $region92
        $region91: #{cnn_forward.1} parent=87 // pred_region
          %679 = dma.done %s671, 512
        $region92: #{cnn_forward.1} parent=87 // pred_fallthru
          _
        // Predicated region
        $region93: #{cnn_forward.1} parent=87 // pred_check
          %p680 = pneg %p83
        $region94: #{cnn_forward.1} parent=87 // pred_check_branch
          %682 = sbr.rel (%p680) target = $region96
        $region95: #{cnn_forward.1} parent=87 // pred_region
          %684 = dma.done [#allocation6], 1536
        $region96: #{cnn_forward.1} parent=87 // pred_fallthru
          _
        // Predicated region
        $region97: #{cnn_forward.1} parent=87 // pred_check
          %p685 = pneg %p104
        $region98: #{cnn_forward.1} parent=87 // pred_check_branch
          %687 = sbr.rel (%p685) target = $region100
        $region99: #{cnn_forward.1} parent=87 // pred_region
          %689 = dma.done [#allocation6], 512
        $region100: #{cnn_forward.1} parent=87 // pred_fallthru
          _
        // Predicated region
        $region101: #{cnn_forward.1} parent=87 // pred_check
          %p690 = pneg %p125
        $region102: #{cnn_forward.1} parent=87 // pred_check_branch
          %692 = sbr.rel (%p690) target = $region104
        $region103: #{cnn_forward.1} parent=87 // pred_region
          %694 = dma.done [#allocation9], 512
        $region104: #{cnn_forward.1} parent=87 // pred_fallthru
          _
        // Predicated region
        $region105: #{cnn_forward.1} parent=87 // pred_check
          %p695 = pneg %p146
        $region106: #{cnn_forward.1} parent=87 // pred_check_branch
          %697 = sbr.rel (%p695) target = $region108
        $region107: #{cnn_forward.1} parent=87 // pred_region
          %699 = dma.done [#allocation9], 16
        $region108: #{cnn_forward.1} parent=87 // pred_fallthru
          _
        // Predicated region
        $region109: #{cnn_forward.1} parent=87 // pred_check
          %p700 = pneg %p167
        $region110: #{cnn_forward.1} parent=87 // pred_check_branch
          %702 = sbr.rel (%p700) target = $region112
        $region111: #{cnn_forward.1} parent=87 // pred_region
          %704 = dma.done [#allocation12], 512
        $region112: #{cnn_forward.1} parent=87 // pred_fallthru
          _
        // Predicated region
        $region113: #{cnn_forward.1} parent=87 // pred_check
          %p705 = pneg %p188
        $region114: #{cnn_forward.1} parent=87 // pred_check_branch
          %707 = sbr.rel (%p705) target = $region116
        $region115: #{cnn_forward.1} parent=87 // pred_region
          %709 = dma.done [#allocation12], 2048
        $region116: #{cnn_forward.1} parent=87 // pred_fallthru
          _
        // Predicated region
        $region117: #{cnn_forward.1} parent=87 // pred_check
          %p710 = pneg %p209
        $region118: #{cnn_forward.1} parent=87 // pred_check_branch
          %712 = sbr.rel (%p710) target = $region120
        $region119: #{cnn_forward.1} parent=87 // pred_region
          %714 = dma.done [#allocation15], 3072
        $region120: #{cnn_forward.1} parent=87 // pred_fallthru
          _
        // Predicated region
        $region121: #{cnn_forward.1} parent=87 // pred_check
          %p715 = pneg %p230
        $region122: #{cnn_forward.1} parent=87 // pred_check_branch
          %717 = sbr.rel (%p715) target = $region124
        $region123: #{cnn_forward.1} parent=87 // pred_region
          %719 = dma.done [#allocation15], 256
        $region124: #{cnn_forward.1} parent=87 // pred_fallthru
          _
        // Predicated region
        $region125: #{cnn_forward.1} parent=87 // pred_check
          %p720 = pneg %p251
        $region126: #{cnn_forward.1} parent=87 // pred_check_branch
          %722 = sbr.rel (%p720) target = $region128
        $region127: #{cnn_forward.1} parent=87 // pred_region
          %724 = dma.done [#allocation18], 256
        $region128: #{cnn_forward.1} parent=87 // pred_fallthru
          _
        // Predicated region
        $region129: #{cnn_forward.1} parent=87 // pred_check
          %p725 = pneg %p293
        $region130: #{cnn_forward.1} parent=87 // pred_check_branch
          %727 = sbr.rel (%p725) target = $region132
        $region131: #{cnn_forward.1} parent=87 // pred_region
          %729 = dma.done [#allocation18], 256
        $region132: #{cnn_forward.1} parent=87 // pred_fallthru
          _
        // Predicated region
        $region133: #{cnn_forward.1} parent=87 // pred_check
          %p730 = pneg %p314
        $region134: #{cnn_forward.1} parent=87 // pred_check_branch
          %732 = sbr.rel (%p730) target = $region136
        $region135: #{cnn_forward.1} parent=87 // pred_region
          %734 = dma.done [#allocation21], 2048
        $region136: #{cnn_forward.1} parent=87 // pred_fallthru
          _
        // Predicated region
        $region137: #{cnn_forward.1} parent=87 // pred_check
          %p735 = pneg %p335
        $region138: #{cnn_forward.1} parent=87 // pred_check_branch
          %737 = sbr.rel (%p735) target = $region140
        $region139: #{cnn_forward.1} parent=87 // pred_region
          %739 = dma.done [#allocation21], 1024
        $region140: #{cnn_forward.1} parent=87 // pred_fallthru
          _
        // Predicated region
        $region141: #{cnn_forward.1} parent=87 // pred_check
          %p740 = pneg %p356
        $region142: #{cnn_forward.1} parent=87 // pred_check_branch
          %742 = sbr.rel (%p740) target = $region144
        $region143: #{cnn_forward.1} parent=87 // pred_region
          %744 = dma.done [#allocation24], 128
        $region144: #{cnn_forward.1} parent=87 // pred_fallthru
          _
        // Predicated region
        $region145: #{cnn_forward.1} parent=87 // pred_check
          %p745 = pneg %p377
        $region146: #{cnn_forward.1} parent=87 // pred_check_branch
          %747 = sbr.rel (%p745) target = $region148
        $region147: #{cnn_forward.1} parent=87 // pred_region
          %749 = dma.done [#allocation24], 2048
        $region148: #{cnn_forward.1} parent=87 // pred_fallthru
          _
        %s750 = sand.u32 %s49, 1
        %s751 = scalar_lea.sflag [#allocation3], %s750
        %s752 = sand.u32 %s49, 1
        %s753 = smul.addr %s752, 32
        %s754 = scalar_lea.vmem [#allocation2], %s753
        %p755 = pneg %p62
        %p756 = pneg %p59
        %p757 = pneg %p83
        %p758 = pneg %p80
        %p759 = pneg %p104
        %p760 = pneg %p101
        %p761 = pneg %p125
        %p762 = pneg %p122
        %p763 = pneg %p146
        %p764 = pneg %p143
        %p765 = pneg %p167
        %p766 = pneg %p164
        %p767 = pneg %p188
        %p768 = pneg %p185
        %p769 = pneg %p209
        %p770 = pneg %p206
        %p771 = pneg %p230
        %p772 = pneg %p227
        %p773 = pneg %p251
        %p774 = pneg %p248
        %p775 = pneg %p272
        %p776 = pneg %p269
        %p777 = pneg %p293
        %p778 = pneg %p290
        %p779 = pneg %p314
        %p780 = pneg %p311
        %p781 = pneg %p335
        %p782 = pneg %p332
        %p783 = pneg %p356
        %p784 = pneg %p353
        %p785 = pneg %p377
        %p786 = pneg %p374
        %p787 = pneg %p398
        %p788 = pneg %p395
        %p789 = pneg %p424
        %p790 = pneg %p421
        %s791 = sand.u32 %s411, 1
        %s792 = scalar_lea.sflag [#allocation4], %s791
        %s793 = sand.u32 %s411, 1
        %s794 = scalar_lea.vmem [#allocation26], %s793
        %v795 = vld [vmem:[%s674] sm:$0xff]
        %v796 = vld [vmem:[%s674 + $0x8] sm:$0xff]
        %v797 = vld [vmem:[%s674 + $0x10] sm:$0xff]
        %v798 = vld [vmem:[%s674 + $0x18] sm:$0xff]
        %v799 = vld [vmem:[#allocation5] sm:$0xff]
        %v800 = vld [vmem:[#allocation5 + $0x8] sm:$0xff]
        %v801 = vld [vmem:[#allocation5 + $0x10] sm:$0xff]
        %v802 = vld [vmem:[#allocation5 + $0x18] sm:$0xff]
        %v803 = vld [vmem:[#allocation5 + $0x20] sm:$0xff]
        %v804 = vld [vmem:[#allocation5 + $0x28] sm:$0xff]
        %v805 = vld [vmem:[#allocation5 + $0x30] sm:$0xff]
        %v806 = vld [vmem:[#allocation5 + $0x38] sm:$0xff]
        %v807 = vld [vmem:[#allocation5 + $0x40] sm:$0xff]
        %v808 = vld [vmem:[#allocation5 + $0x48] sm:$0xff]
        %v809 = vld [vmem:[#allocation5 + $0x50] sm:$0xff]
        %v810 = vld [vmem:[#allocation5 + $0x58] sm:$0xff]
        %vm811 = vcmask 261120
        %v813 = vsel %vm811, %v795, 0
        %v816 = vsel %vm811, %v796, 0
        %v819 = vsel %vm811, %v797, 0
        %v822 = vsel %vm811, %v798, 0
        %824 = vmatpush.msra.mxu0 0.0
        %825 = vmatpush.msra.mxu0 0.0
        %826 = vmatpush.msra.mxu0 0.0
        %827 = vmatpush.msra.mxu0 0.0
        %828 = vmatpush.msra.mxu0 0.0
        %829 = vmatpush.msra.mxu0 0.0
        %830 = vmatpush.msra.mxu0 0.0
        %831 = vmatpush.msra.mxu0 0.0
        %832 = vmatpush.msra.mxu0 0.0
        %833 = vmatpush.msra.mxu0 0.0
        %834 = vmatpush.msra.mxu0 0.0
        %835 = vmatpush.msra.mxu0 0.0
        %v836 = vand.u32 %v808, 4294901760
        %837 = vmatpush.msra.mxu0 %v836
        %v838 = vand.u32 %v805, 4294901760
        %839 = vmatpush.msra.mxu0 %v838
        %v840 = vand.u32 %v802, 4294901760
        %841 = vmatpush.msra.mxu0 %v840
        %v842 = vand.u32 %v799, 4294901760
        %843 = vmatpush.msra.mxu0 %v842
        %v844 = vand.u32 %v813, 4294901760
        %v845 = vsub.f32 %v813, %v844
        %v846 = vand.u32 %v845, 4294901760
        %v847 = vsub.f32 %v845, %v846
        %v848 = vand.u32 %v847, 4294901760
        %849 = vmatmul.f32.gmra.mxu0 %v848
        %v850 = vpop.f32.mrf.mxu0
        %v851 = vadd.f32 0.0, %v850
        %v852 = vand.u32 %v816, 4294901760
        %v853 = vsub.f32 %v816, %v852
        %v854 = vand.u32 %v853, 4294901760
        %v855 = vsub.f32 %v853, %v854
        %v856 = vand.u32 %v855, 4294901760
        %857 = vmatmul.f32.gmra.mxu0 %v856
        %v858 = vpop.f32.mrf.mxu0
        %v859 = vadd.f32 0.0, %v858
        %v860 = vand.u32 %v819, 4294901760
        %v861 = vsub.f32 %v819, %v860
        %v862 = vand.u32 %v861, 4294901760
        %v863 = vsub.f32 %v861, %v862
        %v864 = vand.u32 %v863, 4294901760
        %865 = vmatmul.f32.gmra.mxu0 %v864
        %v866 = vpop.f32.mrf.mxu0
        %v867 = vadd.f32 0.0, %v866
        %v868 = vand.u32 %v822, 4294901760
        %v869 = vsub.f32 %v822, %v868
        %v870 = vand.u32 %v869, 4294901760
        %v871 = vsub.f32 %v869, %v870
        %v872 = vand.u32 %v871, 4294901760
        %873 = vmatmul.f32.gmra.mxu0 %v872
        %v874 = vpop.f32.mrf.mxu0
        %v875 = vadd.f32 0.0, %v874
        %876 = vdwg.mxu0
        %877 = vmatpush.msra.mxu0 0.0
        %878 = vmatpush.msra.mxu0 0.0
        %879 = vmatpush.msra.mxu0 0.0
        %880 = vmatpush.msra.mxu0 0.0
        %881 = vmatpush.msra.mxu0 0.0
        %882 = vmatpush.msra.mxu0 0.0
        %883 = vmatpush.msra.mxu0 0.0
        %884 = vmatpush.msra.mxu0 0.0
        %885 = vmatpush.msra.mxu0 0.0
        %886 = vmatpush.msra.mxu0 0.0
        %887 = vmatpush.msra.mxu0 0.0
        %888 = vmatpush.msra.mxu0 0.0
        %v889 = vand.u32 %v808, 4294901760
        %v890 = vsub.f32 %v808, %v889
        %v891 = vand.u32 %v890, 4294901760
        %v892 = vsub.f32 %v890, %v891
        %v893 = vand.u32 %v892, 4294901760
        %894 = vmatpush.msra.mxu0 %v893
        %v895 = vand.u32 %v805, 4294901760
        %v896 = vsub.f32 %v805, %v895
        %v897 = vand.u32 %v896, 4294901760
        %v898 = vsub.f32 %v896, %v897
        %v899 = vand.u32 %v898, 4294901760
        %900 = vmatpush.msra.mxu0 %v899
        %v901 = vand.u32 %v802, 4294901760
        %v902 = vsub.f32 %v802, %v901
        %v903 = vand.u32 %v902, 4294901760
        %v904 = vsub.f32 %v902, %v903
        %v905 = vand.u32 %v904, 4294901760
        %906 = vmatpush.msra.mxu0 %v905
        %v907 = vand.u32 %v799, 4294901760
        %v908 = vsub.f32 %v799, %v907
        %v909 = vand.u32 %v908, 4294901760
        %v910 = vsub.f32 %v908, %v909
        %v911 = vand.u32 %v910, 4294901760
        %912 = vmatpush.msra.mxu0 %v911
        %v913 = vand.u32 %v813, 4294901760
        %914 = vmatmul.f32.gmra.mxu0 %v913
        %v915 = vpop.f32.mrf.mxu0
        %v916 = vadd.f32 %v851, %v915
        %v917 = vand.u32 %v816, 4294901760
        %918 = vmatmul.f32.gmra.mxu0 %v917
        %v919 = vpop.f32.mrf.mxu0
        %v920 = vadd.f32 %v859, %v919
        %v921 = vand.u32 %v819, 4294901760
        %922 = vmatmul.f32.gmra.mxu0 %v921
        %v923 = vpop.f32.mrf.mxu0
        %v924 = vadd.f32 %v867, %v923
        %v925 = vand.u32 %v822, 4294901760
        %926 = vmatmul.f32.gmra.mxu0 %v925
        %v927 = vpop.f32.mrf.mxu0
        %v928 = vadd.f32 %v875, %v927
        %929 = vdwg.mxu0
        %930 = vmatpush.msra.mxu0 0.0
        %931 = vmatpush.msra.mxu0 0.0
        %932 = vmatpush.msra.mxu0 0.0
        %933 = vmatpush.msra.mxu0 0.0
        %934 = vmatpush.msra.mxu0 0.0
        %935 = vmatpush.msra.mxu0 0.0
        %936 = vmatpush.msra.mxu0 0.0
        %937 = vmatpush.msra.mxu0 0.0
        %938 = vmatpush.msra.mxu0 0.0
        %939 = vmatpush.msra.mxu0 0.0
        %940 = vmatpush.msra.mxu0 0.0
        %941 = vmatpush.msra.mxu0 0.0
        %v942 = vand.u32 %v808, 4294901760
        %v943 = vsub.f32 %v808, %v942
        %944 = vmatpush.msra.mxu0 %v943
        %v945 = vand.u32 %v805, 4294901760
        %v946 = vsub.f32 %v805, %v945
        %947 = vmatpush.msra.mxu0 %v946
        %v948 = vand.u32 %v802, 4294901760
        %v949 = vsub.f32 %v802, %v948
        %950 = vmatpush.msra.mxu0 %v949
        %v951 = vand.u32 %v799, 4294901760
        %v952 = vsub.f32 %v799, %v951
        %953 = vmatpush.msra.mxu0 %v952
        %v954 = vand.u32 %v813, 4294901760
        %v955 = vsub.f32 %v813, %v954
        %956 = vmatmul.f32.gmra.mxu0 %v955
        %v957 = vpop.f32.mrf.mxu0
        %v958 = vadd.f32 %v916, %v957
        %v959 = vand.u32 %v816, 4294901760
        %v960 = vsub.f32 %v816, %v959
        %961 = vmatmul.f32.gmra.mxu0 %v960
        %v962 = vpop.f32.mrf.mxu0
        %v963 = vadd.f32 %v920, %v962
        %v964 = vand.u32 %v819, 4294901760
        %v965 = vsub.f32 %v819, %v964
        %966 = vmatmul.f32.gmra.mxu0 %v965
        %v967 = vpop.f32.mrf.mxu0
        %v968 = vadd.f32 %v924, %v967
        %v969 = vand.u32 %v822, 4294901760
        %v970 = vsub.f32 %v822, %v969
        %971 = vmatmul.f32.gmra.mxu0 %v970
        %v972 = vpop.f32.mrf.mxu0
        %v973 = vadd.f32 %v928, %v972
        %974 = vdwg.mxu0
        %975 = vmatpush.msra.mxu0 0.0
        %976 = vmatpush.msra.mxu0 0.0
        %977 = vmatpush.msra.mxu0 0.0
        %978 = vmatpush.msra.mxu0 0.0
        %979 = vmatpush.msra.mxu0 0.0
        %980 = vmatpush.msra.mxu0 0.0
        %981 = vmatpush.msra.mxu0 0.0
        %982 = vmatpush.msra.mxu0 0.0
        %983 = vmatpush.msra.mxu0 0.0
        %984 = vmatpush.msra.mxu0 0.0
        %985 = vmatpush.msra.mxu0 0.0
        %986 = vmatpush.msra.mxu0 0.0
        %v987 = vand.u32 %v808, 4294901760
        %988 = vmatpush.msra.mxu0 %v987
        %v989 = vand.u32 %v805, 4294901760
        %990 = vmatpush.msra.mxu0 %v989
        %v991 = vand.u32 %v802, 4294901760
        %992 = vmatpush.msra.mxu0 %v991
        %v993 = vand.u32 %v799, 4294901760
        %994 = vmatpush.msra.mxu0 %v993
        %v995 = vand.u32 %v813, 4294901760
        %v996 = vsub.f32 %v813, %v995
        %v997 = vand.u32 %v996, 4294901760
        %998 = vmatmul.f32.gmra.mxu0 %v997
        %v999 = vpop.f32.mrf.mxu0
        %v1000 = vadd.f32 %v958, %v999
        %v1001 = vand.u32 %v816, 4294901760
        %v1002 = vsub.f32 %v816, %v1001
        %v1003 = vand.u32 %v1002, 4294901760
        %1004 = vmatmul.f32.gmra.mxu0 %v1003
        %v1005 = vpop.f32.mrf.mxu0
        %v1006 = vadd.f32 %v963, %v1005
        %v1007 = vand.u32 %v819, 4294901760
        %v1008 = vsub.f32 %v819, %v1007
        %v1009 = vand.u32 %v1008, 4294901760
        %1010 = vmatmul.f32.gmra.mxu0 %v1009
        %v1011 = vpop.f32.mrf.mxu0
        %v1012 = vadd.f32 %v968, %v1011
        %v1013 = vand.u32 %v822, 4294901760
        %v1014 = vsub.f32 %v822, %v1013
        %v1015 = vand.u32 %v1014, 4294901760
        %1016 = vmatmul.f32.gmra.mxu0 %v1015
        %v1017 = vpop.f32.mrf.mxu0
        %v1018 = vadd.f32 %v973, %v1017
        %1019 = vdwg.mxu0
        %1020 = vmatpush.msra.mxu0 0.0
        %1021 = vmatpush.msra.mxu0 0.0
        %1022 = vmatpush.msra.mxu0 0.0
        %1023 = vmatpush.msra.mxu0 0.0
        %1024 = vmatpush.msra.mxu0 0.0
        %1025 = vmatpush.msra.mxu0 0.0
        %1026 = vmatpush.msra.mxu0 0.0
        %1027 = vmatpush.msra.mxu0 0.0
        %1028 = vmatpush.msra.mxu0 0.0
        %1029 = vmatpush.msra.mxu0 0.0
        %1030 = vmatpush.msra.mxu0 0.0
        %1031 = vmatpush.msra.mxu0 0.0
        %v1032 = vand.u32 %v808, 4294901760
        %v1033 = vsub.f32 %v808, %v1032
        %v1034 = vand.u32 %v1033, 4294901760
        %1035 = vmatpush.msra.mxu0 %v1034
        %v1036 = vand.u32 %v805, 4294901760
        %v1037 = vsub.f32 %v805, %v1036
        %v1038 = vand.u32 %v1037, 4294901760
        %1039 = vmatpush.msra.mxu0 %v1038
        %v1040 = vand.u32 %v802, 4294901760
        %v1041 = vsub.f32 %v802, %v1040
        %v1042 = vand.u32 %v1041, 4294901760
        %1043 = vmatpush.msra.mxu0 %v1042
        %v1044 = vand.u32 %v799, 4294901760
        %v1045 = vsub.f32 %v799, %v1044
        %v1046 = vand.u32 %v1045, 4294901760
        %1047 = vmatpush.msra.mxu0 %v1046
        %v1048 = vand.u32 %v813, 4294901760
        %1049 = vmatmul.f32.gmra.mxu0 %v1048
        %v1050 = vpop.f32.mrf.mxu0
        %v1051 = vadd.f32 %v1000, %v1050
        %v1052 = vand.u32 %v816, 4294901760
        %1053 = vmatmul.f32.gmra.mxu0 %v1052
        %v1054 = vpop.f32.mrf.mxu0
        %v1055 = vadd.f32 %v1006, %v1054
        %v1056 = vand.u32 %v819, 4294901760
        %1057 = vmatmul.f32.gmra.mxu0 %v1056
        %v1058 = vpop.f32.mrf.mxu0
        %v1059 = vadd.f32 %v1012, %v1058
        %v1060 = vand.u32 %v822, 4294901760
        %1061 = vmatmul.f32.gmra.mxu0 %v1060
        %v1062 = vpop.f32.mrf.mxu0
        %v1063 = vadd.f32 %v1018, %v1062
        %1064 = vdwg.mxu0
        %1065 = vmatpush.msra.mxu0 0.0
        %1066 = vmatpush.msra.mxu0 0.0
        %1067 = vmatpush.msra.mxu0 0.0
        %1068 = vmatpush.msra.mxu0 0.0
        %1069 = vmatpush.msra.mxu0 0.0
        %1070 = vmatpush.msra.mxu0 0.0
        %1071 = vmatpush.msra.mxu0 0.0
        %1072 = vmatpush.msra.mxu0 0.0
        %1073 = vmatpush.msra.mxu0 0.0
        %1074 = vmatpush.msra.mxu0 0.0
        %1075 = vmatpush.msra.mxu0 0.0
        %1076 = vmatpush.msra.mxu0 0.0
        %v1077 = vand.u32 %v808, 4294901760
        %1078 = vmatpush.msra.mxu0 %v1077
        %v1079 = vand.u32 %v805, 4294901760
        %1080 = vmatpush.msra.mxu0 %v1079
        %v1081 = vand.u32 %v802, 4294901760
        %1082 = vmatpush.msra.mxu0 %v1081
        %v1083 = vand.u32 %v799, 4294901760
        %1084 = vmatpush.msra.mxu0 %v1083
        %v1085 = vand.u32 %v813, 4294901760
        %1086 = vmatmul.f32.gmra.mxu0 %v1085
        %v1087 = vpop.f32.mrf.mxu0
        %v1088 = vadd.f32 %v1051, %v1087
        %v1089 = vand.u32 %v816, 4294901760
        %1090 = vmatmul.f32.gmra.mxu0 %v1089
        %v1091 = vpop.f32.mrf.mxu0
        %v1092 = vadd.f32 %v1055, %v1091
        %v1093 = vand.u32 %v819, 4294901760
        %1094 = vmatmul.f32.gmra.mxu0 %v1093
        %v1095 = vpop.f32.mrf.mxu0
        %v1096 = vadd.f32 %v1059, %v1095
        %v1097 = vand.u32 %v822, 4294901760
        %1098 = vmatmul.f32.gmra.mxu0 %v1097
        %v1099 = vpop.f32.mrf.mxu0
        %v1100 = vadd.f32 %v1063, %v1099
        %1101 = vdwg.mxu0
        %1102 = vmatpush.msra.mxu0 0.0
        %1103 = vmatpush.msra.mxu0 0.0
        %1104 = vmatpush.msra.mxu0 0.0
        %1105 = vmatpush.msra.mxu0 0.0
        %1106 = vmatpush.msra.mxu0 0.0
        %1107 = vmatpush.msra.mxu0 0.0
        %1108 = vmatpush.msra.mxu0 0.0
        %1109 = vmatpush.msra.mxu0 0.0
        %1110 = vmatpush.msra.mxu0 0.0
        %1111 = vmatpush.msra.mxu0 0.0
        %1112 = vmatpush.msra.mxu0 0.0
        %1113 = vmatpush.msra.mxu0 0.0
        %v1114 = vand.u32 %v809, 4294901760
        %1115 = vmatpush.msra.mxu0 %v1114
        %v1116 = vand.u32 %v806, 4294901760
        %1117 = vmatpush.msra.mxu0 %v1116
        %v1118 = vand.u32 %v803, 4294901760
        %1119 = vmatpush.msra.mxu0 %v1118
        %v1120 = vand.u32 %v800, 4294901760
        %1121 = vmatpush.msra.mxu0 %v1120
        %v1122 = vand.u32 %v813, 4294901760
        %v1123 = vsub.f32 %v813, %v1122
        %v1124 = vand.u32 %v1123, 4294901760
        %v1125 = vsub.f32 %v1123, %v1124
        %v1126 = vand.u32 %v1125, 4294901760
        %1127 = vmatmul.f32.gmra.mxu0 %v1126
        %v1128 = vpop.f32.mrf.mxu0
        %v1129 = vadd.f32 0.0, %v1128
        %v1130 = vand.u32 %v816, 4294901760
        %v1131 = vsub.f32 %v816, %v1130
        %v1132 = vand.u32 %v1131, 4294901760
        %v1133 = vsub.f32 %v1131, %v1132
        %v1134 = vand.u32 %v1133, 4294901760
        %1135 = vmatmul.f32.gmra.mxu0 %v1134
        %v1136 = vpop.f32.mrf.mxu0
        %v1137 = vadd.f32 0.0, %v1136
        %v1138 = vand.u32 %v819, 4294901760
        %v1139 = vsub.f32 %v819, %v1138
        %v1140 = vand.u32 %v1139, 4294901760
        %v1141 = vsub.f32 %v1139, %v1140
        %v1142 = vand.u32 %v1141, 4294901760
        %1143 = vmatmul.f32.gmra.mxu0 %v1142
        %v1144 = vpop.f32.mrf.mxu0
        %v1145 = vadd.f32 0.0, %v1144
        %v1146 = vand.u32 %v822, 4294901760
        %v1147 = vsub.f32 %v822, %v1146
        %v1148 = vand.u32 %v1147, 4294901760
        %v1149 = vsub.f32 %v1147, %v1148
        %v1150 = vand.u32 %v1149, 4294901760
        %1151 = vmatmul.f32.gmra.mxu0 %v1150
        %v1152 = vpop.f32.mrf.mxu0
        %v1153 = vadd.f32 0.0, %v1152
        %1154 = vdwg.mxu0
        %1155 = vmatpush.msra.mxu0 0.0
        %1156 = vmatpush.msra.mxu0 0.0
        %1157 = vmatpush.msra.mxu0 0.0
        %1158 = vmatpush.msra.mxu0 0.0
        %1159 = vmatpush.msra.mxu0 0.0
        %1160 = vmatpush.msra.mxu0 0.0
        %1161 = vmatpush.msra.mxu0 0.0
        %1162 = vmatpush.msra.mxu0 0.0
        %1163 = vmatpush.msra.mxu0 0.0
        %1164 = vmatpush.msra.mxu0 0.0
        %1165 = vmatpush.msra.mxu0 0.0
        %1166 = vmatpush.msra.mxu0 0.0
        %v1167 = vand.u32 %v809, 4294901760
        %v1168 = vsub.f32 %v809, %v1167
        %v1169 = vand.u32 %v1168, 4294901760
        %v1170 = vsub.f32 %v1168, %v1169
        %v1171 = vand.u32 %v1170, 4294901760
        %1172 = vmatpush.msra.mxu0 %v1171
        %v1173 = vand.u32 %v806, 4294901760
        %v1174 = vsub.f32 %v806, %v1173
        %v1175 = vand.u32 %v1174, 4294901760
        %v1176 = vsub.f32 %v1174, %v1175
        %v1177 = vand.u32 %v1176, 4294901760
        %1178 = vmatpush.msra.mxu0 %v1177
        %v1179 = vand.u32 %v803, 4294901760
        %v1180 = vsub.f32 %v803, %v1179
        %v1181 = vand.u32 %v1180, 4294901760
        %v1182 = vsub.f32 %v1180, %v1181
        %v1183 = vand.u32 %v1182, 4294901760
        %1184 = vmatpush.msra.mxu0 %v1183
        %v1185 = vand.u32 %v800, 4294901760
        %v1186 = vsub.f32 %v800, %v1185
        %v1187 = vand.u32 %v1186, 4294901760
        %v1188 = vsub.f32 %v1186, %v1187
        %v1189 = vand.u32 %v1188, 4294901760
        %1190 = vmatpush.msra.mxu0 %v1189
        %v1191 = vand.u32 %v813, 4294901760
        %1192 = vmatmul.f32.gmra.mxu0 %v1191
        %v1193 = vpop.f32.mrf.mxu0
        %v1194 = vadd.f32 %v1129, %v1193
        %v1195 = vand.u32 %v816, 4294901760
        %1196 = vmatmul.f32.gmra.mxu0 %v1195
        %v1197 = vpop.f32.mrf.mxu0
        %v1198 = vadd.f32 %v1137, %v1197
        %v1199 = vand.u32 %v819, 4294901760
        %1200 = vmatmul.f32.gmra.mxu0 %v1199
        %v1201 = vpop.f32.mrf.mxu0
        %v1202 = vadd.f32 %v1145, %v1201
        %v1203 = vand.u32 %v822, 4294901760
        %1204 = vmatmul.f32.gmra.mxu0 %v1203
        %v1205 = vpop.f32.mrf.mxu0
        %v1206 = vadd.f32 %v1153, %v1205
        %1207 = vdwg.mxu0
        %1208 = vmatpush.msra.mxu0 0.0
        %1209 = vmatpush.msra.mxu0 0.0
        %1210 = vmatpush.msra.mxu0 0.0
        %1211 = vmatpush.msra.mxu0 0.0
        %1212 = vmatpush.msra.mxu0 0.0
        %1213 = vmatpush.msra.mxu0 0.0
        %1214 = vmatpush.msra.mxu0 0.0
        %1215 = vmatpush.msra.mxu0 0.0
        %1216 = vmatpush.msra.mxu0 0.0
        %1217 = vmatpush.msra.mxu0 0.0
        %1218 = vmatpush.msra.mxu0 0.0
        %1219 = vmatpush.msra.mxu0 0.0
        %v1220 = vand.u32 %v809, 4294901760
        %v1221 = vsub.f32 %v809, %v1220
        %1222 = vmatpush.msra.mxu0 %v1221
        %v1223 = vand.u32 %v806, 4294901760
        %v1224 = vsub.f32 %v806, %v1223
        %1225 = vmatpush.msra.mxu0 %v1224
        %v1226 = vand.u32 %v803, 4294901760
        %v1227 = vsub.f32 %v803, %v1226
        %1228 = vmatpush.msra.mxu0 %v1227
        %v1229 = vand.u32 %v800, 4294901760
        %v1230 = vsub.f32 %v800, %v1229
        %1231 = vmatpush.msra.mxu0 %v1230
        %v1232 = vand.u32 %v813, 4294901760
        %v1233 = vsub.f32 %v813, %v1232
        %1234 = vmatmul.f32.gmra.mxu0 %v1233
        %v1235 = vpop.f32.mrf.mxu0
        %v1236 = vadd.f32 %v1194, %v1235
        %v1237 = vand.u32 %v816, 4294901760
        %v1238 = vsub.f32 %v816, %v1237
        %1239 = vmatmul.f32.gmra.mxu0 %v1238
        %v1240 = vpop.f32.mrf.mxu0
        %v1241 = vadd.f32 %v1198, %v1240
        %v1242 = vand.u32 %v819, 4294901760
        %v1243 = vsub.f32 %v819, %v1242
        %1244 = vmatmul.f32.gmra.mxu0 %v1243
        %v1245 = vpop.f32.mrf.mxu0
        %v1246 = vadd.f32 %v1202, %v1245
        %v1247 = vand.u32 %v822, 4294901760
        %v1248 = vsub.f32 %v822, %v1247
        %1249 = vmatmul.f32.gmra.mxu0 %v1248
        %v1250 = vpop.f32.mrf.mxu0
        %v1251 = vadd.f32 %v1206, %v1250
        %1252 = vdwg.mxu0
        %1253 = vmatpush.msra.mxu0 0.0
        %1254 = vmatpush.msra.mxu0 0.0
        %1255 = vmatpush.msra.mxu0 0.0
        %1256 = vmatpush.msra.mxu0 0.0
        %1257 = vmatpush.msra.mxu0 0.0
        %1258 = vmatpush.msra.mxu0 0.0
        %1259 = vmatpush.msra.mxu0 0.0
        %1260 = vmatpush.msra.mxu0 0.0
        %1261 = vmatpush.msra.mxu0 0.0
        %1262 = vmatpush.msra.mxu0 0.0
        %1263 = vmatpush.msra.mxu0 0.0
        %1264 = vmatpush.msra.mxu0 0.0
        %v1265 = vand.u32 %v809, 4294901760
        %1266 = vmatpush.msra.mxu0 %v1265
        %v1267 = vand.u32 %v806, 4294901760
        %1268 = vmatpush.msra.mxu0 %v1267
        %v1269 = vand.u32 %v803, 4294901760
        %1270 = vmatpush.msra.mxu0 %v1269
        %v1271 = vand.u32 %v800, 4294901760
        %1272 = vmatpush.msra.mxu0 %v1271
        %v1273 = vand.u32 %v813, 4294901760
        %v1274 = vsub.f32 %v813, %v1273
        %v1275 = vand.u32 %v1274, 4294901760
        %1276 = vmatmul.f32.gmra.mxu0 %v1275
        %v1277 = vpop.f32.mrf.mxu0
        %v1278 = vadd.f32 %v1236, %v1277
        %v1279 = vand.u32 %v816, 4294901760
        %v1280 = vsub.f32 %v816, %v1279
        %v1281 = vand.u32 %v1280, 4294901760
        %1282 = vmatmul.f32.gmra.mxu0 %v1281
        %v1283 = vpop.f32.mrf.mxu0
        %v1284 = vadd.f32 %v1241, %v1283
        %v1285 = vand.u32 %v819, 4294901760
        %v1286 = vsub.f32 %v819, %v1285
        %v1287 = vand.u32 %v1286, 4294901760
        %1288 = vmatmul.f32.gmra.mxu0 %v1287
        %v1289 = vpop.f32.mrf.mxu0
        %v1290 = vadd.f32 %v1246, %v1289
        %v1291 = vand.u32 %v822, 4294901760
        %v1292 = vsub.f32 %v822, %v1291
        %v1293 = vand.u32 %v1292, 4294901760
        %1294 = vmatmul.f32.gmra.mxu0 %v1293
        %v1295 = vpop.f32.mrf.mxu0
        %v1296 = vadd.f32 %v1251, %v1295
        %1297 = vdwg.mxu0
        %1298 = vmatpush.msra.mxu0 0.0
        %1299 = vmatpush.msra.mxu0 0.0
        %1300 = vmatpush.msra.mxu0 0.0
        %1301 = vmatpush.msra.mxu0 0.0
        %1302 = vmatpush.msra.mxu0 0.0
        %1303 = vmatpush.msra.mxu0 0.0
        %1304 = vmatpush.msra.mxu0 0.0
        %1305 = vmatpush.msra.mxu0 0.0
        %1306 = vmatpush.msra.mxu0 0.0
        %1307 = vmatpush.msra.mxu0 0.0
        %1308 = vmatpush.msra.mxu0 0.0
        %1309 = vmatpush.msra.mxu0 0.0
        %v1310 = vand.u32 %v809, 4294901760
        %v1311 = vsub.f32 %v809, %v1310
        %v1312 = vand.u32 %v1311, 4294901760
        %1313 = vmatpush.msra.mxu0 %v1312
        %v1314 = vand.u32 %v806, 4294901760
        %v1315 = vsub.f32 %v806, %v1314
        %v1316 = vand.u32 %v1315, 4294901760
        %1317 = vmatpush.msra.mxu0 %v1316
        %v1318 = vand.u32 %v803, 4294901760
        %v1319 = vsub.f32 %v803, %v1318
        %v1320 = vand.u32 %v1319, 4294901760
        %1321 = vmatpush.msra.mxu0 %v1320
        %v1322 = vand.u32 %v800, 4294901760
        %v1323 = vsub.f32 %v800, %v1322
        %v1324 = vand.u32 %v1323, 4294901760
        %1325 = vmatpush.msra.mxu0 %v1324
        %v1326 = vand.u32 %v813, 4294901760
        %1327 = vmatmul.f32.gmra.mxu0 %v1326
        %v1328 = vpop.f32.mrf.mxu0
        %v1329 = vadd.f32 %v1278, %v1328
        %v1330 = vand.u32 %v816, 4294901760
        %1331 = vmatmul.f32.gmra.mxu0 %v1330
        %v1332 = vpop.f32.mrf.mxu0
        %v1333 = vadd.f32 %v1284, %v1332
        %v1334 = vand.u32 %v819, 4294901760
        %1335 = vmatmul.f32.gmra.mxu0 %v1334
        %v1336 = vpop.f32.mrf.mxu0
        %v1337 = vadd.f32 %v1290, %v1336
        %v1338 = vand.u32 %v822, 4294901760
        %1339 = vmatmul.f32.gmra.mxu0 %v1338
        %v1340 = vpop.f32.mrf.mxu0
        %v1341 = vadd.f32 %v1296, %v1340
        %1342 = vdwg.mxu0
        %1343 = vmatpush.msra.mxu0 0.0
        %1344 = vmatpush.msra.mxu0 0.0
        %1345 = vmatpush.msra.mxu0 0.0
        %1346 = vmatpush.msra.mxu0 0.0
        %1347 = vmatpush.msra.mxu0 0.0
        %1348 = vmatpush.msra.mxu0 0.0
        %1349 = vmatpush.msra.mxu0 0.0
        %1350 = vmatpush.msra.mxu0 0.0
        %1351 = vmatpush.msra.mxu0 0.0
        %1352 = vmatpush.msra.mxu0 0.0
        %1353 = vmatpush.msra.mxu0 0.0
        %1354 = vmatpush.msra.mxu0 0.0
        %v1355 = vand.u32 %v809, 4294901760
        %1356 = vmatpush.msra.mxu0 %v1355
        %v1357 = vand.u32 %v806, 4294901760
        %1358 = vmatpush.msra.mxu0 %v1357
        %v1359 = vand.u32 %v803, 4294901760
        %1360 = vmatpush.msra.mxu0 %v1359
        %v1361 = vand.u32 %v800, 4294901760
        %1362 = vmatpush.msra.mxu0 %v1361
        %v1363 = vand.u32 %v813, 4294901760
        %1364 = vmatmul.f32.gmra.mxu0 %v1363
        %v1365 = vpop.f32.mrf.mxu0
        %v1366 = vadd.f32 %v1329, %v1365
        %v1367 = vand.u32 %v816, 4294901760
        %1368 = vmatmul.f32.gmra.mxu0 %v1367
        %v1369 = vpop.f32.mrf.mxu0
        %v1370 = vadd.f32 %v1333, %v1369
        %v1371 = vand.u32 %v819, 4294901760
        %1372 = vmatmul.f32.gmra.mxu0 %v1371
        %v1373 = vpop.f32.mrf.mxu0
        %v1374 = vadd.f32 %v1337, %v1373
        %v1375 = vand.u32 %v822, 4294901760
        %1376 = vmatmul.f32.gmra.mxu0 %v1375
        %v1377 = vpop.f32.mrf.mxu0
        %v1378 = vadd.f32 %v1341, %v1377
        %1379 = vdwg.mxu0
        %1380 = vmatpush.msra.mxu0 0.0
        %1381 = vmatpush.msra.mxu0 0.0
        %1382 = vmatpush.msra.mxu0 0.0
        %1383 = vmatpush.msra.mxu0 0.0
        %1384 = vmatpush.msra.mxu0 0.0
        %1385 = vmatpush.msra.mxu0 0.0
        %1386 = vmatpush.msra.mxu0 0.0
        %1387 = vmatpush.msra.mxu0 0.0
        %1388 = vmatpush.msra.mxu0 0.0
        %1389 = vmatpush.msra.mxu0 0.0
        %1390 = vmatpush.msra.mxu0 0.0
        %1391 = vmatpush.msra.mxu0 0.0
        %v1392 = vand.u32 %v810, 4294901760
        %1393 = vmatpush.msra.mxu0 %v1392
        %v1394 = vand.u32 %v807, 4294901760
        %1395 = vmatpush.msra.mxu0 %v1394
        %v1396 = vand.u32 %v804, 4294901760
        %1397 = vmatpush.msra.mxu0 %v1396
        %v1398 = vand.u32 %v801, 4294901760
        %1399 = vmatpush.msra.mxu0 %v1398
        %v1400 = vand.u32 %v813, 4294901760
        %v1401 = vsub.f32 %v813, %v1400
        %v1402 = vand.u32 %v1401, 4294901760
        %v1403 = vsub.f32 %v1401, %v1402
        %v1404 = vand.u32 %v1403, 4294901760
        %1405 = vmatmul.f32.gmra.mxu0 %v1404
        %v1406 = vpop.f32.mrf.mxu0
        %v1407 = vadd.f32 0.0, %v1406
        %v1408 = vand.u32 %v816, 4294901760
        %v1409 = vsub.f32 %v816, %v1408
        %v1410 = vand.u32 %v1409, 4294901760
        %v1411 = vsub.f32 %v1409, %v1410
        %v1412 = vand.u32 %v1411, 4294901760
        %1413 = vmatmul.f32.gmra.mxu0 %v1412
        %v1414 = vpop.f32.mrf.mxu0
        %v1415 = vadd.f32 0.0, %v1414
        %v1416 = vand.u32 %v819, 4294901760
        %v1417 = vsub.f32 %v819, %v1416
        %v1418 = vand.u32 %v1417, 4294901760
        %v1419 = vsub.f32 %v1417, %v1418
        %v1420 = vand.u32 %v1419, 4294901760
        %1421 = vmatmul.f32.gmra.mxu0 %v1420
        %v1422 = vpop.f32.mrf.mxu0
        %v1423 = vadd.f32 0.0, %v1422
        %v1424 = vand.u32 %v822, 4294901760
        %v1425 = vsub.f32 %v822, %v1424
        %v1426 = vand.u32 %v1425, 4294901760
        %v1427 = vsub.f32 %v1425, %v1426
        %v1428 = vand.u32 %v1427, 4294901760
        %1429 = vmatmul.f32.gmra.mxu0 %v1428
        %v1430 = vpop.f32.mrf.mxu0
        %v1431 = vadd.f32 0.0, %v1430
        %1432 = vdwg.mxu0
        %1433 = vmatpush.msra.mxu0 0.0
        %1434 = vmatpush.msra.mxu0 0.0
        %1435 = vmatpush.msra.mxu0 0.0
        %1436 = vmatpush.msra.mxu0 0.0
        %1437 = vmatpush.msra.mxu0 0.0
        %1438 = vmatpush.msra.mxu0 0.0
        %1439 = vmatpush.msra.mxu0 0.0
        %1440 = vmatpush.msra.mxu0 0.0
        %1441 = vmatpush.msra.mxu0 0.0
        %1442 = vmatpush.msra.mxu0 0.0
        %1443 = vmatpush.msra.mxu0 0.0
        %1444 = vmatpush.msra.mxu0 0.0
        %v1445 = vand.u32 %v810, 4294901760
        %v1446 = vsub.f32 %v810, %v1445
        %v1447 = vand.u32 %v1446, 4294901760
        %v1448 = vsub.f32 %v1446, %v1447
        %v1449 = vand.u32 %v1448, 4294901760
        %1450 = vmatpush.msra.mxu0 %v1449
        %v1451 = vand.u32 %v807, 4294901760
        %v1452 = vsub.f32 %v807, %v1451
        %v1453 = vand.u32 %v1452, 4294901760
        %v1454 = vsub.f32 %v1452, %v1453
        %v1455 = vand.u32 %v1454, 4294901760
        %1456 = vmatpush.msra.mxu0 %v1455
        %v1457 = vand.u32 %v804, 4294901760
        %v1458 = vsub.f32 %v804, %v1457
        %v1459 = vand.u32 %v1458, 4294901760
        %v1460 = vsub.f32 %v1458, %v1459
        %v1461 = vand.u32 %v1460, 4294901760
        %1462 = vmatpush.msra.mxu0 %v1461
        %v1463 = vand.u32 %v801, 4294901760
        %v1464 = vsub.f32 %v801, %v1463
        %v1465 = vand.u32 %v1464, 4294901760
        %v1466 = vsub.f32 %v1464, %v1465
        %v1467 = vand.u32 %v1466, 4294901760
        %1468 = vmatpush.msra.mxu0 %v1467
        %v1469 = vand.u32 %v813, 4294901760
        %1470 = vmatmul.f32.gmra.mxu0 %v1469
        %v1471 = vpop.f32.mrf.mxu0
        %v1472 = vadd.f32 %v1407, %v1471
        %v1473 = vand.u32 %v816, 4294901760
        %1474 = vmatmul.f32.gmra.mxu0 %v1473
        %v1475 = vpop.f32.mrf.mxu0
        %v1476 = vadd.f32 %v1415, %v1475
        %v1477 = vand.u32 %v819, 4294901760
        %1478 = vmatmul.f32.gmra.mxu0 %v1477
        %v1479 = vpop.f32.mrf.mxu0
        %v1480 = vadd.f32 %v1423, %v1479
        %v1481 = vand.u32 %v822, 4294901760
        %1482 = vmatmul.f32.gmra.mxu0 %v1481
        %v1483 = vpop.f32.mrf.mxu0
        %v1484 = vadd.f32 %v1431, %v1483
        %1485 = vdwg.mxu0
        %1486 = vmatpush.msra.mxu0 0.0
        %1487 = vmatpush.msra.mxu0 0.0
        %1488 = vmatpush.msra.mxu0 0.0
        %1489 = vmatpush.msra.mxu0 0.0
        %1490 = vmatpush.msra.mxu0 0.0
        %1491 = vmatpush.msra.mxu0 0.0
        %1492 = vmatpush.msra.mxu0 0.0
        %1493 = vmatpush.msra.mxu0 0.0
        %1494 = vmatpush.msra.mxu0 0.0
        %1495 = vmatpush.msra.mxu0 0.0
        %1496 = vmatpush.msra.mxu0 0.0
        %1497 = vmatpush.msra.mxu0 0.0
        %v1498 = vand.u32 %v810, 4294901760
        %v1499 = vsub.f32 %v810, %v1498
        %1500 = vmatpush.msra.mxu0 %v1499
        %v1501 = vand.u32 %v807, 4294901760
        %v1502 = vsub.f32 %v807, %v1501
        %1503 = vmatpush.msra.mxu0 %v1502
        %v1504 = vand.u32 %v804, 4294901760
        %v1505 = vsub.f32 %v804, %v1504
        %1506 = vmatpush.msra.mxu0 %v1505
        %v1507 = vand.u32 %v801, 4294901760
        %v1508 = vsub.f32 %v801, %v1507
        %1509 = vmatpush.msra.mxu0 %v1508
        %v1510 = vand.u32 %v813, 4294901760
        %v1511 = vsub.f32 %v813, %v1510
        %1512 = vmatmul.f32.gmra.mxu0 %v1511
        %v1513 = vpop.f32.mrf.mxu0
        %v1514 = vadd.f32 %v1472, %v1513
        %v1515 = vand.u32 %v816, 4294901760
        %v1516 = vsub.f32 %v816, %v1515
        %1517 = vmatmul.f32.gmra.mxu0 %v1516
        %v1518 = vpop.f32.mrf.mxu0
        %v1519 = vadd.f32 %v1476, %v1518
        %v1520 = vand.u32 %v819, 4294901760
        %v1521 = vsub.f32 %v819, %v1520
        %1522 = vmatmul.f32.gmra.mxu0 %v1521
        %v1523 = vpop.f32.mrf.mxu0
        %v1524 = vadd.f32 %v1480, %v1523
        %v1525 = vand.u32 %v822, 4294901760
        %v1526 = vsub.f32 %v822, %v1525
        %1527 = vmatmul.f32.gmra.mxu0 %v1526
        %v1528 = vpop.f32.mrf.mxu0
        %v1529 = vadd.f32 %v1484, %v1528
        %1530 = vdwg.mxu0
        %1531 = vmatpush.msra.mxu0 0.0
        %1532 = vmatpush.msra.mxu0 0.0
        %1533 = vmatpush.msra.mxu0 0.0
        %1534 = vmatpush.msra.mxu0 0.0
        %1535 = vmatpush.msra.mxu0 0.0
        %1536 = vmatpush.msra.mxu0 0.0
        %1537 = vmatpush.msra.mxu0 0.0
        %1538 = vmatpush.msra.mxu0 0.0
        %1539 = vmatpush.msra.mxu0 0.0
        %1540 = vmatpush.msra.mxu0 0.0
        %1541 = vmatpush.msra.mxu0 0.0
        %1542 = vmatpush.msra.mxu0 0.0
        %v1543 = vand.u32 %v810, 4294901760
        %1544 = vmatpush.msra.mxu0 %v1543
        %v1545 = vand.u32 %v807, 4294901760
        %1546 = vmatpush.msra.mxu0 %v1545
        %v1547 = vand.u32 %v804, 4294901760
        %1548 = vmatpush.msra.mxu0 %v1547
        %v1549 = vand.u32 %v801, 4294901760
        %1550 = vmatpush.msra.mxu0 %v1549
        %v1551 = vand.u32 %v813, 4294901760
        %v1552 = vsub.f32 %v813, %v1551
        %v1553 = vand.u32 %v1552, 4294901760
        %1554 = vmatmul.f32.gmra.mxu0 %v1553
        %v1555 = vpop.f32.mrf.mxu0
        %v1556 = vadd.f32 %v1514, %v1555
        %v1557 = vand.u32 %v816, 4294901760
        %v1558 = vsub.f32 %v816, %v1557
        %v1559 = vand.u32 %v1558, 4294901760
        %1560 = vmatmul.f32.gmra.mxu0 %v1559
        %v1561 = vpop.f32.mrf.mxu0
        %v1562 = vadd.f32 %v1519, %v1561
        %v1563 = vand.u32 %v819, 4294901760
        %v1564 = vsub.f32 %v819, %v1563
        %v1565 = vand.u32 %v1564, 4294901760
        %1566 = vmatmul.f32.gmra.mxu0 %v1565
        %v1567 = vpop.f32.mrf.mxu0
        %v1568 = vadd.f32 %v1524, %v1567
        %v1569 = vand.u32 %v822, 4294901760
        %v1570 = vsub.f32 %v822, %v1569
        %v1571 = vand.u32 %v1570, 4294901760
        %1572 = vmatmul.f32.gmra.mxu0 %v1571
        %v1573 = vpop.f32.mrf.mxu0
        %v1574 = vadd.f32 %v1529, %v1573
        %1575 = vdwg.mxu0
        %1576 = vmatpush.msra.mxu0 0.0
        %1577 = vmatpush.msra.mxu0 0.0
        %1578 = vmatpush.msra.mxu0 0.0
        %1579 = vmatpush.msra.mxu0 0.0
        %1580 = vmatpush.msra.mxu0 0.0
        %1581 = vmatpush.msra.mxu0 0.0
        %1582 = vmatpush.msra.mxu0 0.0
        %1583 = vmatpush.msra.mxu0 0.0
        %1584 = vmatpush.msra.mxu0 0.0
        %1585 = vmatpush.msra.mxu0 0.0
        %1586 = vmatpush.msra.mxu0 0.0
        %1587 = vmatpush.msra.mxu0 0.0
        %v1588 = vand.u32 %v810, 4294901760
        %v1589 = vsub.f32 %v810, %v1588
        %v1590 = vand.u32 %v1589, 4294901760
        %1591 = vmatpush.msra.mxu0 %v1590
        %v1592 = vand.u32 %v807, 4294901760
        %v1593 = vsub.f32 %v807, %v1592
        %v1594 = vand.u32 %v1593, 4294901760
        %1595 = vmatpush.msra.mxu0 %v1594
        %v1596 = vand.u32 %v804, 4294901760
        %v1597 = vsub.f32 %v804, %v1596
        %v1598 = vand.u32 %v1597, 4294901760
        %1599 = vmatpush.msra.mxu0 %v1598
        %v1600 = vand.u32 %v801, 4294901760
        %v1601 = vsub.f32 %v801, %v1600
        %v1602 = vand.u32 %v1601, 4294901760
        %1603 = vmatpush.msra.mxu0 %v1602
        %v1604 = vand.u32 %v813, 4294901760
        %1605 = vmatmul.f32.gmra.mxu0 %v1604
        %v1606 = vpop.f32.mrf.mxu0
        %v1607 = vadd.f32 %v1556, %v1606
        %v1608 = vand.u32 %v816, 4294901760
        %1609 = vmatmul.f32.gmra.mxu0 %v1608
        %v1610 = vpop.f32.mrf.mxu0
        %v1611 = vadd.f32 %v1562, %v1610
        %v1612 = vand.u32 %v819, 4294901760
        %1613 = vmatmul.f32.gmra.mxu0 %v1612
        %v1614 = vpop.f32.mrf.mxu0
        %v1615 = vadd.f32 %v1568, %v1614
        %v1616 = vand.u32 %v822, 4294901760
        %1617 = vmatmul.f32.gmra.mxu0 %v1616
        %v1618 = vpop.f32.mrf.mxu0
        %v1619 = vadd.f32 %v1574, %v1618
        %1620 = vdwg.mxu0
        %1621 = vmatpush.msra.mxu0 0.0
        %1622 = vmatpush.msra.mxu0 0.0
        %1623 = vmatpush.msra.mxu0 0.0
        %1624 = vmatpush.msra.mxu0 0.0
        %1625 = vmatpush.msra.mxu0 0.0
        %1626 = vmatpush.msra.mxu0 0.0
        %1627 = vmatpush.msra.mxu0 0.0
        %1628 = vmatpush.msra.mxu0 0.0
        %1629 = vmatpush.msra.mxu0 0.0
        %1630 = vmatpush.msra.mxu0 0.0
        %1631 = vmatpush.msra.mxu0 0.0
        %1632 = vmatpush.msra.mxu0 0.0
        %v1633 = vand.u32 %v810, 4294901760
        %1634 = vmatpush.msra.mxu0 %v1633
        %v1635 = vand.u32 %v807, 4294901760
        %1636 = vmatpush.msra.mxu0 %v1635
        %v1637 = vand.u32 %v804, 4294901760
        %1638 = vmatpush.msra.mxu0 %v1637
        %v1639 = vand.u32 %v801, 4294901760
        %1640 = vmatpush.msra.mxu0 %v1639
        %v1641 = vand.u32 %v813, 4294901760
        %1642 = vmatmul.f32.gmra.mxu0 %v1641
        %v1643 = vpop.f32.mrf.mxu0
        %v1644 = vadd.f32 %v1607, %v1643
        %v1645 = vand.u32 %v816, 4294901760
        %1646 = vmatmul.f32.gmra.mxu0 %v1645
        %v1647 = vpop.f32.mrf.mxu0
        %v1648 = vadd.f32 %v1611, %v1647
        %v1649 = vand.u32 %v819, 4294901760
        %1650 = vmatmul.f32.gmra.mxu0 %v1649
        %v1651 = vpop.f32.mrf.mxu0
        %v1652 = vadd.f32 %v1615, %v1651
        %v1653 = vand.u32 %v822, 4294901760
        %1654 = vmatmul.f32.gmra.mxu0 %v1653
        %v1655 = vpop.f32.mrf.mxu0
        %v1656 = vadd.f32 %v1619, %v1655
        %1657 = vdwg.mxu0
        %v1658 = vld [vmem:[#allocation7] sm:$0xff]
        %v1659 = vld [vmem:[#allocation7 + $0x8] sm:$0xff]
        %v1660 = vld [vmem:[#allocation7 + $0x10] sm:$0xff]
        %v1661 = vld [vmem:[#allocation7 + $0x18] sm:$0xff]
        %v1663 = vsel %vm811, %v1658, 0
        %v1666 = vsel %vm811, %v1659, 0
        %v1669 = vsel %vm811, %v1660, 0
        %v1672 = vsel %vm811, %v1661, 0
        %1674 = vmatpush.msra.mxu0 0.0
        %1675 = vmatpush.msra.mxu0 0.0
        %1676 = vmatpush.msra.mxu0 0.0
        %1677 = vmatpush.msra.mxu0 0.0
        %1678 = vmatpush.msra.mxu0 0.0
        %1679 = vmatpush.msra.mxu0 0.0
        %1680 = vmatpush.msra.mxu0 0.0
        %1681 = vmatpush.msra.mxu0 0.0
        %1682 = vmatpush.msra.mxu0 0.0
        %1683 = vmatpush.msra.mxu0 0.0
        %1684 = vmatpush.msra.mxu0 0.0
        %1685 = vmatpush.msra.mxu0 0.0
        %v1686 = vand.u32 %v1100, 4294901760
        %1687 = vmatpush.msra.mxu0 %v1686
        %v1688 = vand.u32 %v1096, 4294901760
        %1689 = vmatpush.msra.mxu0 %v1688
        %v1690 = vand.u32 %v1092, 4294901760
        %1691 = vmatpush.msra.mxu0 %v1690
        %v1692 = vand.u32 %v1088, 4294901760
        %1693 = vmatpush.msra.mxu0 %v1692
        %v1694 = vand.u32 %v1663, 4294901760
        %v1695 = vsub.f32 %v1663, %v1694
        %v1696 = vand.u32 %v1695, 4294901760
        %v1697 = vsub.f32 %v1695, %v1696
        %v1698 = vand.u32 %v1697, 4294901760
        %1699 = vmatmul.f32.gmra.mxu0 %v1698
        %v1700 = vpop.f32.mrf.mxu0
        %v1701 = vadd.f32 %v1366, %v1700
        %v1702 = vand.u32 %v1666, 4294901760
        %v1703 = vsub.f32 %v1666, %v1702
        %v1704 = vand.u32 %v1703, 4294901760
        %v1705 = vsub.f32 %v1703, %v1704
        %v1706 = vand.u32 %v1705, 4294901760
        %1707 = vmatmul.f32.gmra.mxu0 %v1706
        %v1708 = vpop.f32.mrf.mxu0
        %v1709 = vadd.f32 %v1370, %v1708
        %v1710 = vand.u32 %v1669, 4294901760
        %v1711 = vsub.f32 %v1669, %v1710
        %v1712 = vand.u32 %v1711, 4294901760
        %v1713 = vsub.f32 %v1711, %v1712
        %v1714 = vand.u32 %v1713, 4294901760
        %1715 = vmatmul.f32.gmra.mxu0 %v1714
        %v1716 = vpop.f32.mrf.mxu0
        %v1717 = vadd.f32 %v1374, %v1716
        %v1718 = vand.u32 %v1672, 4294901760
        %v1719 = vsub.f32 %v1672, %v1718
        %v1720 = vand.u32 %v1719, 4294901760
        %v1721 = vsub.f32 %v1719, %v1720
        %v1722 = vand.u32 %v1721, 4294901760
        %1723 = vmatmul.f32.gmra.mxu0 %v1722
        %v1724 = vpop.f32.mrf.mxu0
        %v1725 = vadd.f32 %v1378, %v1724
        %1726 = vdwg.mxu0
        %1727 = vmatpush.msra.mxu0 0.0
        %1728 = vmatpush.msra.mxu0 0.0
        %1729 = vmatpush.msra.mxu0 0.0
        %1730 = vmatpush.msra.mxu0 0.0
        %1731 = vmatpush.msra.mxu0 0.0
        %1732 = vmatpush.msra.mxu0 0.0
        %1733 = vmatpush.msra.mxu0 0.0
        %1734 = vmatpush.msra.mxu0 0.0
        %1735 = vmatpush.msra.mxu0 0.0
        %1736 = vmatpush.msra.mxu0 0.0
        %1737 = vmatpush.msra.mxu0 0.0
        %1738 = vmatpush.msra.mxu0 0.0
        %v1739 = vand.u32 %v1100, 4294901760
        %v1740 = vsub.f32 %v1100, %v1739
        %v1741 = vand.u32 %v1740, 4294901760
        %v1742 = vsub.f32 %v1740, %v1741
        %v1743 = vand.u32 %v1742, 4294901760
        %1744 = vmatpush.msra.mxu0 %v1743
        %v1745 = vand.u32 %v1096, 4294901760
        %v1746 = vsub.f32 %v1096, %v1745
        %v1747 = vand.u32 %v1746, 4294901760
        %v1748 = vsub.f32 %v1746, %v1747
        %v1749 = vand.u32 %v1748, 4294901760
        %1750 = vmatpush.msra.mxu0 %v1749
        %v1751 = vand.u32 %v1092, 4294901760
        %v1752 = vsub.f32 %v1092, %v1751
        %v1753 = vand.u32 %v1752, 4294901760
        %v1754 = vsub.f32 %v1752, %v1753
        %v1755 = vand.u32 %v1754, 4294901760
        %1756 = vmatpush.msra.mxu0 %v1755
        %v1757 = vand.u32 %v1088, 4294901760
        %v1758 = vsub.f32 %v1088, %v1757
        %v1759 = vand.u32 %v1758, 4294901760
        %v1760 = vsub.f32 %v1758, %v1759
        %v1761 = vand.u32 %v1760, 4294901760
        %1762 = vmatpush.msra.mxu0 %v1761
        %v1763 = vand.u32 %v1663, 4294901760
        %1764 = vmatmul.f32.gmra.mxu0 %v1763
        %v1765 = vpop.f32.mrf.mxu0
        %v1766 = vadd.f32 %v1701, %v1765
        %v1767 = vand.u32 %v1666, 4294901760
        %1768 = vmatmul.f32.gmra.mxu0 %v1767
        %v1769 = vpop.f32.mrf.mxu0
        %v1770 = vadd.f32 %v1709, %v1769
        %v1771 = vand.u32 %v1669, 4294901760
        %1772 = vmatmul.f32.gmra.mxu0 %v1771
        %v1773 = vpop.f32.mrf.mxu0
        %v1774 = vadd.f32 %v1717, %v1773
        %v1775 = vand.u32 %v1672, 4294901760
        %1776 = vmatmul.f32.gmra.mxu0 %v1775
        %v1777 = vpop.f32.mrf.mxu0
        %v1778 = vadd.f32 %v1725, %v1777
        %1779 = vdwg.mxu0
        %1780 = vmatpush.msra.mxu0 0.0
        %1781 = vmatpush.msra.mxu0 0.0
        %1782 = vmatpush.msra.mxu0 0.0
        %1783 = vmatpush.msra.mxu0 0.0
        %1784 = vmatpush.msra.mxu0 0.0
        %1785 = vmatpush.msra.mxu0 0.0
        %1786 = vmatpush.msra.mxu0 0.0
        %1787 = vmatpush.msra.mxu0 0.0
        %1788 = vmatpush.msra.mxu0 0.0
        %1789 = vmatpush.msra.mxu0 0.0
        %1790 = vmatpush.msra.mxu0 0.0
        %1791 = vmatpush.msra.mxu0 0.0
        %v1792 = vand.u32 %v1100, 4294901760
        %v1793 = vsub.f32 %v1100, %v1792
        %1794 = vmatpush.msra.mxu0 %v1793
        %v1795 = vand.u32 %v1096, 4294901760
        %v1796 = vsub.f32 %v1096, %v1795
        %1797 = vmatpush.msra.mxu0 %v1796
        %v1798 = vand.u32 %v1092, 4294901760
        %v1799 = vsub.f32 %v1092, %v1798
        %1800 = vmatpush.msra.mxu0 %v1799
        %v1801 = vand.u32 %v1088, 4294901760
        %v1802 = vsub.f32 %v1088, %v1801
        %1803 = vmatpush.msra.mxu0 %v1802
        %v1804 = vand.u32 %v1663, 4294901760
        %v1805 = vsub.f32 %v1663, %v1804
        %1806 = vmatmul.f32.gmra.mxu0 %v1805
        %v1807 = vpop.f32.mrf.mxu0
        %v1808 = vadd.f32 %v1766, %v1807
        %v1809 = vand.u32 %v1666, 4294901760
        %v1810 = vsub.f32 %v1666, %v1809
        %1811 = vmatmul.f32.gmra.mxu0 %v1810
        %v1812 = vpop.f32.mrf.mxu0
        %v1813 = vadd.f32 %v1770, %v1812
        %v1814 = vand.u32 %v1669, 4294901760
        %v1815 = vsub.f32 %v1669, %v1814
        %1816 = vmatmul.f32.gmra.mxu0 %v1815
        %v1817 = vpop.f32.mrf.mxu0
        %v1818 = vadd.f32 %v1774, %v1817
        %v1819 = vand.u32 %v1672, 4294901760
        %v1820 = vsub.f32 %v1672, %v1819
        %1821 = vmatmul.f32.gmra.mxu0 %v1820
        %v1822 = vpop.f32.mrf.mxu0
        %v1823 = vadd.f32 %v1778, %v1822
        %1824 = vdwg.mxu0
        %1825 = vmatpush.msra.mxu0 0.0
        %1826 = vmatpush.msra.mxu0 0.0
        %1827 = vmatpush.msra.mxu0 0.0
        %1828 = vmatpush.msra.mxu0 0.0
        %1829 = vmatpush.msra.mxu0 0.0
        %1830 = vmatpush.msra.mxu0 0.0
        %1831 = vmatpush.msra.mxu0 0.0
        %1832 = vmatpush.msra.mxu0 0.0
        %1833 = vmatpush.msra.mxu0 0.0
        %1834 = vmatpush.msra.mxu0 0.0
        %1835 = vmatpush.msra.mxu0 0.0
        %1836 = vmatpush.msra.mxu0 0.0
        %v1837 = vand.u32 %v1100, 4294901760
        %1838 = vmatpush.msra.mxu0 %v1837
        %v1839 = vand.u32 %v1096, 4294901760
        %1840 = vmatpush.msra.mxu0 %v1839
        %v1841 = vand.u32 %v1092, 4294901760
        %1842 = vmatpush.msra.mxu0 %v1841
        %v1843 = vand.u32 %v1088, 4294901760
        %1844 = vmatpush.msra.mxu0 %v1843
        %v1845 = vand.u32 %v1663, 4294901760
        %v1846 = vsub.f32 %v1663, %v1845
        %v1847 = vand.u32 %v1846, 4294901760
        %1848 = vmatmul.f32.gmra.mxu0 %v1847
        %v1849 = vpop.f32.mrf.mxu0
        %v1850 = vadd.f32 %v1808, %v1849
        %v1851 = vand.u32 %v1666, 4294901760
        %v1852 = vsub.f32 %v1666, %v1851
        %v1853 = vand.u32 %v1852, 4294901760
        %1854 = vmatmul.f32.gmra.mxu0 %v1853
        %v1855 = vpop.f32.mrf.mxu0
        %v1856 = vadd.f32 %v1813, %v1855
        %v1857 = vand.u32 %v1669, 4294901760
        %v1858 = vsub.f32 %v1669, %v1857
        %v1859 = vand.u32 %v1858, 4294901760
        %1860 = vmatmul.f32.gmra.mxu0 %v1859
        %v1861 = vpop.f32.mrf.mxu0
        %v1862 = vadd.f32 %v1818, %v1861
        %v1863 = vand.u32 %v1672, 4294901760
        %v1864 = vsub.f32 %v1672, %v1863
        %v1865 = vand.u32 %v1864, 4294901760
        %1866 = vmatmul.f32.gmra.mxu0 %v1865
        %v1867 = vpop.f32.mrf.mxu0
        %v1868 = vadd.f32 %v1823, %v1867
        %1869 = vdwg.mxu0
        %1870 = vmatpush.msra.mxu0 0.0
        %1871 = vmatpush.msra.mxu0 0.0
        %1872 = vmatpush.msra.mxu0 0.0
        %1873 = vmatpush.msra.mxu0 0.0
        %1874 = vmatpush.msra.mxu0 0.0
        %1875 = vmatpush.msra.mxu0 0.0
        %1876 = vmatpush.msra.mxu0 0.0
        %1877 = vmatpush.msra.mxu0 0.0
        %1878 = vmatpush.msra.mxu0 0.0
        %1879 = vmatpush.msra.mxu0 0.0
        %1880 = vmatpush.msra.mxu0 0.0
        %1881 = vmatpush.msra.mxu0 0.0
        %v1882 = vand.u32 %v1100, 4294901760
        %v1883 = vsub.f32 %v1100, %v1882
        %v1884 = vand.u32 %v1883, 4294901760
        %1885 = vmatpush.msra.mxu0 %v1884
        %v1886 = vand.u32 %v1096, 4294901760
        %v1887 = vsub.f32 %v1096, %v1886
        %v1888 = vand.u32 %v1887, 4294901760
        %1889 = vmatpush.msra.mxu0 %v1888
        %v1890 = vand.u32 %v1092, 4294901760
        %v1891 = vsub.f32 %v1092, %v1890
        %v1892 = vand.u32 %v1891, 4294901760
        %1893 = vmatpush.msra.mxu0 %v1892
        %v1894 = vand.u32 %v1088, 4294901760
        %v1895 = vsub.f32 %v1088, %v1894
        %v1896 = vand.u32 %v1895, 4294901760
        %1897 = vmatpush.msra.mxu0 %v1896
        %v1898 = vand.u32 %v1663, 4294901760
        %1899 = vmatmul.f32.gmra.mxu0 %v1898
        %v1900 = vpop.f32.mrf.mxu0
        %v1901 = vadd.f32 %v1850, %v1900
        %v1902 = vand.u32 %v1666, 4294901760
        %1903 = vmatmul.f32.gmra.mxu0 %v1902
        %v1904 = vpop.f32.mrf.mxu0
        %v1905 = vadd.f32 %v1856, %v1904
        %v1906 = vand.u32 %v1669, 4294901760
        %1907 = vmatmul.f32.gmra.mxu0 %v1906
        %v1908 = vpop.f32.mrf.mxu0
        %v1909 = vadd.f32 %v1862, %v1908
        %v1910 = vand.u32 %v1672, 4294901760
        %1911 = vmatmul.f32.gmra.mxu0 %v1910
        %v1912 = vpop.f32.mrf.mxu0
        %v1913 = vadd.f32 %v1868, %v1912
        %1914 = vdwg.mxu0
        %1915 = vmatpush.msra.mxu0 0.0
        %1916 = vmatpush.msra.mxu0 0.0
        %1917 = vmatpush.msra.mxu0 0.0
        %1918 = vmatpush.msra.mxu0 0.0
        %1919 = vmatpush.msra.mxu0 0.0
        %1920 = vmatpush.msra.mxu0 0.0
        %1921 = vmatpush.msra.mxu0 0.0
        %1922 = vmatpush.msra.mxu0 0.0
        %1923 = vmatpush.msra.mxu0 0.0
        %1924 = vmatpush.msra.mxu0 0.0
        %1925 = vmatpush.msra.mxu0 0.0
        %1926 = vmatpush.msra.mxu0 0.0
        %v1927 = vand.u32 %v1100, 4294901760
        %1928 = vmatpush.msra.mxu0 %v1927
        %v1929 = vand.u32 %v1096, 4294901760
        %1930 = vmatpush.msra.mxu0 %v1929
        %v1931 = vand.u32 %v1092, 4294901760
        %1932 = vmatpush.msra.mxu0 %v1931
        %v1933 = vand.u32 %v1088, 4294901760
        %1934 = vmatpush.msra.mxu0 %v1933
        %v1935 = vand.u32 %v1663, 4294901760
        %1936 = vmatmul.f32.gmra.mxu0 %v1935
        %v1937 = vpop.f32.mrf.mxu0
        %v1938 = vadd.f32 %v1901, %v1937
        %v1939 = vand.u32 %v1666, 4294901760
        %1940 = vmatmul.f32.gmra.mxu0 %v1939
        %v1941 = vpop.f32.mrf.mxu0
        %v1942 = vadd.f32 %v1905, %v1941
        %v1943 = vand.u32 %v1669, 4294901760
        %1944 = vmatmul.f32.gmra.mxu0 %v1943
        %v1945 = vpop.f32.mrf.mxu0
        %v1946 = vadd.f32 %v1909, %v1945
        %v1947 = vand.u32 %v1672, 4294901760
        %1948 = vmatmul.f32.gmra.mxu0 %v1947
        %v1949 = vpop.f32.mrf.mxu0
        %v1950 = vadd.f32 %v1913, %v1949
        %1951 = vdwg.mxu0
        %v1952 = vld [vmem:[#allocation8] sm:$0xff]
        %v1953 = vld [vmem:[#allocation8 + $0x8] sm:$0xff]
        %v1954 = vld [vmem:[#allocation8 + $0x10] sm:$0xff]
        %v1955 = vld [vmem:[#allocation8 + $0x18] sm:$0xff]
        %v1957 = vsel %vm811, %v1952, 0
        %v1960 = vsel %vm811, %v1953, 0
        %v1963 = vsel %vm811, %v1954, 0
        %v1966 = vsel %vm811, %v1955, 0
        %1968 = vmatpush.msra.mxu0 0.0
        %1969 = vmatpush.msra.mxu0 0.0
        %1970 = vmatpush.msra.mxu0 0.0
        %1971 = vmatpush.msra.mxu0 0.0
        %1972 = vmatpush.msra.mxu0 0.0
        %1973 = vmatpush.msra.mxu0 0.0
        %1974 = vmatpush.msra.mxu0 0.0
        %1975 = vmatpush.msra.mxu0 0.0
        %1976 = vmatpush.msra.mxu0 0.0
        %1977 = vmatpush.msra.mxu0 0.0
        %1978 = vmatpush.msra.mxu0 0.0
        %1979 = vmatpush.msra.mxu0 0.0
        %v1980 = vand.u32 %v1656, 4294901760
        %1981 = vmatpush.msra.mxu0 %v1980
        %v1982 = vand.u32 %v1652, 4294901760
        %1983 = vmatpush.msra.mxu0 %v1982
        %v1984 = vand.u32 %v1648, 4294901760
        %1985 = vmatpush.msra.mxu0 %v1984
        %v1986 = vand.u32 %v1644, 4294901760
        %1987 = vmatpush.msra.mxu0 %v1986
        %v1988 = vand.u32 %v1957, 4294901760
        %v1989 = vsub.f32 %v1957, %v1988
        %v1990 = vand.u32 %v1989, 4294901760
        %v1991 = vsub.f32 %v1989, %v1990
        %v1992 = vand.u32 %v1991, 4294901760
        %1993 = vmatmul.f32.gmra.mxu0 %v1992
        %v1994 = vpop.f32.mrf.mxu0
        %v1995 = vadd.f32 0.0, %v1994
        %v1996 = vand.u32 %v1960, 4294901760
        %v1997 = vsub.f32 %v1960, %v1996
        %v1998 = vand.u32 %v1997, 4294901760
        %v1999 = vsub.f32 %v1997, %v1998
        %v2000 = vand.u32 %v1999, 4294901760
        %2001 = vmatmul.f32.gmra.mxu0 %v2000
        %v2002 = vpop.f32.mrf.mxu0
        %v2003 = vadd.f32 0.0, %v2002
        %v2004 = vand.u32 %v1963, 4294901760
        %v2005 = vsub.f32 %v1963, %v2004
        %v2006 = vand.u32 %v2005, 4294901760
        %v2007 = vsub.f32 %v2005, %v2006
        %v2008 = vand.u32 %v2007, 4294901760
        %2009 = vmatmul.f32.gmra.mxu0 %v2008
        %v2010 = vpop.f32.mrf.mxu0
        %v2011 = vadd.f32 0.0, %v2010
        %v2012 = vand.u32 %v1966, 4294901760
        %v2013 = vsub.f32 %v1966, %v2012
        %v2014 = vand.u32 %v2013, 4294901760
        %v2015 = vsub.f32 %v2013, %v2014
        %v2016 = vand.u32 %v2015, 4294901760
        %2017 = vmatmul.f32.gmra.mxu0 %v2016
        %v2018 = vpop.f32.mrf.mxu0
        %v2019 = vadd.f32 0.0, %v2018
        %2020 = vdwg.mxu0
        %2021 = vmatpush.msra.mxu0 0.0
        %2022 = vmatpush.msra.mxu0 0.0
        %2023 = vmatpush.msra.mxu0 0.0
        %2024 = vmatpush.msra.mxu0 0.0
        %2025 = vmatpush.msra.mxu0 0.0
        %2026 = vmatpush.msra.mxu0 0.0
        %2027 = vmatpush.msra.mxu0 0.0
        %2028 = vmatpush.msra.mxu0 0.0
        %2029 = vmatpush.msra.mxu0 0.0
        %2030 = vmatpush.msra.mxu0 0.0
        %2031 = vmatpush.msra.mxu0 0.0
        %2032 = vmatpush.msra.mxu0 0.0
        %v2033 = vand.u32 %v1656, 4294901760
        %v2034 = vsub.f32 %v1656, %v2033
        %v2035 = vand.u32 %v2034, 4294901760
        %v2036 = vsub.f32 %v2034, %v2035
        %v2037 = vand.u32 %v2036, 4294901760
        %2038 = vmatpush.msra.mxu0 %v2037
        %v2039 = vand.u32 %v1652, 4294901760
        %v2040 = vsub.f32 %v1652, %v2039
        %v2041 = vand.u32 %v2040, 4294901760
        %v2042 = vsub.f32 %v2040, %v2041
        %v2043 = vand.u32 %v2042, 4294901760
        %2044 = vmatpush.msra.mxu0 %v2043
        %v2045 = vand.u32 %v1648, 4294901760
        %v2046 = vsub.f32 %v1648, %v2045
        %v2047 = vand.u32 %v2046, 4294901760
        %v2048 = vsub.f32 %v2046, %v2047
        %v2049 = vand.u32 %v2048, 4294901760
        %2050 = vmatpush.msra.mxu0 %v2049
        %v2051 = vand.u32 %v1644, 4294901760
        %v2052 = vsub.f32 %v1644, %v2051
        %v2053 = vand.u32 %v2052, 4294901760
        %v2054 = vsub.f32 %v2052, %v2053
        %v2055 = vand.u32 %v2054, 4294901760
        %2056 = vmatpush.msra.mxu0 %v2055
        %v2057 = vand.u32 %v1957, 4294901760
        %2058 = vmatmul.f32.gmra.mxu0 %v2057
        %v2059 = vpop.f32.mrf.mxu0
        %v2060 = vadd.f32 %v1995, %v2059
        %v2061 = vand.u32 %v1960, 4294901760
        %2062 = vmatmul.f32.gmra.mxu0 %v2061
        %v2063 = vpop.f32.mrf.mxu0
        %v2064 = vadd.f32 %v2003, %v2063
        %v2065 = vand.u32 %v1963, 4294901760
        %2066 = vmatmul.f32.gmra.mxu0 %v2065
        %v2067 = vpop.f32.mrf.mxu0
        %v2068 = vadd.f32 %v2011, %v2067
        %v2069 = vand.u32 %v1966, 4294901760
        %2070 = vmatmul.f32.gmra.mxu0 %v2069
        %v2071 = vpop.f32.mrf.mxu0
        %v2072 = vadd.f32 %v2019, %v2071
        %2073 = vdwg.mxu0
        %2074 = vmatpush.msra.mxu0 0.0
        %2075 = vmatpush.msra.mxu0 0.0
        %2076 = vmatpush.msra.mxu0 0.0
        %2077 = vmatpush.msra.mxu0 0.0
        %2078 = vmatpush.msra.mxu0 0.0
        %2079 = vmatpush.msra.mxu0 0.0
        %2080 = vmatpush.msra.mxu0 0.0
        %2081 = vmatpush.msra.mxu0 0.0
        %2082 = vmatpush.msra.mxu0 0.0
        %2083 = vmatpush.msra.mxu0 0.0
        %2084 = vmatpush.msra.mxu0 0.0
        %2085 = vmatpush.msra.mxu0 0.0
        %v2086 = vand.u32 %v1656, 4294901760
        %v2087 = vsub.f32 %v1656, %v2086
        %2088 = vmatpush.msra.mxu0 %v2087
        %v2089 = vand.u32 %v1652, 4294901760
        %v2090 = vsub.f32 %v1652, %v2089
        %2091 = vmatpush.msra.mxu0 %v2090
        %v2092 = vand.u32 %v1648, 4294901760
        %v2093 = vsub.f32 %v1648, %v2092
        %2094 = vmatpush.msra.mxu0 %v2093
        %v2095 = vand.u32 %v1644, 4294901760
        %v2096 = vsub.f32 %v1644, %v2095
        %2097 = vmatpush.msra.mxu0 %v2096
        %v2098 = vand.u32 %v1957, 4294901760
        %v2099 = vsub.f32 %v1957, %v2098
        %2100 = vmatmul.f32.gmra.mxu0 %v2099
        %v2101 = vpop.f32.mrf.mxu0
        %v2102 = vadd.f32 %v2060, %v2101
        %v2103 = vand.u32 %v1960, 4294901760
        %v2104 = vsub.f32 %v1960, %v2103
        %2105 = vmatmul.f32.gmra.mxu0 %v2104
        %v2106 = vpop.f32.mrf.mxu0
        %v2107 = vadd.f32 %v2064, %v2106
        %v2108 = vand.u32 %v1963, 4294901760
        %v2109 = vsub.f32 %v1963, %v2108
        %2110 = vmatmul.f32.gmra.mxu0 %v2109
        %v2111 = vpop.f32.mrf.mxu0
        %v2112 = vadd.f32 %v2068, %v2111
        %v2113 = vand.u32 %v1966, 4294901760
        %v2114 = vsub.f32 %v1966, %v2113
        %2115 = vmatmul.f32.gmra.mxu0 %v2114
        %v2116 = vpop.f32.mrf.mxu0
        %v2117 = vadd.f32 %v2072, %v2116
        %2118 = vdwg.mxu0
        %2119 = vmatpush.msra.mxu0 0.0
        %2120 = vmatpush.msra.mxu0 0.0
        %2121 = vmatpush.msra.mxu0 0.0
        %2122 = vmatpush.msra.mxu0 0.0
        %2123 = vmatpush.msra.mxu0 0.0
        %2124 = vmatpush.msra.mxu0 0.0
        %2125 = vmatpush.msra.mxu0 0.0
        %2126 = vmatpush.msra.mxu0 0.0
        %2127 = vmatpush.msra.mxu0 0.0
        %2128 = vmatpush.msra.mxu0 0.0
        %2129 = vmatpush.msra.mxu0 0.0
        %2130 = vmatpush.msra.mxu0 0.0
        %v2131 = vand.u32 %v1656, 4294901760
        %2132 = vmatpush.msra.mxu0 %v2131
        %v2133 = vand.u32 %v1652, 4294901760
        %2134 = vmatpush.msra.mxu0 %v2133
        %v2135 = vand.u32 %v1648, 4294901760
        %2136 = vmatpush.msra.mxu0 %v2135
        %v2137 = vand.u32 %v1644, 4294901760
        %2138 = vmatpush.msra.mxu0 %v2137
        %v2139 = vand.u32 %v1957, 4294901760
        %v2140 = vsub.f32 %v1957, %v2139
        %v2141 = vand.u32 %v2140, 4294901760
        %2142 = vmatmul.f32.gmra.mxu0 %v2141
        %v2143 = vpop.f32.mrf.mxu0
        %v2144 = vadd.f32 %v2102, %v2143
        %v2145 = vand.u32 %v1960, 4294901760
        %v2146 = vsub.f32 %v1960, %v2145
        %v2147 = vand.u32 %v2146, 4294901760
        %2148 = vmatmul.f32.gmra.mxu0 %v2147
        %v2149 = vpop.f32.mrf.mxu0
        %v2150 = vadd.f32 %v2107, %v2149
        %v2151 = vand.u32 %v1963, 4294901760
        %v2152 = vsub.f32 %v1963, %v2151
        %v2153 = vand.u32 %v2152, 4294901760
        %2154 = vmatmul.f32.gmra.mxu0 %v2153
        %v2155 = vpop.f32.mrf.mxu0
        %v2156 = vadd.f32 %v2112, %v2155
        %v2157 = vand.u32 %v1966, 4294901760
        %v2158 = vsub.f32 %v1966, %v2157
        %v2159 = vand.u32 %v2158, 4294901760
        %2160 = vmatmul.f32.gmra.mxu0 %v2159
        %v2161 = vpop.f32.mrf.mxu0
        %v2162 = vadd.f32 %v2117, %v2161
        %2163 = vdwg.mxu0
        %2164 = vmatpush.msra.mxu0 0.0
        %2165 = vmatpush.msra.mxu0 0.0
        %2166 = vmatpush.msra.mxu0 0.0
        %2167 = vmatpush.msra.mxu0 0.0
        %2168 = vmatpush.msra.mxu0 0.0
        %2169 = vmatpush.msra.mxu0 0.0
        %2170 = vmatpush.msra.mxu0 0.0
        %2171 = vmatpush.msra.mxu0 0.0
        %2172 = vmatpush.msra.mxu0 0.0
        %2173 = vmatpush.msra.mxu0 0.0
        %2174 = vmatpush.msra.mxu0 0.0
        %2175 = vmatpush.msra.mxu0 0.0
        %v2176 = vand.u32 %v1656, 4294901760
        %v2177 = vsub.f32 %v1656, %v2176
        %v2178 = vand.u32 %v2177, 4294901760
        %2179 = vmatpush.msra.mxu0 %v2178
        %v2180 = vand.u32 %v1652, 4294901760
        %v2181 = vsub.f32 %v1652, %v2180
        %v2182 = vand.u32 %v2181, 4294901760
        %2183 = vmatpush.msra.mxu0 %v2182
        %v2184 = vand.u32 %v1648, 4294901760
        %v2185 = vsub.f32 %v1648, %v2184
        %v2186 = vand.u32 %v2185, 4294901760
        %2187 = vmatpush.msra.mxu0 %v2186
        %v2188 = vand.u32 %v1644, 4294901760
        %v2189 = vsub.f32 %v1644, %v2188
        %v2190 = vand.u32 %v2189, 4294901760
        %2191 = vmatpush.msra.mxu0 %v2190
        %v2192 = vand.u32 %v1957, 4294901760
        %2193 = vmatmul.f32.gmra.mxu0 %v2192
        %v2194 = vpop.f32.mrf.mxu0
        %v2195 = vadd.f32 %v2144, %v2194
        %v2196 = vand.u32 %v1960, 4294901760
        %2197 = vmatmul.f32.gmra.mxu0 %v2196
        %v2198 = vpop.f32.mrf.mxu0
        %v2199 = vadd.f32 %v2150, %v2198
        %v2200 = vand.u32 %v1963, 4294901760
        %2201 = vmatmul.f32.gmra.mxu0 %v2200
        %v2202 = vpop.f32.mrf.mxu0
        %v2203 = vadd.f32 %v2156, %v2202
        %v2204 = vand.u32 %v1966, 4294901760
        %2205 = vmatmul.f32.gmra.mxu0 %v2204
        %v2206 = vpop.f32.mrf.mxu0
        %v2207 = vadd.f32 %v2162, %v2206
        %2208 = vdwg.mxu0
        %2209 = vmatpush.msra.mxu0 0.0
        %2210 = vmatpush.msra.mxu0 0.0
        %2211 = vmatpush.msra.mxu0 0.0
        %2212 = vmatpush.msra.mxu0 0.0
        %2213 = vmatpush.msra.mxu0 0.0
        %2214 = vmatpush.msra.mxu0 0.0
        %2215 = vmatpush.msra.mxu0 0.0
        %2216 = vmatpush.msra.mxu0 0.0
        %2217 = vmatpush.msra.mxu0 0.0
        %2218 = vmatpush.msra.mxu0 0.0
        %2219 = vmatpush.msra.mxu0 0.0
        %2220 = vmatpush.msra.mxu0 0.0
        %v2221 = vand.u32 %v1656, 4294901760
        %2222 = vmatpush.msra.mxu0 %v2221
        %v2223 = vand.u32 %v1652, 4294901760
        %2224 = vmatpush.msra.mxu0 %v2223
        %v2225 = vand.u32 %v1648, 4294901760
        %2226 = vmatpush.msra.mxu0 %v2225
        %v2227 = vand.u32 %v1644, 4294901760
        %2228 = vmatpush.msra.mxu0 %v2227
        %v2229 = vand.u32 %v1957, 4294901760
        %2230 = vmatmul.f32.gmra.mxu0 %v2229
        %v2231 = vpop.f32.mrf.mxu0
        %v2232 = vadd.f32 %v2195, %v2231
        %v2233 = vand.u32 %v1960, 4294901760
        %2234 = vmatmul.f32.gmra.mxu0 %v2233
        %v2235 = vpop.f32.mrf.mxu0
        %v2236 = vadd.f32 %v2199, %v2235
        %v2237 = vand.u32 %v1963, 4294901760
        %2238 = vmatmul.f32.gmra.mxu0 %v2237
        %v2239 = vpop.f32.mrf.mxu0
        %v2240 = vadd.f32 %v2203, %v2239
        %v2241 = vand.u32 %v1966, 4294901760
        %2242 = vmatmul.f32.gmra.mxu0 %v2241
        %v2243 = vpop.f32.mrf.mxu0
        %v2244 = vadd.f32 %v2207, %v2243
        %2245 = vdwg.mxu0
        %v2246 = vadd.f32 %v1938, %v2232
        %v2247 = vadd.f32 %v1942, %v2236
        %v2248 = vadd.f32 %v1946, %v2240
        %v2249 = vadd.f32 %v1950, %v2244
        %v2250 = vld [vmem:[#allocation10] sm:$0x1]
        %v2252 = vperm.slane %v2250, 0
        %v2254 = vadd.f32 %v2246, %v2252
        %v2255 = vadd.f32 %v2247, %v2252
        %v2256 = vadd.f32 %v2248, %v2252
        %v2257 = vadd.f32 %v2249, %v2252
        %v2258 = vmax.f32 %v2254, 0.0
        %v2259 = vmax.f32 %v2255, 0.0
        %v2260 = vmax.f32 %v2256, 0.0
        %v2261 = vmax.f32 %v2257, 0.0
        %v2262 = vld [vmem:[#allocation11] sm:$0xff]
        %v2263 = vld [vmem:[#allocation11 + $0x8] sm:$0xff]
        %v2264 = vld [vmem:[#allocation11 + $0x10] sm:$0xff]
        %v2265 = vld [vmem:[#allocation11 + $0x18] sm:$0xff]
        %v2267 = vsel %vm811, %v2262, 0
        %v2270 = vsel %vm811, %v2263, 0
        %v2273 = vsel %vm811, %v2264, 0
        %v2276 = vsel %vm811, %v2265, 0
        %2278 = vmatpush.msra.mxu0 0.0
        %2279 = vmatpush.msra.mxu0 0.0
        %2280 = vmatpush.msra.mxu0 0.0
        %2281 = vmatpush.msra.mxu0 0.0
        %2282 = vmatpush.msra.mxu0 0.0
        %2283 = vmatpush.msra.mxu0 0.0
        %2284 = vmatpush.msra.mxu0 0.0
        %2285 = vmatpush.msra.mxu0 0.0
        %2286 = vmatpush.msra.mxu0 0.0
        %2287 = vmatpush.msra.mxu0 0.0
        %2288 = vmatpush.msra.mxu0 0.0
        %2289 = vmatpush.msra.mxu0 0.0
        %v2290 = vand.u32 %v2261, 4294901760
        %2291 = vmatpush.msra.mxu0 %v2290
        %v2292 = vand.u32 %v2260, 4294901760
        %2293 = vmatpush.msra.mxu0 %v2292
        %v2294 = vand.u32 %v2259, 4294901760
        %2295 = vmatpush.msra.mxu0 %v2294
        %v2296 = vand.u32 %v2258, 4294901760
        %2297 = vmatpush.msra.mxu0 %v2296
        %v2298 = vand.u32 %v2267, 4294901760
        %v2299 = vsub.f32 %v2267, %v2298
        %v2300 = vand.u32 %v2299, 4294901760
        %v2301 = vsub.f32 %v2299, %v2300
        %v2302 = vand.u32 %v2301, 4294901760
        %2303 = vmatmul.f32.gmra.mxu0 %v2302
        %v2304 = vpop.f32.mrf.mxu0
        %v2305 = vadd.f32 0.0, %v2304
        %v2306 = vand.u32 %v2270, 4294901760
        %v2307 = vsub.f32 %v2270, %v2306
        %v2308 = vand.u32 %v2307, 4294901760
        %v2309 = vsub.f32 %v2307, %v2308
        %v2310 = vand.u32 %v2309, 4294901760
        %2311 = vmatmul.f32.gmra.mxu0 %v2310
        %v2312 = vpop.f32.mrf.mxu0
        %v2313 = vadd.f32 0.0, %v2312
        %v2314 = vand.u32 %v2273, 4294901760
        %v2315 = vsub.f32 %v2273, %v2314
        %v2316 = vand.u32 %v2315, 4294901760
        %v2317 = vsub.f32 %v2315, %v2316
        %v2318 = vand.u32 %v2317, 4294901760
        %2319 = vmatmul.f32.gmra.mxu0 %v2318
        %v2320 = vpop.f32.mrf.mxu0
        %v2321 = vadd.f32 0.0, %v2320
        %v2322 = vand.u32 %v2276, 4294901760
        %v2323 = vsub.f32 %v2276, %v2322
        %v2324 = vand.u32 %v2323, 4294901760
        %v2325 = vsub.f32 %v2323, %v2324
        %v2326 = vand.u32 %v2325, 4294901760
        %2327 = vmatmul.f32.gmra.mxu0 %v2326
        %v2328 = vpop.f32.mrf.mxu0
        %v2329 = vadd.f32 0.0, %v2328
        %2330 = vdwg.mxu0
        %2331 = vmatpush.msra.mxu0 0.0
        %2332 = vmatpush.msra.mxu0 0.0
        %2333 = vmatpush.msra.mxu0 0.0
        %2334 = vmatpush.msra.mxu0 0.0
        %2335 = vmatpush.msra.mxu0 0.0
        %2336 = vmatpush.msra.mxu0 0.0
        %2337 = vmatpush.msra.mxu0 0.0
        %2338 = vmatpush.msra.mxu0 0.0
        %2339 = vmatpush.msra.mxu0 0.0
        %2340 = vmatpush.msra.mxu0 0.0
        %2341 = vmatpush.msra.mxu0 0.0
        %2342 = vmatpush.msra.mxu0 0.0
        %v2343 = vand.u32 %v2261, 4294901760
        %v2344 = vsub.f32 %v2261, %v2343
        %v2345 = vand.u32 %v2344, 4294901760
        %v2346 = vsub.f32 %v2344, %v2345
        %v2347 = vand.u32 %v2346, 4294901760
        %2348 = vmatpush.msra.mxu0 %v2347
        %v2349 = vand.u32 %v2260, 4294901760
        %v2350 = vsub.f32 %v2260, %v2349
        %v2351 = vand.u32 %v2350, 4294901760
        %v2352 = vsub.f32 %v2350, %v2351
        %v2353 = vand.u32 %v2352, 4294901760
        %2354 = vmatpush.msra.mxu0 %v2353
        %v2355 = vand.u32 %v2259, 4294901760
        %v2356 = vsub.f32 %v2259, %v2355
        %v2357 = vand.u32 %v2356, 4294901760
        %v2358 = vsub.f32 %v2356, %v2357
        %v2359 = vand.u32 %v2358, 4294901760
        %2360 = vmatpush.msra.mxu0 %v2359
        %v2361 = vand.u32 %v2258, 4294901760
        %v2362 = vsub.f32 %v2258, %v2361
        %v2363 = vand.u32 %v2362, 4294901760
        %v2364 = vsub.f32 %v2362, %v2363
        %v2365 = vand.u32 %v2364, 4294901760
        %2366 = vmatpush.msra.mxu0 %v2365
        %v2367 = vand.u32 %v2267, 4294901760
        %2368 = vmatmul.f32.gmra.mxu0 %v2367
        %v2369 = vpop.f32.mrf.mxu0
        %v2370 = vadd.f32 %v2305, %v2369
        %v2371 = vand.u32 %v2270, 4294901760
        %2372 = vmatmul.f32.gmra.mxu0 %v2371
        %v2373 = vpop.f32.mrf.mxu0
        %v2374 = vadd.f32 %v2313, %v2373
        %v2375 = vand.u32 %v2273, 4294901760
        %2376 = vmatmul.f32.gmra.mxu0 %v2375
        %v2377 = vpop.f32.mrf.mxu0
        %v2378 = vadd.f32 %v2321, %v2377
        %v2379 = vand.u32 %v2276, 4294901760
        %2380 = vmatmul.f32.gmra.mxu0 %v2379
        %v2381 = vpop.f32.mrf.mxu0
        %v2382 = vadd.f32 %v2329, %v2381
        %2383 = vdwg.mxu0
        %2384 = vmatpush.msra.mxu0 0.0
        %2385 = vmatpush.msra.mxu0 0.0
        %2386 = vmatpush.msra.mxu0 0.0
        %2387 = vmatpush.msra.mxu0 0.0
        %2388 = vmatpush.msra.mxu0 0.0
        %2389 = vmatpush.msra.mxu0 0.0
        %2390 = vmatpush.msra.mxu0 0.0
        %2391 = vmatpush.msra.mxu0 0.0
        %2392 = vmatpush.msra.mxu0 0.0
        %2393 = vmatpush.msra.mxu0 0.0
        %2394 = vmatpush.msra.mxu0 0.0
        %2395 = vmatpush.msra.mxu0 0.0
        %v2396 = vand.u32 %v2261, 4294901760
        %v2397 = vsub.f32 %v2261, %v2396
        %2398 = vmatpush.msra.mxu0 %v2397
        %v2399 = vand.u32 %v2260, 4294901760
        %v2400 = vsub.f32 %v2260, %v2399
        %2401 = vmatpush.msra.mxu0 %v2400
        %v2402 = vand.u32 %v2259, 4294901760
        %v2403 = vsub.f32 %v2259, %v2402
        %2404 = vmatpush.msra.mxu0 %v2403
        %v2405 = vand.u32 %v2258, 4294901760
        %v2406 = vsub.f32 %v2258, %v2405
        %2407 = vmatpush.msra.mxu0 %v2406
        %v2408 = vand.u32 %v2267, 4294901760
        %v2409 = vsub.f32 %v2267, %v2408
        %2410 = vmatmul.f32.gmra.mxu0 %v2409
        %v2411 = vpop.f32.mrf.mxu0
        %v2412 = vadd.f32 %v2370, %v2411
        %v2413 = vand.u32 %v2270, 4294901760
        %v2414 = vsub.f32 %v2270, %v2413
        %2415 = vmatmul.f32.gmra.mxu0 %v2414
        %v2416 = vpop.f32.mrf.mxu0
        %v2417 = vadd.f32 %v2374, %v2416
        %v2418 = vand.u32 %v2273, 4294901760
        %v2419 = vsub.f32 %v2273, %v2418
        %2420 = vmatmul.f32.gmra.mxu0 %v2419
        %v2421 = vpop.f32.mrf.mxu0
        %v2422 = vadd.f32 %v2378, %v2421
        %v2423 = vand.u32 %v2276, 4294901760
        %v2424 = vsub.f32 %v2276, %v2423
        %2425 = vmatmul.f32.gmra.mxu0 %v2424
        %v2426 = vpop.f32.mrf.mxu0
        %v2427 = vadd.f32 %v2382, %v2426
        %2428 = vdwg.mxu0
        %2429 = vmatpush.msra.mxu0 0.0
        %2430 = vmatpush.msra.mxu0 0.0
        %2431 = vmatpush.msra.mxu0 0.0
        %2432 = vmatpush.msra.mxu0 0.0
        %2433 = vmatpush.msra.mxu0 0.0
        %2434 = vmatpush.msra.mxu0 0.0
        %2435 = vmatpush.msra.mxu0 0.0
        %2436 = vmatpush.msra.mxu0 0.0
        %2437 = vmatpush.msra.mxu0 0.0
        %2438 = vmatpush.msra.mxu0 0.0
        %2439 = vmatpush.msra.mxu0 0.0
        %2440 = vmatpush.msra.mxu0 0.0
        %v2441 = vand.u32 %v2261, 4294901760
        %2442 = vmatpush.msra.mxu0 %v2441
        %v2443 = vand.u32 %v2260, 4294901760
        %2444 = vmatpush.msra.mxu0 %v2443
        %v2445 = vand.u32 %v2259, 4294901760
        %2446 = vmatpush.msra.mxu0 %v2445
        %v2447 = vand.u32 %v2258, 4294901760
        %2448 = vmatpush.msra.mxu0 %v2447
        %v2449 = vand.u32 %v2267, 4294901760
        %v2450 = vsub.f32 %v2267, %v2449
        %v2451 = vand.u32 %v2450, 4294901760
        %2452 = vmatmul.f32.gmra.mxu0 %v2451
        %v2453 = vpop.f32.mrf.mxu0
        %v2454 = vadd.f32 %v2412, %v2453
        %v2455 = vand.u32 %v2270, 4294901760
        %v2456 = vsub.f32 %v2270, %v2455
        %v2457 = vand.u32 %v2456, 4294901760
        %2458 = vmatmul.f32.gmra.mxu0 %v2457
        %v2459 = vpop.f32.mrf.mxu0
        %v2460 = vadd.f32 %v2417, %v2459
        %v2461 = vand.u32 %v2273, 4294901760
        %v2462 = vsub.f32 %v2273, %v2461
        %v2463 = vand.u32 %v2462, 4294901760
        %2464 = vmatmul.f32.gmra.mxu0 %v2463
        %v2465 = vpop.f32.mrf.mxu0
        %v2466 = vadd.f32 %v2422, %v2465
        %v2467 = vand.u32 %v2276, 4294901760
        %v2468 = vsub.f32 %v2276, %v2467
        %v2469 = vand.u32 %v2468, 4294901760
        %2470 = vmatmul.f32.gmra.mxu0 %v2469
        %v2471 = vpop.f32.mrf.mxu0
        %v2472 = vadd.f32 %v2427, %v2471
        %2473 = vdwg.mxu0
        %2474 = vmatpush.msra.mxu0 0.0
        %2475 = vmatpush.msra.mxu0 0.0
        %2476 = vmatpush.msra.mxu0 0.0
        %2477 = vmatpush.msra.mxu0 0.0
        %2478 = vmatpush.msra.mxu0 0.0
        %2479 = vmatpush.msra.mxu0 0.0
        %2480 = vmatpush.msra.mxu0 0.0
        %2481 = vmatpush.msra.mxu0 0.0
        %2482 = vmatpush.msra.mxu0 0.0
        %2483 = vmatpush.msra.mxu0 0.0
        %2484 = vmatpush.msra.mxu0 0.0
        %2485 = vmatpush.msra.mxu0 0.0
        %v2486 = vand.u32 %v2261, 4294901760
        %v2487 = vsub.f32 %v2261, %v2486
        %v2488 = vand.u32 %v2487, 4294901760
        %2489 = vmatpush.msra.mxu0 %v2488
        %v2490 = vand.u32 %v2260, 4294901760
        %v2491 = vsub.f32 %v2260, %v2490
        %v2492 = vand.u32 %v2491, 4294901760
        %2493 = vmatpush.msra.mxu0 %v2492
        %v2494 = vand.u32 %v2259, 4294901760
        %v2495 = vsub.f32 %v2259, %v2494
        %v2496 = vand.u32 %v2495, 4294901760
        %2497 = vmatpush.msra.mxu0 %v2496
        %v2498 = vand.u32 %v2258, 4294901760
        %v2499 = vsub.f32 %v2258, %v2498
        %v2500 = vand.u32 %v2499, 4294901760
        %2501 = vmatpush.msra.mxu0 %v2500
        %v2502 = vand.u32 %v2267, 4294901760
        %2503 = vmatmul.f32.gmra.mxu0 %v2502
        %v2504 = vpop.f32.mrf.mxu0
        %v2505 = vadd.f32 %v2454, %v2504
        %v2506 = vand.u32 %v2270, 4294901760
        %2507 = vmatmul.f32.gmra.mxu0 %v2506
        %v2508 = vpop.f32.mrf.mxu0
        %v2509 = vadd.f32 %v2460, %v2508
        %v2510 = vand.u32 %v2273, 4294901760
        %2511 = vmatmul.f32.gmra.mxu0 %v2510
        %v2512 = vpop.f32.mrf.mxu0
        %v2513 = vadd.f32 %v2466, %v2512
        %v2514 = vand.u32 %v2276, 4294901760
        %2515 = vmatmul.f32.gmra.mxu0 %v2514
        %v2516 = vpop.f32.mrf.mxu0
        %v2517 = vadd.f32 %v2472, %v2516
        %2518 = vdwg.mxu0
        %2519 = vmatpush.msra.mxu0 0.0
        %2520 = vmatpush.msra.mxu0 0.0
        %2521 = vmatpush.msra.mxu0 0.0
        %2522 = vmatpush.msra.mxu0 0.0
        %2523 = vmatpush.msra.mxu0 0.0
        %2524 = vmatpush.msra.mxu0 0.0
        %2525 = vmatpush.msra.mxu0 0.0
        %2526 = vmatpush.msra.mxu0 0.0
        %2527 = vmatpush.msra.mxu0 0.0
        %2528 = vmatpush.msra.mxu0 0.0
        %2529 = vmatpush.msra.mxu0 0.0
        %2530 = vmatpush.msra.mxu0 0.0
        %v2531 = vand.u32 %v2261, 4294901760
        %2532 = vmatpush.msra.mxu0 %v2531
        %v2533 = vand.u32 %v2260, 4294901760
        %2534 = vmatpush.msra.mxu0 %v2533
        %v2535 = vand.u32 %v2259, 4294901760
        %2536 = vmatpush.msra.mxu0 %v2535
        %v2537 = vand.u32 %v2258, 4294901760
        %2538 = vmatpush.msra.mxu0 %v2537
        %v2539 = vand.u32 %v2267, 4294901760
        %2540 = vmatmul.f32.gmra.mxu0 %v2539
        %v2541 = vpop.f32.mrf.mxu0
        %v2542 = vadd.f32 %v2505, %v2541
        %v2543 = vand.u32 %v2270, 4294901760
        %2544 = vmatmul.f32.gmra.mxu0 %v2543
        %v2545 = vpop.f32.mrf.mxu0
        %v2546 = vadd.f32 %v2509, %v2545
        %v2547 = vand.u32 %v2273, 4294901760
        %2548 = vmatmul.f32.gmra.mxu0 %v2547
        %v2549 = vpop.f32.mrf.mxu0
        %v2550 = vadd.f32 %v2513, %v2549
        %v2551 = vand.u32 %v2276, 4294901760
        %2552 = vmatmul.f32.gmra.mxu0 %v2551
        %v2553 = vpop.f32.mrf.mxu0
        %v2554 = vadd.f32 %v2517, %v2553
        %2555 = vdwg.mxu0
        %v2556 = vld [vmem:[#allocation13] sm:$0xff]
        %v2557 = vld [vmem:[#allocation13 + $0x8] sm:$0xff]
        %v2558 = vld [vmem:[#allocation13 + $0x10] sm:$0xff]
        %v2559 = vld [vmem:[#allocation13 + $0x18] sm:$0xff]
        %v2560 = vld [vmem:[#allocation13 + $0x20] sm:$0xff]
        %v2561 = vld [vmem:[#allocation13 + $0x28] sm:$0xff]
        %v2562 = vld [vmem:[#allocation13 + $0x30] sm:$0xff]
        %v2563 = vld [vmem:[#allocation13 + $0x38] sm:$0xff]
        %v2564 = vld [vmem:[#allocation13 + $0x40] sm:$0xff]
        %v2565 = vld [vmem:[#allocation13 + $0x48] sm:$0xff]
        %v2566 = vld [vmem:[#allocation13 + $0x50] sm:$0xff]
        %v2567 = vld [vmem:[#allocation13 + $0x58] sm:$0xff]
        %v2568 = vld [vmem:[#allocation13 + $0x60] sm:$0xff]
        %v2569 = vld [vmem:[#allocation13 + $0x68] sm:$0xff]
        %v2570 = vld [vmem:[#allocation13 + $0x70] sm:$0xff]
        %v2571 = vld [vmem:[#allocation13 + $0x78] sm:$0xff]
        %v2572 = vand.u32 %v2571, 4294901760
        %2573 = vmatpush.msra.mxu0 %v2572
        %v2574 = vand.u32 %v2570, 4294901760
        %2575 = vmatpush.msra.mxu0 %v2574
        %v2576 = vand.u32 %v2569, 4294901760
        %2577 = vmatpush.msra.mxu0 %v2576
        %v2578 = vand.u32 %v2568, 4294901760
        %2579 = vmatpush.msra.mxu0 %v2578
        %v2580 = vand.u32 %v2567, 4294901760
        %2581 = vmatpush.msra.mxu0 %v2580
        %v2582 = vand.u32 %v2566, 4294901760
        %2583 = vmatpush.msra.mxu0 %v2582
        %v2584 = vand.u32 %v2565, 4294901760
        %2585 = vmatpush.msra.mxu0 %v2584
        %v2586 = vand.u32 %v2564, 4294901760
        %2587 = vmatpush.msra.mxu0 %v2586
        %v2588 = vand.u32 %v2563, 4294901760
        %2589 = vmatpush.msra.mxu0 %v2588
        %v2590 = vand.u32 %v2562, 4294901760
        %2591 = vmatpush.msra.mxu0 %v2590
        %v2592 = vand.u32 %v2561, 4294901760
        %2593 = vmatpush.msra.mxu0 %v2592
        %v2594 = vand.u32 %v2560, 4294901760
        %2595 = vmatpush.msra.mxu0 %v2594
        %v2596 = vand.u32 %v2559, 4294901760
        %2597 = vmatpush.msra.mxu0 %v2596
        %v2598 = vand.u32 %v2558, 4294901760
        %2599 = vmatpush.msra.mxu0 %v2598
        %v2600 = vand.u32 %v2557, 4294901760
        %2601 = vmatpush.msra.mxu0 %v2600
        %v2602 = vand.u32 %v2556, 4294901760
        %2603 = vmatpush.msra.mxu0 %v2602
        %v2604 = vand.u32 %v2542, 4294901760
        %v2605 = vsub.f32 %v2542, %v2604
        %v2606 = vand.u32 %v2605, 4294901760
        %v2607 = vsub.f32 %v2605, %v2606
        %v2608 = vand.u32 %v2607, 4294901760
        %2609 = vmatmul.f32.gmra.mxu0 %v2608
        %v2610 = vpop.f32.mrf.mxu0
        %v2611 = vadd.f32 0.0, %v2610
        %v2612 = vand.u32 %v2546, 4294901760
        %v2613 = vsub.f32 %v2546, %v2612
        %v2614 = vand.u32 %v2613, 4294901760
        %v2615 = vsub.f32 %v2613, %v2614
        %v2616 = vand.u32 %v2615, 4294901760
        %2617 = vmatmul.f32.gmra.mxu0 %v2616
        %v2618 = vpop.f32.mrf.mxu0
        %v2619 = vadd.f32 0.0, %v2618
        %v2620 = vand.u32 %v2550, 4294901760
        %v2621 = vsub.f32 %v2550, %v2620
        %v2622 = vand.u32 %v2621, 4294901760
        %v2623 = vsub.f32 %v2621, %v2622
        %v2624 = vand.u32 %v2623, 4294901760
        %2625 = vmatmul.f32.gmra.mxu0 %v2624
        %v2626 = vpop.f32.mrf.mxu0
        %v2627 = vadd.f32 0.0, %v2626
        %v2628 = vand.u32 %v2554, 4294901760
        %v2629 = vsub.f32 %v2554, %v2628
        %v2630 = vand.u32 %v2629, 4294901760
        %v2631 = vsub.f32 %v2629, %v2630
        %v2632 = vand.u32 %v2631, 4294901760
        %2633 = vmatmul.f32.gmra.mxu0 %v2632
        %v2634 = vpop.f32.mrf.mxu0
        %v2635 = vadd.f32 0.0, %v2634
        %2636 = vdwg.mxu0
        %v2637 = vand.u32 %v2571, 4294901760
        %v2638 = vsub.f32 %v2571, %v2637
        %v2639 = vand.u32 %v2638, 4294901760
        %v2640 = vsub.f32 %v2638, %v2639
        %v2641 = vand.u32 %v2640, 4294901760
        %2642 = vmatpush.msra.mxu0 %v2641
        %v2643 = vand.u32 %v2570, 4294901760
        %v2644 = vsub.f32 %v2570, %v2643
        %v2645 = vand.u32 %v2644, 4294901760
        %v2646 = vsub.f32 %v2644, %v2645
        %v2647 = vand.u32 %v2646, 4294901760
        %2648 = vmatpush.msra.mxu0 %v2647
        %v2649 = vand.u32 %v2569, 4294901760
        %v2650 = vsub.f32 %v2569, %v2649
        %v2651 = vand.u32 %v2650, 4294901760
        %v2652 = vsub.f32 %v2650, %v2651
        %v2653 = vand.u32 %v2652, 4294901760
        %2654 = vmatpush.msra.mxu0 %v2653
        %v2655 = vand.u32 %v2568, 4294901760
        %v2656 = vsub.f32 %v2568, %v2655
        %v2657 = vand.u32 %v2656, 4294901760
        %v2658 = vsub.f32 %v2656, %v2657
        %v2659 = vand.u32 %v2658, 4294901760
        %2660 = vmatpush.msra.mxu0 %v2659
        %v2661 = vand.u32 %v2567, 4294901760
        %v2662 = vsub.f32 %v2567, %v2661
        %v2663 = vand.u32 %v2662, 4294901760
        %v2664 = vsub.f32 %v2662, %v2663
        %v2665 = vand.u32 %v2664, 4294901760
        %2666 = vmatpush.msra.mxu0 %v2665
        %v2667 = vand.u32 %v2566, 4294901760
        %v2668 = vsub.f32 %v2566, %v2667
        %v2669 = vand.u32 %v2668, 4294901760
        %v2670 = vsub.f32 %v2668, %v2669
        %v2671 = vand.u32 %v2670, 4294901760
        %2672 = vmatpush.msra.mxu0 %v2671
        %v2673 = vand.u32 %v2565, 4294901760
        %v2674 = vsub.f32 %v2565, %v2673
        %v2675 = vand.u32 %v2674, 4294901760
        %v2676 = vsub.f32 %v2674, %v2675
        %v2677 = vand.u32 %v2676, 4294901760
        %2678 = vmatpush.msra.mxu0 %v2677
        %v2679 = vand.u32 %v2564, 4294901760
        %v2680 = vsub.f32 %v2564, %v2679
        %v2681 = vand.u32 %v2680, 4294901760
        %v2682 = vsub.f32 %v2680, %v2681
        %v2683 = vand.u32 %v2682, 4294901760
        %2684 = vmatpush.msra.mxu0 %v2683
        %v2685 = vand.u32 %v2563, 4294901760
        %v2686 = vsub.f32 %v2563, %v2685
        %v2687 = vand.u32 %v2686, 4294901760
        %v2688 = vsub.f32 %v2686, %v2687
        %v2689 = vand.u32 %v2688, 4294901760
        %2690 = vmatpush.msra.mxu0 %v2689
        %v2691 = vand.u32 %v2562, 4294901760
        %v2692 = vsub.f32 %v2562, %v2691
        %v2693 = vand.u32 %v2692, 4294901760
        %v2694 = vsub.f32 %v2692, %v2693
        %v2695 = vand.u32 %v2694, 4294901760
        %2696 = vmatpush.msra.mxu0 %v2695
        %v2697 = vand.u32 %v2561, 4294901760
        %v2698 = vsub.f32 %v2561, %v2697
        %v2699 = vand.u32 %v2698, 4294901760
        %v2700 = vsub.f32 %v2698, %v2699
        %v2701 = vand.u32 %v2700, 4294901760
        %2702 = vmatpush.msra.mxu0 %v2701
        %v2703 = vand.u32 %v2560, 4294901760
        %v2704 = vsub.f32 %v2560, %v2703
        %v2705 = vand.u32 %v2704, 4294901760
        %v2706 = vsub.f32 %v2704, %v2705
        %v2707 = vand.u32 %v2706, 4294901760
        %2708 = vmatpush.msra.mxu0 %v2707
        %v2709 = vand.u32 %v2559, 4294901760
        %v2710 = vsub.f32 %v2559, %v2709
        %v2711 = vand.u32 %v2710, 4294901760
        %v2712 = vsub.f32 %v2710, %v2711
        %v2713 = vand.u32 %v2712, 4294901760
        %2714 = vmatpush.msra.mxu0 %v2713
        %v2715 = vand.u32 %v2558, 4294901760
        %v2716 = vsub.f32 %v2558, %v2715
        %v2717 = vand.u32 %v2716, 4294901760
        %v2718 = vsub.f32 %v2716, %v2717
        %v2719 = vand.u32 %v2718, 4294901760
        %2720 = vmatpush.msra.mxu0 %v2719
        %v2721 = vand.u32 %v2557, 4294901760
        %v2722 = vsub.f32 %v2557, %v2721
        %v2723 = vand.u32 %v2722, 4294901760
        %v2724 = vsub.f32 %v2722, %v2723
        %v2725 = vand.u32 %v2724, 4294901760
        %2726 = vmatpush.msra.mxu0 %v2725
        %v2727 = vand.u32 %v2556, 4294901760
        %v2728 = vsub.f32 %v2556, %v2727
        %v2729 = vand.u32 %v2728, 4294901760
        %v2730 = vsub.f32 %v2728, %v2729
        %v2731 = vand.u32 %v2730, 4294901760
        %2732 = vmatpush.msra.mxu0 %v2731
        %v2733 = vand.u32 %v2542, 4294901760
        %2734 = vmatmul.f32.gmra.mxu0 %v2733
        %v2735 = vpop.f32.mrf.mxu0
        %v2736 = vadd.f32 %v2611, %v2735
        %v2737 = vand.u32 %v2546, 4294901760
        %2738 = vmatmul.f32.gmra.mxu0 %v2737
        %v2739 = vpop.f32.mrf.mxu0
        %v2740 = vadd.f32 %v2619, %v2739
        %v2741 = vand.u32 %v2550, 4294901760
        %2742 = vmatmul.f32.gmra.mxu0 %v2741
        %v2743 = vpop.f32.mrf.mxu0
        %v2744 = vadd.f32 %v2627, %v2743
        %v2745 = vand.u32 %v2554, 4294901760
        %2746 = vmatmul.f32.gmra.mxu0 %v2745
        %v2747 = vpop.f32.mrf.mxu0
        %v2748 = vadd.f32 %v2635, %v2747
        %2749 = vdwg.mxu0
        %v2750 = vand.u32 %v2571, 4294901760
        %v2751 = vsub.f32 %v2571, %v2750
        %2752 = vmatpush.msra.mxu0 %v2751
        %v2753 = vand.u32 %v2570, 4294901760
        %v2754 = vsub.f32 %v2570, %v2753
        %2755 = vmatpush.msra.mxu0 %v2754
        %v2756 = vand.u32 %v2569, 4294901760
        %v2757 = vsub.f32 %v2569, %v2756
        %2758 = vmatpush.msra.mxu0 %v2757
        %v2759 = vand.u32 %v2568, 4294901760
        %v2760 = vsub.f32 %v2568, %v2759
        %2761 = vmatpush.msra.mxu0 %v2760
        %v2762 = vand.u32 %v2567, 4294901760
        %v2763 = vsub.f32 %v2567, %v2762
        %2764 = vmatpush.msra.mxu0 %v2763
        %v2765 = vand.u32 %v2566, 4294901760
        %v2766 = vsub.f32 %v2566, %v2765
        %2767 = vmatpush.msra.mxu0 %v2766
        %v2768 = vand.u32 %v2565, 4294901760
        %v2769 = vsub.f32 %v2565, %v2768
        %2770 = vmatpush.msra.mxu0 %v2769
        %v2771 = vand.u32 %v2564, 4294901760
        %v2772 = vsub.f32 %v2564, %v2771
        %2773 = vmatpush.msra.mxu0 %v2772
        %v2774 = vand.u32 %v2563, 4294901760
        %v2775 = vsub.f32 %v2563, %v2774
        %2776 = vmatpush.msra.mxu0 %v2775
        %v2777 = vand.u32 %v2562, 4294901760
        %v2778 = vsub.f32 %v2562, %v2777
        %2779 = vmatpush.msra.mxu0 %v2778
        %v2780 = vand.u32 %v2561, 4294901760
        %v2781 = vsub.f32 %v2561, %v2780
        %2782 = vmatpush.msra.mxu0 %v2781
        %v2783 = vand.u32 %v2560, 4294901760
        %v2784 = vsub.f32 %v2560, %v2783
        %2785 = vmatpush.msra.mxu0 %v2784
        %v2786 = vand.u32 %v2559, 4294901760
        %v2787 = vsub.f32 %v2559, %v2786
        %2788 = vmatpush.msra.mxu0 %v2787
        %v2789 = vand.u32 %v2558, 4294901760
        %v2790 = vsub.f32 %v2558, %v2789
        %2791 = vmatpush.msra.mxu0 %v2790
        %v2792 = vand.u32 %v2557, 4294901760
        %v2793 = vsub.f32 %v2557, %v2792
        %2794 = vmatpush.msra.mxu0 %v2793
        %v2795 = vand.u32 %v2556, 4294901760
        %v2796 = vsub.f32 %v2556, %v2795
        %2797 = vmatpush.msra.mxu0 %v2796
        %v2798 = vand.u32 %v2542, 4294901760
        %v2799 = vsub.f32 %v2542, %v2798
        %2800 = vmatmul.f32.gmra.mxu0 %v2799
        %v2801 = vpop.f32.mrf.mxu0
        %v2802 = vadd.f32 %v2736, %v2801
        %v2803 = vand.u32 %v2546, 4294901760
        %v2804 = vsub.f32 %v2546, %v2803
        %2805 = vmatmul.f32.gmra.mxu0 %v2804
        %v2806 = vpop.f32.mrf.mxu0
        %v2807 = vadd.f32 %v2740, %v2806
        %v2808 = vand.u32 %v2550, 4294901760
        %v2809 = vsub.f32 %v2550, %v2808
        %2810 = vmatmul.f32.gmra.mxu0 %v2809
        %v2811 = vpop.f32.mrf.mxu0
        %v2812 = vadd.f32 %v2744, %v2811
        %v2813 = vand.u32 %v2554, 4294901760
        %v2814 = vsub.f32 %v2554, %v2813
        %2815 = vmatmul.f32.gmra.mxu0 %v2814
        %v2816 = vpop.f32.mrf.mxu0
        %v2817 = vadd.f32 %v2748, %v2816
        %2818 = vdwg.mxu0
        %v2819 = vand.u32 %v2571, 4294901760
        %2820 = vmatpush.msra.mxu0 %v2819
        %v2821 = vand.u32 %v2570, 4294901760
        %2822 = vmatpush.msra.mxu0 %v2821
        %v2823 = vand.u32 %v2569, 4294901760
        %2824 = vmatpush.msra.mxu0 %v2823
        %v2825 = vand.u32 %v2568, 4294901760
        %2826 = vmatpush.msra.mxu0 %v2825
        %v2827 = vand.u32 %v2567, 4294901760
        %2828 = vmatpush.msra.mxu0 %v2827
        %v2829 = vand.u32 %v2566, 4294901760
        %2830 = vmatpush.msra.mxu0 %v2829
        %v2831 = vand.u32 %v2565, 4294901760
        %2832 = vmatpush.msra.mxu0 %v2831
        %v2833 = vand.u32 %v2564, 4294901760
        %2834 = vmatpush.msra.mxu0 %v2833
        %v2835 = vand.u32 %v2563, 4294901760
        %2836 = vmatpush.msra.mxu0 %v2835
        %v2837 = vand.u32 %v2562, 4294901760
        %2838 = vmatpush.msra.mxu0 %v2837
        %v2839 = vand.u32 %v2561, 4294901760
        %2840 = vmatpush.msra.mxu0 %v2839
        %v2841 = vand.u32 %v2560, 4294901760
        %2842 = vmatpush.msra.mxu0 %v2841
        %v2843 = vand.u32 %v2559, 4294901760
        %2844 = vmatpush.msra.mxu0 %v2843
        %v2845 = vand.u32 %v2558, 4294901760
        %2846 = vmatpush.msra.mxu0 %v2845
        %v2847 = vand.u32 %v2557, 4294901760
        %2848 = vmatpush.msra.mxu0 %v2847
        %v2849 = vand.u32 %v2556, 4294901760
        %2850 = vmatpush.msra.mxu0 %v2849
        %v2851 = vand.u32 %v2542, 4294901760
        %v2852 = vsub.f32 %v2542, %v2851
        %v2853 = vand.u32 %v2852, 4294901760
        %2854 = vmatmul.f32.gmra.mxu0 %v2853
        %v2855 = vpop.f32.mrf.mxu0
        %v2856 = vadd.f32 %v2802, %v2855
        %v2857 = vand.u32 %v2546, 4294901760
        %v2858 = vsub.f32 %v2546, %v2857
        %v2859 = vand.u32 %v2858, 4294901760
        %2860 = vmatmul.f32.gmra.mxu0 %v2859
        %v2861 = vpop.f32.mrf.mxu0
        %v2862 = vadd.f32 %v2807, %v2861
        %v2863 = vand.u32 %v2550, 4294901760
        %v2864 = vsub.f32 %v2550, %v2863
        %v2865 = vand.u32 %v2864, 4294901760
        %2866 = vmatmul.f32.gmra.mxu0 %v2865
        %v2867 = vpop.f32.mrf.mxu0
        %v2868 = vadd.f32 %v2812, %v2867
        %v2869 = vand.u32 %v2554, 4294901760
        %v2870 = vsub.f32 %v2554, %v2869
        %v2871 = vand.u32 %v2870, 4294901760
        %2872 = vmatmul.f32.gmra.mxu0 %v2871
        %v2873 = vpop.f32.mrf.mxu0
        %v2874 = vadd.f32 %v2817, %v2873
        %2875 = vdwg.mxu0
        %v2876 = vand.u32 %v2571, 4294901760
        %v2877 = vsub.f32 %v2571, %v2876
        %v2878 = vand.u32 %v2877, 4294901760
        %2879 = vmatpush.msra.mxu0 %v2878
        %v2880 = vand.u32 %v2570, 4294901760
        %v2881 = vsub.f32 %v2570, %v2880
        %v2882 = vand.u32 %v2881, 4294901760
        %2883 = vmatpush.msra.mxu0 %v2882
        %v2884 = vand.u32 %v2569, 4294901760
        %v2885 = vsub.f32 %v2569, %v2884
        %v2886 = vand.u32 %v2885, 4294901760
        %2887 = vmatpush.msra.mxu0 %v2886
        %v2888 = vand.u32 %v2568, 4294901760
        %v2889 = vsub.f32 %v2568, %v2888
        %v2890 = vand.u32 %v2889, 4294901760
        %2891 = vmatpush.msra.mxu0 %v2890
        %v2892 = vand.u32 %v2567, 4294901760
        %v2893 = vsub.f32 %v2567, %v2892
        %v2894 = vand.u32 %v2893, 4294901760
        %2895 = vmatpush.msra.mxu0 %v2894
        %v2896 = vand.u32 %v2566, 4294901760
        %v2897 = vsub.f32 %v2566, %v2896
        %v2898 = vand.u32 %v2897, 4294901760
        %2899 = vmatpush.msra.mxu0 %v2898
        %v2900 = vand.u32 %v2565, 4294901760
        %v2901 = vsub.f32 %v2565, %v2900
        %v2902 = vand.u32 %v2901, 4294901760
        %2903 = vmatpush.msra.mxu0 %v2902
        %v2904 = vand.u32 %v2564, 4294901760
        %v2905 = vsub.f32 %v2564, %v2904
        %v2906 = vand.u32 %v2905, 4294901760
        %2907 = vmatpush.msra.mxu0 %v2906
        %v2908 = vand.u32 %v2563, 4294901760
        %v2909 = vsub.f32 %v2563, %v2908
        %v2910 = vand.u32 %v2909, 4294901760
        %2911 = vmatpush.msra.mxu0 %v2910
        %v2912 = vand.u32 %v2562, 4294901760
        %v2913 = vsub.f32 %v2562, %v2912
        %v2914 = vand.u32 %v2913, 4294901760
        %2915 = vmatpush.msra.mxu0 %v2914
        %v2916 = vand.u32 %v2561, 4294901760
        %v2917 = vsub.f32 %v2561, %v2916
        %v2918 = vand.u32 %v2917, 4294901760
        %2919 = vmatpush.msra.mxu0 %v2918
        %v2920 = vand.u32 %v2560, 4294901760
        %v2921 = vsub.f32 %v2560, %v2920
        %v2922 = vand.u32 %v2921, 4294901760
        %2923 = vmatpush.msra.mxu0 %v2922
        %v2924 = vand.u32 %v2559, 4294901760
        %v2925 = vsub.f32 %v2559, %v2924
        %v2926 = vand.u32 %v2925, 4294901760
        %2927 = vmatpush.msra.mxu0 %v2926
        %v2928 = vand.u32 %v2558, 4294901760
        %v2929 = vsub.f32 %v2558, %v2928
        %v2930 = vand.u32 %v2929, 4294901760
        %2931 = vmatpush.msra.mxu0 %v2930
        %v2932 = vand.u32 %v2557, 4294901760
        %v2933 = vsub.f32 %v2557, %v2932
        %v2934 = vand.u32 %v2933, 4294901760
        %2935 = vmatpush.msra.mxu0 %v2934
        %v2936 = vand.u32 %v2556, 4294901760
        %v2937 = vsub.f32 %v2556, %v2936
        %v2938 = vand.u32 %v2937, 4294901760
        %2939 = vmatpush.msra.mxu0 %v2938
        %v2940 = vand.u32 %v2542, 4294901760
        %2941 = vmatmul.f32.gmra.mxu0 %v2940
        %v2942 = vpop.f32.mrf.mxu0
        %v2943 = vadd.f32 %v2856, %v2942
        %v2944 = vand.u32 %v2546, 4294901760
        %2945 = vmatmul.f32.gmra.mxu0 %v2944
        %v2946 = vpop.f32.mrf.mxu0
        %v2947 = vadd.f32 %v2862, %v2946
        %v2948 = vand.u32 %v2550, 4294901760
        %2949 = vmatmul.f32.gmra.mxu0 %v2948
        %v2950 = vpop.f32.mrf.mxu0
        %v2951 = vadd.f32 %v2868, %v2950
        %v2952 = vand.u32 %v2554, 4294901760
        %2953 = vmatmul.f32.gmra.mxu0 %v2952
        %v2954 = vpop.f32.mrf.mxu0
        %v2955 = vadd.f32 %v2874, %v2954
        %2956 = vdwg.mxu0
        %v2957 = vand.u32 %v2571, 4294901760
        %2958 = vmatpush.msra.mxu0 %v2957
        %v2959 = vand.u32 %v2570, 4294901760
        %2960 = vmatpush.msra.mxu0 %v2959
        %v2961 = vand.u32 %v2569, 4294901760
        %2962 = vmatpush.msra.mxu0 %v2961
        %v2963 = vand.u32 %v2568, 4294901760
        %2964 = vmatpush.msra.mxu0 %v2963
        %v2965 = vand.u32 %v2567, 4294901760
        %2966 = vmatpush.msra.mxu0 %v2965
        %v2967 = vand.u32 %v2566, 4294901760
        %2968 = vmatpush.msra.mxu0 %v2967
        %v2969 = vand.u32 %v2565, 4294901760
        %2970 = vmatpush.msra.mxu0 %v2969
        %v2971 = vand.u32 %v2564, 4294901760
        %2972 = vmatpush.msra.mxu0 %v2971
        %v2973 = vand.u32 %v2563, 4294901760
        %2974 = vmatpush.msra.mxu0 %v2973
        %v2975 = vand.u32 %v2562, 4294901760
        %2976 = vmatpush.msra.mxu0 %v2975
        %v2977 = vand.u32 %v2561, 4294901760
        %2978 = vmatpush.msra.mxu0 %v2977
        %v2979 = vand.u32 %v2560, 4294901760
        %2980 = vmatpush.msra.mxu0 %v2979
        %v2981 = vand.u32 %v2559, 4294901760
        %2982 = vmatpush.msra.mxu0 %v2981
        %v2983 = vand.u32 %v2558, 4294901760
        %2984 = vmatpush.msra.mxu0 %v2983
        %v2985 = vand.u32 %v2557, 4294901760
        %2986 = vmatpush.msra.mxu0 %v2985
        %v2987 = vand.u32 %v2556, 4294901760
        %2988 = vmatpush.msra.mxu0 %v2987
        %v2989 = vand.u32 %v2542, 4294901760
        %2990 = vmatmul.f32.gmra.mxu0 %v2989
        %v2991 = vpop.f32.mrf.mxu0
        %v2992 = vadd.f32 %v2943, %v2991
        %v2993 = vand.u32 %v2546, 4294901760
        %2994 = vmatmul.f32.gmra.mxu0 %v2993
        %v2995 = vpop.f32.mrf.mxu0
        %v2996 = vadd.f32 %v2947, %v2995
        %v2997 = vand.u32 %v2550, 4294901760
        %2998 = vmatmul.f32.gmra.mxu0 %v2997
        %v2999 = vpop.f32.mrf.mxu0
        %v3000 = vadd.f32 %v2951, %v2999
        %v3001 = vand.u32 %v2554, 4294901760
        %3002 = vmatmul.f32.gmra.mxu0 %v3001
        %v3003 = vpop.f32.mrf.mxu0
        %v3004 = vadd.f32 %v2955, %v3003
        %3005 = vdwg.mxu0
        %3008 = vrot.lane.b32.xlu0 %v2992, 64
        %v3009 = vpop.permute.xlu0 %3008
        %3010 = vrot.lane.b32.xlu0 %v2996, 64
        %v3011 = vpop.permute.xlu0 %3010
        %v3014 = vmax.f32 %v2992, %v3009
        %v3015 = vmax.f32 %v2996, %v3011
        %3018 = vrot.lane.b32.xlu0 %v3000, 64
        %v3019 = vpop.permute.xlu0 %3018
        %3020 = vrot.lane.b32.xlu0 %v3004, 64
        %v3021 = vpop.permute.xlu0 %3020
        %v3024 = vmax.f32 %v3000, %v3019
        %v3025 = vmax.f32 %v3004, %v3021
        %v3026 = vmax.f32 %v3014, %v3024
        %v3027 = vmax.f32 %v3015, %v3025
        %v3028 = vld [vmem:[#allocation14] sm:$0xff]
        %v3029 = vld [vmem:[#allocation14 + $0x8] sm:$0xff]
        %v3030 = vld [vmem:[#allocation14 + $0x10] sm:$0xff]
        %v3031 = vld [vmem:[#allocation14 + $0x18] sm:$0xff]
        %v3032 = vld [vmem:[#allocation14 + $0x20] sm:$0xff]
        %v3033 = vld [vmem:[#allocation14 + $0x28] sm:$0xff]
        %v3034 = vld [vmem:[#allocation14 + $0x30] sm:$0xff]
        %v3035 = vld [vmem:[#allocation14 + $0x38] sm:$0xff]
        %v3036 = vld [vmem:[#allocation14 + $0x40] sm:$0xff]
        %v3037 = vld [vmem:[#allocation14 + $0x48] sm:$0xff]
        %v3038 = vld [vmem:[#allocation14 + $0x50] sm:$0xff]
        %v3039 = vld [vmem:[#allocation14 + $0x58] sm:$0xff]
        %v3040 = vld [vmem:[#allocation14 + $0x60] sm:$0xff]
        %v3041 = vld [vmem:[#allocation14 + $0x68] sm:$0xff]
        %v3042 = vld [vmem:[#allocation14 + $0x70] sm:$0xff]
        %v3043 = vld [vmem:[#allocation14 + $0x78] sm:$0xff]
        %v3044 = vld [vmem:[#allocation14 + $0x80] sm:$0xff]
        %v3045 = vld [vmem:[#allocation14 + $0x88] sm:$0xff]
        %v3046 = vld [vmem:[#allocation14 + $0x90] sm:$0xff]
        %v3047 = vld [vmem:[#allocation14 + $0x98] sm:$0xff]
        %v3048 = vld [vmem:[#allocation14 + $0xa0] sm:$0xff]
        %v3049 = vld [vmem:[#allocation14 + $0xa8] sm:$0xff]
        %v3050 = vld [vmem:[#allocation14 + $0xb0] sm:$0xff]
        %v3051 = vld [vmem:[#allocation14 + $0xb8] sm:$0xff]
        %vm3052 = vcmask 523264
        %v3054 = vsel %vm3052, %v3026, 0
        %v3057 = vsel %vm3052, %v3027, 0
        %3059 = vmatpush.msra.mxu0 0.0
        %3060 = vmatpush.msra.mxu0 0.0
        %3061 = vmatpush.msra.mxu0 0.0
        %3062 = vmatpush.msra.mxu0 0.0
        %3063 = vmatpush.msra.mxu0 0.0
        %3064 = vmatpush.msra.mxu0 0.0
        %3065 = vmatpush.msra.mxu0 0.0
        %3066 = vmatpush.msra.mxu0 0.0
        %v3067 = vand.u32 %v3049, 4294901760
        %3068 = vmatpush.msra.mxu0 %v3067
        %v3069 = vand.u32 %v3046, 4294901760
        %3070 = vmatpush.msra.mxu0 %v3069
        %v3071 = vand.u32 %v3043, 4294901760
        %3072 = vmatpush.msra.mxu0 %v3071
        %v3073 = vand.u32 %v3040, 4294901760
        %3074 = vmatpush.msra.mxu0 %v3073
        %v3075 = vand.u32 %v3037, 4294901760
        %3076 = vmatpush.msra.mxu0 %v3075
        %v3077 = vand.u32 %v3034, 4294901760
        %3078 = vmatpush.msra.mxu0 %v3077
        %v3079 = vand.u32 %v3031, 4294901760
        %3080 = vmatpush.msra.mxu0 %v3079
        %v3081 = vand.u32 %v3028, 4294901760
        %3082 = vmatpush.msra.mxu0 %v3081
        %v3083 = vand.u32 %v3054, 4294901760
        %v3084 = vsub.f32 %v3054, %v3083
        %v3085 = vand.u32 %v3084, 4294901760
        %v3086 = vsub.f32 %v3084, %v3085
        %v3087 = vand.u32 %v3086, 4294901760
        %3088 = vmatmul.f32.gmra.mxu0 %v3087
        %v3089 = vpop.f32.mrf.mxu0
        %v3090 = vadd.f32 0.0, %v3089
        %v3091 = vand.u32 %v3057, 4294901760
        %v3092 = vsub.f32 %v3057, %v3091
        %v3093 = vand.u32 %v3092, 4294901760
        %v3094 = vsub.f32 %v3092, %v3093
        %v3095 = vand.u32 %v3094, 4294901760
        %3096 = vmatmul.f32.gmra.mxu0 %v3095
        %v3097 = vpop.f32.mrf.mxu0
        %v3098 = vadd.f32 0.0, %v3097
        %3099 = vdwg.mxu0
        %3100 = vmatpush.msra.mxu0 0.0
        %3101 = vmatpush.msra.mxu0 0.0
        %3102 = vmatpush.msra.mxu0 0.0
        %3103 = vmatpush.msra.mxu0 0.0
        %3104 = vmatpush.msra.mxu0 0.0
        %3105 = vmatpush.msra.mxu0 0.0
        %3106 = vmatpush.msra.mxu0 0.0
        %3107 = vmatpush.msra.mxu0 0.0
        %v3108 = vand.u32 %v3049, 4294901760
        %v3109 = vsub.f32 %v3049, %v3108
        %v3110 = vand.u32 %v3109, 4294901760
        %v3111 = vsub.f32 %v3109, %v3110
        %v3112 = vand.u32 %v3111, 4294901760
        %3113 = vmatpush.msra.mxu0 %v3112
        %v3114 = vand.u32 %v3046, 4294901760
        %v3115 = vsub.f32 %v3046, %v3114
        %v3116 = vand.u32 %v3115, 4294901760
        %v3117 = vsub.f32 %v3115, %v3116
        %v3118 = vand.u32 %v3117, 4294901760
        %3119 = vmatpush.msra.mxu0 %v3118
        %v3120 = vand.u32 %v3043, 4294901760
        %v3121 = vsub.f32 %v3043, %v3120
        %v3122 = vand.u32 %v3121, 4294901760
        %v3123 = vsub.f32 %v3121, %v3122
        %v3124 = vand.u32 %v3123, 4294901760
        %3125 = vmatpush.msra.mxu0 %v3124
        %v3126 = vand.u32 %v3040, 4294901760
        %v3127 = vsub.f32 %v3040, %v3126
        %v3128 = vand.u32 %v3127, 4294901760
        %v3129 = vsub.f32 %v3127, %v3128
        %v3130 = vand.u32 %v3129, 4294901760
        %3131 = vmatpush.msra.mxu0 %v3130
        %v3132 = vand.u32 %v3037, 4294901760
        %v3133 = vsub.f32 %v3037, %v3132
        %v3134 = vand.u32 %v3133, 4294901760
        %v3135 = vsub.f32 %v3133, %v3134
        %v3136 = vand.u32 %v3135, 4294901760
        %3137 = vmatpush.msra.mxu0 %v3136
        %v3138 = vand.u32 %v3034, 4294901760
        %v3139 = vsub.f32 %v3034, %v3138
        %v3140 = vand.u32 %v3139, 4294901760
        %v3141 = vsub.f32 %v3139, %v3140
        %v3142 = vand.u32 %v3141, 4294901760
        %3143 = vmatpush.msra.mxu0 %v3142
        %v3144 = vand.u32 %v3031, 4294901760
        %v3145 = vsub.f32 %v3031, %v3144
        %v3146 = vand.u32 %v3145, 4294901760
        %v3147 = vsub.f32 %v3145, %v3146
        %v3148 = vand.u32 %v3147, 4294901760
        %3149 = vmatpush.msra.mxu0 %v3148
        %v3150 = vand.u32 %v3028, 4294901760
        %v3151 = vsub.f32 %v3028, %v3150
        %v3152 = vand.u32 %v3151, 4294901760
        %v3153 = vsub.f32 %v3151, %v3152
        %v3154 = vand.u32 %v3153, 4294901760
        %3155 = vmatpush.msra.mxu0 %v3154
        %v3156 = vand.u32 %v3054, 4294901760
        %3157 = vmatmul.f32.gmra.mxu0 %v3156
        %v3158 = vpop.f32.mrf.mxu0
        %v3159 = vadd.f32 %v3090, %v3158
        %v3160 = vand.u32 %v3057, 4294901760
        %3161 = vmatmul.f32.gmra.mxu0 %v3160
        %v3162 = vpop.f32.mrf.mxu0
        %v3163 = vadd.f32 %v3098, %v3162
        %3164 = vdwg.mxu0
        %3165 = vmatpush.msra.mxu0 0.0
        %3166 = vmatpush.msra.mxu0 0.0
        %3167 = vmatpush.msra.mxu0 0.0
        %3168 = vmatpush.msra.mxu0 0.0
        %3169 = vmatpush.msra.mxu0 0.0
        %3170 = vmatpush.msra.mxu0 0.0
        %3171 = vmatpush.msra.mxu0 0.0
        %3172 = vmatpush.msra.mxu0 0.0
        %v3173 = vand.u32 %v3049, 4294901760
        %v3174 = vsub.f32 %v3049, %v3173
        %3175 = vmatpush.msra.mxu0 %v3174
        %v3176 = vand.u32 %v3046, 4294901760
        %v3177 = vsub.f32 %v3046, %v3176
        %3178 = vmatpush.msra.mxu0 %v3177
        %v3179 = vand.u32 %v3043, 4294901760
        %v3180 = vsub.f32 %v3043, %v3179
        %3181 = vmatpush.msra.mxu0 %v3180
        %v3182 = vand.u32 %v3040, 4294901760
        %v3183 = vsub.f32 %v3040, %v3182
        %3184 = vmatpush.msra.mxu0 %v3183
        %v3185 = vand.u32 %v3037, 4294901760
        %v3186 = vsub.f32 %v3037, %v3185
        %3187 = vmatpush.msra.mxu0 %v3186
        %v3188 = vand.u32 %v3034, 4294901760
        %v3189 = vsub.f32 %v3034, %v3188
        %3190 = vmatpush.msra.mxu0 %v3189
        %v3191 = vand.u32 %v3031, 4294901760
        %v3192 = vsub.f32 %v3031, %v3191
        %3193 = vmatpush.msra.mxu0 %v3192
        %v3194 = vand.u32 %v3028, 4294901760
        %v3195 = vsub.f32 %v3028, %v3194
        %3196 = vmatpush.msra.mxu0 %v3195
        %v3197 = vand.u32 %v3054, 4294901760
        %v3198 = vsub.f32 %v3054, %v3197
        %3199 = vmatmul.f32.gmra.mxu0 %v3198
        %v3200 = vpop.f32.mrf.mxu0
        %v3201 = vadd.f32 %v3159, %v3200
        %v3202 = vand.u32 %v3057, 4294901760
        %v3203 = vsub.f32 %v3057, %v3202
        %3204 = vmatmul.f32.gmra.mxu0 %v3203
        %v3205 = vpop.f32.mrf.mxu0
        %v3206 = vadd.f32 %v3163, %v3205
        %3207 = vdwg.mxu0
        %3208 = vmatpush.msra.mxu0 0.0
        %3209 = vmatpush.msra.mxu0 0.0
        %3210 = vmatpush.msra.mxu0 0.0
        %3211 = vmatpush.msra.mxu0 0.0
        %3212 = vmatpush.msra.mxu0 0.0
        %3213 = vmatpush.msra.mxu0 0.0
        %3214 = vmatpush.msra.mxu0 0.0
        %3215 = vmatpush.msra.mxu0 0.0
        %v3216 = vand.u32 %v3049, 4294901760
        %3217 = vmatpush.msra.mxu0 %v3216
        %v3218 = vand.u32 %v3046, 4294901760
        %3219 = vmatpush.msra.mxu0 %v3218
        %v3220 = vand.u32 %v3043, 4294901760
        %3221 = vmatpush.msra.mxu0 %v3220
        %v3222 = vand.u32 %v3040, 4294901760
        %3223 = vmatpush.msra.mxu0 %v3222
        %v3224 = vand.u32 %v3037, 4294901760
        %3225 = vmatpush.msra.mxu0 %v3224
        %v3226 = vand.u32 %v3034, 4294901760
        %3227 = vmatpush.msra.mxu0 %v3226
        %v3228 = vand.u32 %v3031, 4294901760
        %3229 = vmatpush.msra.mxu0 %v3228
        %v3230 = vand.u32 %v3028, 4294901760
        %3231 = vmatpush.msra.mxu0 %v3230
        %v3232 = vand.u32 %v3054, 4294901760
        %v3233 = vsub.f32 %v3054, %v3232
        %v3234 = vand.u32 %v3233, 4294901760
        %3235 = vmatmul.f32.gmra.mxu0 %v3234
        %v3236 = vpop.f32.mrf.mxu0
        %v3237 = vadd.f32 %v3201, %v3236
        %v3238 = vand.u32 %v3057, 4294901760
        %v3239 = vsub.f32 %v3057, %v3238
        %v3240 = vand.u32 %v3239, 4294901760
        %3241 = vmatmul.f32.gmra.mxu0 %v3240
        %v3242 = vpop.f32.mrf.mxu0
        %v3243 = vadd.f32 %v3206, %v3242
        %3244 = vdwg.mxu0
        %3245 = vmatpush.msra.mxu0 0.0
        %3246 = vmatpush.msra.mxu0 0.0
        %3247 = vmatpush.msra.mxu0 0.0
        %3248 = vmatpush.msra.mxu0 0.0
        %3249 = vmatpush.msra.mxu0 0.0
        %3250 = vmatpush.msra.mxu0 0.0
        %3251 = vmatpush.msra.mxu0 0.0
        %3252 = vmatpush.msra.mxu0 0.0
        %v3253 = vand.u32 %v3049, 4294901760
        %v3254 = vsub.f32 %v3049, %v3253
        %v3255 = vand.u32 %v3254, 4294901760
        %3256 = vmatpush.msra.mxu0 %v3255
        %v3257 = vand.u32 %v3046, 4294901760
        %v3258 = vsub.f32 %v3046, %v3257
        %v3259 = vand.u32 %v3258, 4294901760
        %3260 = vmatpush.msra.mxu0 %v3259
        %v3261 = vand.u32 %v3043, 4294901760
        %v3262 = vsub.f32 %v3043, %v3261
        %v3263 = vand.u32 %v3262, 4294901760
        %3264 = vmatpush.msra.mxu0 %v3263
        %v3265 = vand.u32 %v3040, 4294901760
        %v3266 = vsub.f32 %v3040, %v3265
        %v3267 = vand.u32 %v3266, 4294901760
        %3268 = vmatpush.msra.mxu0 %v3267
        %v3269 = vand.u32 %v3037, 4294901760
        %v3270 = vsub.f32 %v3037, %v3269
        %v3271 = vand.u32 %v3270, 4294901760
        %3272 = vmatpush.msra.mxu0 %v3271
        %v3273 = vand.u32 %v3034, 4294901760
        %v3274 = vsub.f32 %v3034, %v3273
        %v3275 = vand.u32 %v3274, 4294901760
        %3276 = vmatpush.msra.mxu0 %v3275
        %v3277 = vand.u32 %v3031, 4294901760
        %v3278 = vsub.f32 %v3031, %v3277
        %v3279 = vand.u32 %v3278, 4294901760
        %3280 = vmatpush.msra.mxu0 %v3279
        %v3281 = vand.u32 %v3028, 4294901760
        %v3282 = vsub.f32 %v3028, %v3281
        %v3283 = vand.u32 %v3282, 4294901760
        %3284 = vmatpush.msra.mxu0 %v3283
        %v3285 = vand.u32 %v3054, 4294901760
        %3286 = vmatmul.f32.gmra.mxu0 %v3285
        %v3287 = vpop.f32.mrf.mxu0
        %v3288 = vadd.f32 %v3237, %v3287
        %v3289 = vand.u32 %v3057, 4294901760
        %3290 = vmatmul.f32.gmra.mxu0 %v3289
        %v3291 = vpop.f32.mrf.mxu0
        %v3292 = vadd.f32 %v3243, %v3291
        %3293 = vdwg.mxu0
        %3294 = vmatpush.msra.mxu0 0.0
        %3295 = vmatpush.msra.mxu0 0.0
        %3296 = vmatpush.msra.mxu0 0.0
        %3297 = vmatpush.msra.mxu0 0.0
        %3298 = vmatpush.msra.mxu0 0.0
        %3299 = vmatpush.msra.mxu0 0.0
        %3300 = vmatpush.msra.mxu0 0.0
        %3301 = vmatpush.msra.mxu0 0.0
        %v3302 = vand.u32 %v3049, 4294901760
        %3303 = vmatpush.msra.mxu0 %v3302
        %v3304 = vand.u32 %v3046, 4294901760
        %3305 = vmatpush.msra.mxu0 %v3304
        %v3306 = vand.u32 %v3043, 4294901760
        %3307 = vmatpush.msra.mxu0 %v3306
        %v3308 = vand.u32 %v3040, 4294901760
        %3309 = vmatpush.msra.mxu0 %v3308
        %v3310 = vand.u32 %v3037, 4294901760
        %3311 = vmatpush.msra.mxu0 %v3310
        %v3312 = vand.u32 %v3034, 4294901760
        %3313 = vmatpush.msra.mxu0 %v3312
        %v3314 = vand.u32 %v3031, 4294901760
        %3315 = vmatpush.msra.mxu0 %v3314
        %v3316 = vand.u32 %v3028, 4294901760
        %3317 = vmatpush.msra.mxu0 %v3316
        %v3318 = vand.u32 %v3054, 4294901760
        %3319 = vmatmul.f32.gmra.mxu0 %v3318
        %v3320 = vpop.f32.mrf.mxu0
        %v3321 = vadd.f32 %v3288, %v3320
        %v3322 = vand.u32 %v3057, 4294901760
        %3323 = vmatmul.f32.gmra.mxu0 %v3322
        %v3324 = vpop.f32.mrf.mxu0
        %v3325 = vadd.f32 %v3292, %v3324
        %3326 = vdwg.mxu0
        %3327 = vmatpush.msra.mxu0 0.0
        %3328 = vmatpush.msra.mxu0 0.0
        %3329 = vmatpush.msra.mxu0 0.0
        %3330 = vmatpush.msra.mxu0 0.0
        %3331 = vmatpush.msra.mxu0 0.0
        %3332 = vmatpush.msra.mxu0 0.0
        %3333 = vmatpush.msra.mxu0 0.0
        %3334 = vmatpush.msra.mxu0 0.0
        %v3335 = vand.u32 %v3050, 4294901760
        %3336 = vmatpush.msra.mxu0 %v3335
        %v3337 = vand.u32 %v3047, 4294901760
        %3338 = vmatpush.msra.mxu0 %v3337
        %v3339 = vand.u32 %v3044, 4294901760
        %3340 = vmatpush.msra.mxu0 %v3339
        %v3341 = vand.u32 %v3041, 4294901760
        %3342 = vmatpush.msra.mxu0 %v3341
        %v3343 = vand.u32 %v3038, 4294901760
        %3344 = vmatpush.msra.mxu0 %v3343
        %v3345 = vand.u32 %v3035, 4294901760
        %3346 = vmatpush.msra.mxu0 %v3345
        %v3347 = vand.u32 %v3032, 4294901760
        %3348 = vmatpush.msra.mxu0 %v3347
        %v3349 = vand.u32 %v3029, 4294901760
        %3350 = vmatpush.msra.mxu0 %v3349
        %v3351 = vand.u32 %v3054, 4294901760
        %v3352 = vsub.f32 %v3054, %v3351
        %v3353 = vand.u32 %v3352, 4294901760
        %v3354 = vsub.f32 %v3352, %v3353
        %v3355 = vand.u32 %v3354, 4294901760
        %3356 = vmatmul.f32.gmra.mxu0 %v3355
        %v3357 = vpop.f32.mrf.mxu0
        %v3358 = vadd.f32 0.0, %v3357
        %v3359 = vand.u32 %v3057, 4294901760
        %v3360 = vsub.f32 %v3057, %v3359
        %v3361 = vand.u32 %v3360, 4294901760
        %v3362 = vsub.f32 %v3360, %v3361
        %v3363 = vand.u32 %v3362, 4294901760
        %3364 = vmatmul.f32.gmra.mxu0 %v3363
        %v3365 = vpop.f32.mrf.mxu0
        %v3366 = vadd.f32 0.0, %v3365
        %3367 = vdwg.mxu0
        %3368 = vmatpush.msra.mxu0 0.0
        %3369 = vmatpush.msra.mxu0 0.0
        %3370 = vmatpush.msra.mxu0 0.0
        %3371 = vmatpush.msra.mxu0 0.0
        %3372 = vmatpush.msra.mxu0 0.0
        %3373 = vmatpush.msra.mxu0 0.0
        %3374 = vmatpush.msra.mxu0 0.0
        %3375 = vmatpush.msra.mxu0 0.0
        %v3376 = vand.u32 %v3050, 4294901760
        %v3377 = vsub.f32 %v3050, %v3376
        %v3378 = vand.u32 %v3377, 4294901760
        %v3379 = vsub.f32 %v3377, %v3378
        %v3380 = vand.u32 %v3379, 4294901760
        %3381 = vmatpush.msra.mxu0 %v3380
        %v3382 = vand.u32 %v3047, 4294901760
        %v3383 = vsub.f32 %v3047, %v3382
        %v3384 = vand.u32 %v3383, 4294901760
        %v3385 = vsub.f32 %v3383, %v3384
        %v3386 = vand.u32 %v3385, 4294901760
        %3387 = vmatpush.msra.mxu0 %v3386
        %v3388 = vand.u32 %v3044, 4294901760
        %v3389 = vsub.f32 %v3044, %v3388
        %v3390 = vand.u32 %v3389, 4294901760
        %v3391 = vsub.f32 %v3389, %v3390
        %v3392 = vand.u32 %v3391, 4294901760
        %3393 = vmatpush.msra.mxu0 %v3392
        %v3394 = vand.u32 %v3041, 4294901760
        %v3395 = vsub.f32 %v3041, %v3394
        %v3396 = vand.u32 %v3395, 4294901760
        %v3397 = vsub.f32 %v3395, %v3396
        %v3398 = vand.u32 %v3397, 4294901760
        %3399 = vmatpush.msra.mxu0 %v3398
        %v3400 = vand.u32 %v3038, 4294901760
        %v3401 = vsub.f32 %v3038, %v3400
        %v3402 = vand.u32 %v3401, 4294901760
        %v3403 = vsub.f32 %v3401, %v3402
        %v3404 = vand.u32 %v3403, 4294901760
        %3405 = vmatpush.msra.mxu0 %v3404
        %v3406 = vand.u32 %v3035, 4294901760
        %v3407 = vsub.f32 %v3035, %v3406
        %v3408 = vand.u32 %v3407, 4294901760
        %v3409 = vsub.f32 %v3407, %v3408
        %v3410 = vand.u32 %v3409, 4294901760
        %3411 = vmatpush.msra.mxu0 %v3410
        %v3412 = vand.u32 %v3032, 4294901760
        %v3413 = vsub.f32 %v3032, %v3412
        %v3414 = vand.u32 %v3413, 4294901760
        %v3415 = vsub.f32 %v3413, %v3414
        %v3416 = vand.u32 %v3415, 4294901760
        %3417 = vmatpush.msra.mxu0 %v3416
        %v3418 = vand.u32 %v3029, 4294901760
        %v3419 = vsub.f32 %v3029, %v3418
        %v3420 = vand.u32 %v3419, 4294901760
        %v3421 = vsub.f32 %v3419, %v3420
        %v3422 = vand.u32 %v3421, 4294901760
        %3423 = vmatpush.msra.mxu0 %v3422
        %v3424 = vand.u32 %v3054, 4294901760
        %3425 = vmatmul.f32.gmra.mxu0 %v3424
        %v3426 = vpop.f32.mrf.mxu0
        %v3427 = vadd.f32 %v3358, %v3426
        %v3428 = vand.u32 %v3057, 4294901760
        %3429 = vmatmul.f32.gmra.mxu0 %v3428
        %v3430 = vpop.f32.mrf.mxu0
        %v3431 = vadd.f32 %v3366, %v3430
        %3432 = vdwg.mxu0
        %3433 = vmatpush.msra.mxu0 0.0
        %3434 = vmatpush.msra.mxu0 0.0
        %3435 = vmatpush.msra.mxu0 0.0
        %3436 = vmatpush.msra.mxu0 0.0
        %3437 = vmatpush.msra.mxu0 0.0
        %3438 = vmatpush.msra.mxu0 0.0
        %3439 = vmatpush.msra.mxu0 0.0
        %3440 = vmatpush.msra.mxu0 0.0
        %v3441 = vand.u32 %v3050, 4294901760
        %v3442 = vsub.f32 %v3050, %v3441
        %3443 = vmatpush.msra.mxu0 %v3442
        %v3444 = vand.u32 %v3047, 4294901760
        %v3445 = vsub.f32 %v3047, %v3444
        %3446 = vmatpush.msra.mxu0 %v3445
        %v3447 = vand.u32 %v3044, 4294901760
        %v3448 = vsub.f32 %v3044, %v3447
        %3449 = vmatpush.msra.mxu0 %v3448
        %v3450 = vand.u32 %v3041, 4294901760
        %v3451 = vsub.f32 %v3041, %v3450
        %3452 = vmatpush.msra.mxu0 %v3451
        %v3453 = vand.u32 %v3038, 4294901760
        %v3454 = vsub.f32 %v3038, %v3453
        %3455 = vmatpush.msra.mxu0 %v3454
        %v3456 = vand.u32 %v3035, 4294901760
        %v3457 = vsub.f32 %v3035, %v3456
        %3458 = vmatpush.msra.mxu0 %v3457
        %v3459 = vand.u32 %v3032, 4294901760
        %v3460 = vsub.f32 %v3032, %v3459
        %3461 = vmatpush.msra.mxu0 %v3460
        %v3462 = vand.u32 %v3029, 4294901760
        %v3463 = vsub.f32 %v3029, %v3462
        %3464 = vmatpush.msra.mxu0 %v3463
        %v3465 = vand.u32 %v3054, 4294901760
        %v3466 = vsub.f32 %v3054, %v3465
        %3467 = vmatmul.f32.gmra.mxu0 %v3466
        %v3468 = vpop.f32.mrf.mxu0
        %v3469 = vadd.f32 %v3427, %v3468
        %v3470 = vand.u32 %v3057, 4294901760
        %v3471 = vsub.f32 %v3057, %v3470
        %3472 = vmatmul.f32.gmra.mxu0 %v3471
        %v3473 = vpop.f32.mrf.mxu0
        %v3474 = vadd.f32 %v3431, %v3473
        %3475 = vdwg.mxu0
        %3476 = vmatpush.msra.mxu0 0.0
        %3477 = vmatpush.msra.mxu0 0.0
        %3478 = vmatpush.msra.mxu0 0.0
        %3479 = vmatpush.msra.mxu0 0.0
        %3480 = vmatpush.msra.mxu0 0.0
        %3481 = vmatpush.msra.mxu0 0.0
        %3482 = vmatpush.msra.mxu0 0.0
        %3483 = vmatpush.msra.mxu0 0.0
        %v3484 = vand.u32 %v3050, 4294901760
        %3485 = vmatpush.msra.mxu0 %v3484
        %v3486 = vand.u32 %v3047, 4294901760
        %3487 = vmatpush.msra.mxu0 %v3486
        %v3488 = vand.u32 %v3044, 4294901760
        %3489 = vmatpush.msra.mxu0 %v3488
        %v3490 = vand.u32 %v3041, 4294901760
        %3491 = vmatpush.msra.mxu0 %v3490
        %v3492 = vand.u32 %v3038, 4294901760
        %3493 = vmatpush.msra.mxu0 %v3492
        %v3494 = vand.u32 %v3035, 4294901760
        %3495 = vmatpush.msra.mxu0 %v3494
        %v3496 = vand.u32 %v3032, 4294901760
        %3497 = vmatpush.msra.mxu0 %v3496
        %v3498 = vand.u32 %v3029, 4294901760
        %3499 = vmatpush.msra.mxu0 %v3498
        %v3500 = vand.u32 %v3054, 4294901760
        %v3501 = vsub.f32 %v3054, %v3500
        %v3502 = vand.u32 %v3501, 4294901760
        %3503 = vmatmul.f32.gmra.mxu0 %v3502
        %v3504 = vpop.f32.mrf.mxu0
        %v3505 = vadd.f32 %v3469, %v3504
        %v3506 = vand.u32 %v3057, 4294901760
        %v3507 = vsub.f32 %v3057, %v3506
        %v3508 = vand.u32 %v3507, 4294901760
        %3509 = vmatmul.f32.gmra.mxu0 %v3508
        %v3510 = vpop.f32.mrf.mxu0
        %v3511 = vadd.f32 %v3474, %v3510
        %3512 = vdwg.mxu0
        %3513 = vmatpush.msra.mxu0 0.0
        %3514 = vmatpush.msra.mxu0 0.0
        %3515 = vmatpush.msra.mxu0 0.0
        %3516 = vmatpush.msra.mxu0 0.0
        %3517 = vmatpush.msra.mxu0 0.0
        %3518 = vmatpush.msra.mxu0 0.0
        %3519 = vmatpush.msra.mxu0 0.0
        %3520 = vmatpush.msra.mxu0 0.0
        %v3521 = vand.u32 %v3050, 4294901760
        %v3522 = vsub.f32 %v3050, %v3521
        %v3523 = vand.u32 %v3522, 4294901760
        %3524 = vmatpush.msra.mxu0 %v3523
        %v3525 = vand.u32 %v3047, 4294901760
        %v3526 = vsub.f32 %v3047, %v3525
        %v3527 = vand.u32 %v3526, 4294901760
        %3528 = vmatpush.msra.mxu0 %v3527
        %v3529 = vand.u32 %v3044, 4294901760
        %v3530 = vsub.f32 %v3044, %v3529
        %v3531 = vand.u32 %v3530, 4294901760
        %3532 = vmatpush.msra.mxu0 %v3531
        %v3533 = vand.u32 %v3041, 4294901760
        %v3534 = vsub.f32 %v3041, %v3533
        %v3535 = vand.u32 %v3534, 4294901760
        %3536 = vmatpush.msra.mxu0 %v3535
        %v3537 = vand.u32 %v3038, 4294901760
        %v3538 = vsub.f32 %v3038, %v3537
        %v3539 = vand.u32 %v3538, 4294901760
        %3540 = vmatpush.msra.mxu0 %v3539
        %v3541 = vand.u32 %v3035, 4294901760
        %v3542 = vsub.f32 %v3035, %v3541
        %v3543 = vand.u32 %v3542, 4294901760
        %3544 = vmatpush.msra.mxu0 %v3543
        %v3545 = vand.u32 %v3032, 4294901760
        %v3546 = vsub.f32 %v3032, %v3545
        %v3547 = vand.u32 %v3546, 4294901760
        %3548 = vmatpush.msra.mxu0 %v3547
        %v3549 = vand.u32 %v3029, 4294901760
        %v3550 = vsub.f32 %v3029, %v3549
        %v3551 = vand.u32 %v3550, 4294901760
        %3552 = vmatpush.msra.mxu0 %v3551
        %v3553 = vand.u32 %v3054, 4294901760
        %3554 = vmatmul.f32.gmra.mxu0 %v3553
        %v3555 = vpop.f32.mrf.mxu0
        %v3556 = vadd.f32 %v3505, %v3555
        %v3557 = vand.u32 %v3057, 4294901760
        %3558 = vmatmul.f32.gmra.mxu0 %v3557
        %v3559 = vpop.f32.mrf.mxu0
        %v3560 = vadd.f32 %v3511, %v3559
        %3561 = vdwg.mxu0
        %3562 = vmatpush.msra.mxu0 0.0
        %3563 = vmatpush.msra.mxu0 0.0
        %3564 = vmatpush.msra.mxu0 0.0
        %3565 = vmatpush.msra.mxu0 0.0
        %3566 = vmatpush.msra.mxu0 0.0
        %3567 = vmatpush.msra.mxu0 0.0
        %3568 = vmatpush.msra.mxu0 0.0
        %3569 = vmatpush.msra.mxu0 0.0
        %v3570 = vand.u32 %v3050, 4294901760
        %3571 = vmatpush.msra.mxu0 %v3570
        %v3572 = vand.u32 %v3047, 4294901760
        %3573 = vmatpush.msra.mxu0 %v3572
        %v3574 = vand.u32 %v3044, 4294901760
        %3575 = vmatpush.msra.mxu0 %v3574
        %v3576 = vand.u32 %v3041, 4294901760
        %3577 = vmatpush.msra.mxu0 %v3576
        %v3578 = vand.u32 %v3038, 4294901760
        %3579 = vmatpush.msra.mxu0 %v3578
        %v3580 = vand.u32 %v3035, 4294901760
        %3581 = vmatpush.msra.mxu0 %v3580
        %v3582 = vand.u32 %v3032, 4294901760
        %3583 = vmatpush.msra.mxu0 %v3582
        %v3584 = vand.u32 %v3029, 4294901760
        %3585 = vmatpush.msra.mxu0 %v3584
        %v3586 = vand.u32 %v3054, 4294901760
        %3587 = vmatmul.f32.gmra.mxu0 %v3586
        %v3588 = vpop.f32.mrf.mxu0
        %v3589 = vadd.f32 %v3556, %v3588
        %v3590 = vand.u32 %v3057, 4294901760
        %3591 = vmatmul.f32.gmra.mxu0 %v3590
        %v3592 = vpop.f32.mrf.mxu0
        %v3593 = vadd.f32 %v3560, %v3592
        %3594 = vdwg.mxu0
        %3595 = vmatpush.msra.mxu0 0.0
        %3596 = vmatpush.msra.mxu0 0.0
        %3597 = vmatpush.msra.mxu0 0.0
        %3598 = vmatpush.msra.mxu0 0.0
        %3599 = vmatpush.msra.mxu0 0.0
        %3600 = vmatpush.msra.mxu0 0.0
        %3601 = vmatpush.msra.mxu0 0.0
        %3602 = vmatpush.msra.mxu0 0.0
        %v3603 = vand.u32 %v3051, 4294901760
        %3604 = vmatpush.msra.mxu0 %v3603
        %v3605 = vand.u32 %v3048, 4294901760
        %3606 = vmatpush.msra.mxu0 %v3605
        %v3607 = vand.u32 %v3045, 4294901760
        %3608 = vmatpush.msra.mxu0 %v3607
        %v3609 = vand.u32 %v3042, 4294901760
        %3610 = vmatpush.msra.mxu0 %v3609
        %v3611 = vand.u32 %v3039, 4294901760
        %3612 = vmatpush.msra.mxu0 %v3611
        %v3613 = vand.u32 %v3036, 4294901760
        %3614 = vmatpush.msra.mxu0 %v3613
        %v3615 = vand.u32 %v3033, 4294901760
        %3616 = vmatpush.msra.mxu0 %v3615
        %v3617 = vand.u32 %v3030, 4294901760
        %3618 = vmatpush.msra.mxu0 %v3617
        %v3619 = vand.u32 %v3054, 4294901760
        %v3620 = vsub.f32 %v3054, %v3619
        %v3621 = vand.u32 %v3620, 4294901760
        %v3622 = vsub.f32 %v3620, %v3621
        %v3623 = vand.u32 %v3622, 4294901760
        %3624 = vmatmul.f32.gmra.mxu0 %v3623
        %v3625 = vpop.f32.mrf.mxu0
        %v3626 = vadd.f32 0.0, %v3625
        %v3627 = vand.u32 %v3057, 4294901760
        %v3628 = vsub.f32 %v3057, %v3627
        %v3629 = vand.u32 %v3628, 4294901760
        %v3630 = vsub.f32 %v3628, %v3629
        %v3631 = vand.u32 %v3630, 4294901760
        %3632 = vmatmul.f32.gmra.mxu0 %v3631
        %v3633 = vpop.f32.mrf.mxu0
        %v3634 = vadd.f32 0.0, %v3633
        %3635 = vdwg.mxu0
        %3636 = vmatpush.msra.mxu0 0.0
        %3637 = vmatpush.msra.mxu0 0.0
        %3638 = vmatpush.msra.mxu0 0.0
        %3639 = vmatpush.msra.mxu0 0.0
        %3640 = vmatpush.msra.mxu0 0.0
        %3641 = vmatpush.msra.mxu0 0.0
        %3642 = vmatpush.msra.mxu0 0.0
        %3643 = vmatpush.msra.mxu0 0.0
        %v3644 = vand.u32 %v3051, 4294901760
        %v3645 = vsub.f32 %v3051, %v3644
        %v3646 = vand.u32 %v3645, 4294901760
        %v3647 = vsub.f32 %v3645, %v3646
        %v3648 = vand.u32 %v3647, 4294901760
        %3649 = vmatpush.msra.mxu0 %v3648
        %v3650 = vand.u32 %v3048, 4294901760
        %v3651 = vsub.f32 %v3048, %v3650
        %v3652 = vand.u32 %v3651, 4294901760
        %v3653 = vsub.f32 %v3651, %v3652
        %v3654 = vand.u32 %v3653, 4294901760
        %3655 = vmatpush.msra.mxu0 %v3654
        %v3656 = vand.u32 %v3045, 4294901760
        %v3657 = vsub.f32 %v3045, %v3656
        %v3658 = vand.u32 %v3657, 4294901760
        %v3659 = vsub.f32 %v3657, %v3658
        %v3660 = vand.u32 %v3659, 4294901760
        %3661 = vmatpush.msra.mxu0 %v3660
        %v3662 = vand.u32 %v3042, 4294901760
        %v3663 = vsub.f32 %v3042, %v3662
        %v3664 = vand.u32 %v3663, 4294901760
        %v3665 = vsub.f32 %v3663, %v3664
        %v3666 = vand.u32 %v3665, 4294901760
        %3667 = vmatpush.msra.mxu0 %v3666
        %v3668 = vand.u32 %v3039, 4294901760
        %v3669 = vsub.f32 %v3039, %v3668
        %v3670 = vand.u32 %v3669, 4294901760
        %v3671 = vsub.f32 %v3669, %v3670
        %v3672 = vand.u32 %v3671, 4294901760
        %3673 = vmatpush.msra.mxu0 %v3672
        %v3674 = vand.u32 %v3036, 4294901760
        %v3675 = vsub.f32 %v3036, %v3674
        %v3676 = vand.u32 %v3675, 4294901760
        %v3677 = vsub.f32 %v3675, %v3676
        %v3678 = vand.u32 %v3677, 4294901760
        %3679 = vmatpush.msra.mxu0 %v3678
        %v3680 = vand.u32 %v3033, 4294901760
        %v3681 = vsub.f32 %v3033, %v3680
        %v3682 = vand.u32 %v3681, 4294901760
        %v3683 = vsub.f32 %v3681, %v3682
        %v3684 = vand.u32 %v3683, 4294901760
        %3685 = vmatpush.msra.mxu0 %v3684
        %v3686 = vand.u32 %v3030, 4294901760
        %v3687 = vsub.f32 %v3030, %v3686
        %v3688 = vand.u32 %v3687, 4294901760
        %v3689 = vsub.f32 %v3687, %v3688
        %v3690 = vand.u32 %v3689, 4294901760
        %3691 = vmatpush.msra.mxu0 %v3690
        %v3692 = vand.u32 %v3054, 4294901760
        %3693 = vmatmul.f32.gmra.mxu0 %v3692
        %v3694 = vpop.f32.mrf.mxu0
        %v3695 = vadd.f32 %v3626, %v3694
        %v3696 = vand.u32 %v3057, 4294901760
        %3697 = vmatmul.f32.gmra.mxu0 %v3696
        %v3698 = vpop.f32.mrf.mxu0
        %v3699 = vadd.f32 %v3634, %v3698
        %3700 = vdwg.mxu0
        %3701 = vmatpush.msra.mxu0 0.0
        %3702 = vmatpush.msra.mxu0 0.0
        %3703 = vmatpush.msra.mxu0 0.0
        %3704 = vmatpush.msra.mxu0 0.0
        %3705 = vmatpush.msra.mxu0 0.0
        %3706 = vmatpush.msra.mxu0 0.0
        %3707 = vmatpush.msra.mxu0 0.0
        %3708 = vmatpush.msra.mxu0 0.0
        %v3709 = vand.u32 %v3051, 4294901760
        %v3710 = vsub.f32 %v3051, %v3709
        %3711 = vmatpush.msra.mxu0 %v3710
        %v3712 = vand.u32 %v3048, 4294901760
        %v3713 = vsub.f32 %v3048, %v3712
        %3714 = vmatpush.msra.mxu0 %v3713
        %v3715 = vand.u32 %v3045, 4294901760
        %v3716 = vsub.f32 %v3045, %v3715
        %3717 = vmatpush.msra.mxu0 %v3716
        %v3718 = vand.u32 %v3042, 4294901760
        %v3719 = vsub.f32 %v3042, %v3718
        %3720 = vmatpush.msra.mxu0 %v3719
        %v3721 = vand.u32 %v3039, 4294901760
        %v3722 = vsub.f32 %v3039, %v3721
        %3723 = vmatpush.msra.mxu0 %v3722
        %v3724 = vand.u32 %v3036, 4294901760
        %v3725 = vsub.f32 %v3036, %v3724
        %3726 = vmatpush.msra.mxu0 %v3725
        %v3727 = vand.u32 %v3033, 4294901760
        %v3728 = vsub.f32 %v3033, %v3727
        %3729 = vmatpush.msra.mxu0 %v3728
        %v3730 = vand.u32 %v3030, 4294901760
        %v3731 = vsub.f32 %v3030, %v3730
        %3732 = vmatpush.msra.mxu0 %v3731
        %v3733 = vand.u32 %v3054, 4294901760
        %v3734 = vsub.f32 %v3054, %v3733
        %3735 = vmatmul.f32.gmra.mxu0 %v3734
        %v3736 = vpop.f32.mrf.mxu0
        %v3737 = vadd.f32 %v3695, %v3736
        %v3738 = vand.u32 %v3057, 4294901760
        %v3739 = vsub.f32 %v3057, %v3738
        %3740 = vmatmul.f32.gmra.mxu0 %v3739
        %v3741 = vpop.f32.mrf.mxu0
        %v3742 = vadd.f32 %v3699, %v3741
        %3743 = vdwg.mxu0
        %3744 = vmatpush.msra.mxu0 0.0
        %3745 = vmatpush.msra.mxu0 0.0
        %3746 = vmatpush.msra.mxu0 0.0
        %3747 = vmatpush.msra.mxu0 0.0
        %3748 = vmatpush.msra.mxu0 0.0
        %3749 = vmatpush.msra.mxu0 0.0
        %3750 = vmatpush.msra.mxu0 0.0
        %3751 = vmatpush.msra.mxu0 0.0
        %v3752 = vand.u32 %v3051, 4294901760
        %3753 = vmatpush.msra.mxu0 %v3752
        %v3754 = vand.u32 %v3048, 4294901760
        %3755 = vmatpush.msra.mxu0 %v3754
        %v3756 = vand.u32 %v3045, 4294901760
        %3757 = vmatpush.msra.mxu0 %v3756
        %v3758 = vand.u32 %v3042, 4294901760
        %3759 = vmatpush.msra.mxu0 %v3758
        %v3760 = vand.u32 %v3039, 4294901760
        %3761 = vmatpush.msra.mxu0 %v3760
        %v3762 = vand.u32 %v3036, 4294901760
        %3763 = vmatpush.msra.mxu0 %v3762
        %v3764 = vand.u32 %v3033, 4294901760
        %3765 = vmatpush.msra.mxu0 %v3764
        %v3766 = vand.u32 %v3030, 4294901760
        %3767 = vmatpush.msra.mxu0 %v3766
        %v3768 = vand.u32 %v3054, 4294901760
        %v3769 = vsub.f32 %v3054, %v3768
        %v3770 = vand.u32 %v3769, 4294901760
        %3771 = vmatmul.f32.gmra.mxu0 %v3770
        %v3772 = vpop.f32.mrf.mxu0
        %v3773 = vadd.f32 %v3737, %v3772
        %v3774 = vand.u32 %v3057, 4294901760
        %v3775 = vsub.f32 %v3057, %v3774
        %v3776 = vand.u32 %v3775, 4294901760
        %3777 = vmatmul.f32.gmra.mxu0 %v3776
        %v3778 = vpop.f32.mrf.mxu0
        %v3779 = vadd.f32 %v3742, %v3778
        %3780 = vdwg.mxu0
        %3781 = vmatpush.msra.mxu0 0.0
        %3782 = vmatpush.msra.mxu0 0.0
        %3783 = vmatpush.msra.mxu0 0.0
        %3784 = vmatpush.msra.mxu0 0.0
        %3785 = vmatpush.msra.mxu0 0.0
        %3786 = vmatpush.msra.mxu0 0.0
        %3787 = vmatpush.msra.mxu0 0.0
        %3788 = vmatpush.msra.mxu0 0.0
        %v3789 = vand.u32 %v3051, 4294901760
        %v3790 = vsub.f32 %v3051, %v3789
        %v3791 = vand.u32 %v3790, 4294901760
        %3792 = vmatpush.msra.mxu0 %v3791
        %v3793 = vand.u32 %v3048, 4294901760
        %v3794 = vsub.f32 %v3048, %v3793
        %v3795 = vand.u32 %v3794, 4294901760
        %3796 = vmatpush.msra.mxu0 %v3795
        %v3797 = vand.u32 %v3045, 4294901760
        %v3798 = vsub.f32 %v3045, %v3797
        %v3799 = vand.u32 %v3798, 4294901760
        %3800 = vmatpush.msra.mxu0 %v3799
        %v3801 = vand.u32 %v3042, 4294901760
        %v3802 = vsub.f32 %v3042, %v3801
        %v3803 = vand.u32 %v3802, 4294901760
        %3804 = vmatpush.msra.mxu0 %v3803
        %v3805 = vand.u32 %v3039, 4294901760
        %v3806 = vsub.f32 %v3039, %v3805
        %v3807 = vand.u32 %v3806, 4294901760
        %3808 = vmatpush.msra.mxu0 %v3807
        %v3809 = vand.u32 %v3036, 4294901760
        %v3810 = vsub.f32 %v3036, %v3809
        %v3811 = vand.u32 %v3810, 4294901760
        %3812 = vmatpush.msra.mxu0 %v3811
        %v3813 = vand.u32 %v3033, 4294901760
        %v3814 = vsub.f32 %v3033, %v3813
        %v3815 = vand.u32 %v3814, 4294901760
        %3816 = vmatpush.msra.mxu0 %v3815
        %v3817 = vand.u32 %v3030, 4294901760
        %v3818 = vsub.f32 %v3030, %v3817
        %v3819 = vand.u32 %v3818, 4294901760
        %3820 = vmatpush.msra.mxu0 %v3819
        %v3821 = vand.u32 %v3054, 4294901760
        %3822 = vmatmul.f32.gmra.mxu0 %v3821
        %v3823 = vpop.f32.mrf.mxu0
        %v3824 = vadd.f32 %v3773, %v3823
        %v3825 = vand.u32 %v3057, 4294901760
        %3826 = vmatmul.f32.gmra.mxu0 %v3825
        %v3827 = vpop.f32.mrf.mxu0
        %v3828 = vadd.f32 %v3779, %v3827
        %3829 = vdwg.mxu0
        %3830 = vmatpush.msra.mxu0 0.0
        %3831 = vmatpush.msra.mxu0 0.0
        %3832 = vmatpush.msra.mxu0 0.0
        %3833 = vmatpush.msra.mxu0 0.0
        %3834 = vmatpush.msra.mxu0 0.0
        %3835 = vmatpush.msra.mxu0 0.0
        %3836 = vmatpush.msra.mxu0 0.0
        %3837 = vmatpush.msra.mxu0 0.0
        %v3838 = vand.u32 %v3051, 4294901760
        %3839 = vmatpush.msra.mxu0 %v3838
        %v3840 = vand.u32 %v3048, 4294901760
        %3841 = vmatpush.msra.mxu0 %v3840
        %v3842 = vand.u32 %v3045, 4294901760
        %3843 = vmatpush.msra.mxu0 %v3842
        %v3844 = vand.u32 %v3042, 4294901760
        %3845 = vmatpush.msra.mxu0 %v3844
        %v3846 = vand.u32 %v3039, 4294901760
        %3847 = vmatpush.msra.mxu0 %v3846
        %v3848 = vand.u32 %v3036, 4294901760
        %3849 = vmatpush.msra.mxu0 %v3848
        %v3850 = vand.u32 %v3033, 4294901760
        %3851 = vmatpush.msra.mxu0 %v3850
        %v3852 = vand.u32 %v3030, 4294901760
        %3853 = vmatpush.msra.mxu0 %v3852
        %v3854 = vand.u32 %v3054, 4294901760
        %3855 = vmatmul.f32.gmra.mxu0 %v3854
        %v3856 = vpop.f32.mrf.mxu0
        %v3857 = vadd.f32 %v3824, %v3856
        %v3858 = vand.u32 %v3057, 4294901760
        %3859 = vmatmul.f32.gmra.mxu0 %v3858
        %v3860 = vpop.f32.mrf.mxu0
        %v3861 = vadd.f32 %v3828, %v3860
        %3862 = vdwg.mxu0
        %v3863 = vld [vmem:[#allocation16] sm:$0xff]
        %v3864 = vld [vmem:[#allocation16 + $0x8] sm:$0xff]
        %vm3865 = vcmask 130048
        %v3867 = vsel %vm3865, %v3863, 0
        %v3870 = vsel %vm3865, %v3864, 0
        %3872 = vmatpush.msra.mxu0 0.0
        %3873 = vmatpush.msra.mxu0 0.0
        %3874 = vmatpush.msra.mxu0 0.0
        %3875 = vmatpush.msra.mxu0 0.0
        %3876 = vmatpush.msra.mxu0 0.0
        %3877 = vmatpush.msra.mxu0 0.0
        %3878 = vmatpush.msra.mxu0 0.0
        %3879 = vmatpush.msra.mxu0 0.0
        %3880 = vmatpush.msra.mxu0 0.0
        %3881 = vmatpush.msra.mxu0 0.0
        %3882 = vmatpush.msra.mxu0 0.0
        %3883 = vmatpush.msra.mxu0 0.0
        %3884 = vmatpush.msra.mxu0 0.0
        %3885 = vmatpush.msra.mxu0 0.0
        %v3886 = vand.u32 %v3325, 4294901760
        %3887 = vmatpush.msra.mxu0 %v3886
        %v3888 = vand.u32 %v3321, 4294901760
        %3889 = vmatpush.msra.mxu0 %v3888
        %v3890 = vand.u32 %v3867, 4294901760
        %v3891 = vsub.f32 %v3867, %v3890
        %v3892 = vand.u32 %v3891, 4294901760
        %v3893 = vsub.f32 %v3891, %v3892
        %v3894 = vand.u32 %v3893, 4294901760
        %3895 = vmatmul.f32.gmra.mxu0 %v3894
        %v3896 = vpop.f32.mrf.mxu0
        %v3897 = vadd.f32 %v3589, %v3896
        %v3898 = vand.u32 %v3870, 4294901760
        %v3899 = vsub.f32 %v3870, %v3898
        %v3900 = vand.u32 %v3899, 4294901760
        %v3901 = vsub.f32 %v3899, %v3900
        %v3902 = vand.u32 %v3901, 4294901760
        %3903 = vmatmul.f32.gmra.mxu0 %v3902
        %v3904 = vpop.f32.mrf.mxu0
        %v3905 = vadd.f32 %v3593, %v3904
        %3906 = vdwg.mxu0
        %3907 = vmatpush.msra.mxu0 0.0
        %3908 = vmatpush.msra.mxu0 0.0
        %3909 = vmatpush.msra.mxu0 0.0
        %3910 = vmatpush.msra.mxu0 0.0
        %3911 = vmatpush.msra.mxu0 0.0
        %3912 = vmatpush.msra.mxu0 0.0
        %3913 = vmatpush.msra.mxu0 0.0
        %3914 = vmatpush.msra.mxu0 0.0
        %3915 = vmatpush.msra.mxu0 0.0
        %3916 = vmatpush.msra.mxu0 0.0
        %3917 = vmatpush.msra.mxu0 0.0
        %3918 = vmatpush.msra.mxu0 0.0
        %3919 = vmatpush.msra.mxu0 0.0
        %3920 = vmatpush.msra.mxu0 0.0
        %v3921 = vand.u32 %v3325, 4294901760
        %v3922 = vsub.f32 %v3325, %v3921
        %v3923 = vand.u32 %v3922, 4294901760
        %v3924 = vsub.f32 %v3922, %v3923
        %v3925 = vand.u32 %v3924, 4294901760
        %3926 = vmatpush.msra.mxu0 %v3925
        %v3927 = vand.u32 %v3321, 4294901760
        %v3928 = vsub.f32 %v3321, %v3927
        %v3929 = vand.u32 %v3928, 4294901760
        %v3930 = vsub.f32 %v3928, %v3929
        %v3931 = vand.u32 %v3930, 4294901760
        %3932 = vmatpush.msra.mxu0 %v3931
        %v3933 = vand.u32 %v3867, 4294901760
        %3934 = vmatmul.f32.gmra.mxu0 %v3933
        %v3935 = vpop.f32.mrf.mxu0
        %v3936 = vadd.f32 %v3897, %v3935
        %v3937 = vand.u32 %v3870, 4294901760
        %3938 = vmatmul.f32.gmra.mxu0 %v3937
        %v3939 = vpop.f32.mrf.mxu0
        %v3940 = vadd.f32 %v3905, %v3939
        %3941 = vdwg.mxu0
        %3942 = vmatpush.msra.mxu0 0.0
        %3943 = vmatpush.msra.mxu0 0.0
        %3944 = vmatpush.msra.mxu0 0.0
        %3945 = vmatpush.msra.mxu0 0.0
        %3946 = vmatpush.msra.mxu0 0.0
        %3947 = vmatpush.msra.mxu0 0.0
        %3948 = vmatpush.msra.mxu0 0.0
        %3949 = vmatpush.msra.mxu0 0.0
        %3950 = vmatpush.msra.mxu0 0.0
        %3951 = vmatpush.msra.mxu0 0.0
        %3952 = vmatpush.msra.mxu0 0.0
        %3953 = vmatpush.msra.mxu0 0.0
        %3954 = vmatpush.msra.mxu0 0.0
        %3955 = vmatpush.msra.mxu0 0.0
        %v3956 = vand.u32 %v3325, 4294901760
        %v3957 = vsub.f32 %v3325, %v3956
        %3958 = vmatpush.msra.mxu0 %v3957
        %v3959 = vand.u32 %v3321, 4294901760
        %v3960 = vsub.f32 %v3321, %v3959
        %3961 = vmatpush.msra.mxu0 %v3960
        %v3962 = vand.u32 %v3867, 4294901760
        %v3963 = vsub.f32 %v3867, %v3962
        %3964 = vmatmul.f32.gmra.mxu0 %v3963
        %v3965 = vpop.f32.mrf.mxu0
        %v3966 = vadd.f32 %v3936, %v3965
        %v3967 = vand.u32 %v3870, 4294901760
        %v3968 = vsub.f32 %v3870, %v3967
        %3969 = vmatmul.f32.gmra.mxu0 %v3968
        %v3970 = vpop.f32.mrf.mxu0
        %v3971 = vadd.f32 %v3940, %v3970
        %3972 = vdwg.mxu0
        %3973 = vmatpush.msra.mxu0 0.0
        %3974 = vmatpush.msra.mxu0 0.0
        %3975 = vmatpush.msra.mxu0 0.0
        %3976 = vmatpush.msra.mxu0 0.0
        %3977 = vmatpush.msra.mxu0 0.0
        %3978 = vmatpush.msra.mxu0 0.0
        %3979 = vmatpush.msra.mxu0 0.0
        %3980 = vmatpush.msra.mxu0 0.0
        %3981 = vmatpush.msra.mxu0 0.0
        %3982 = vmatpush.msra.mxu0 0.0
        %3983 = vmatpush.msra.mxu0 0.0
        %3984 = vmatpush.msra.mxu0 0.0
        %3985 = vmatpush.msra.mxu0 0.0
        %3986 = vmatpush.msra.mxu0 0.0
        %v3987 = vand.u32 %v3325, 4294901760
        %3988 = vmatpush.msra.mxu0 %v3987
        %v3989 = vand.u32 %v3321, 4294901760
        %3990 = vmatpush.msra.mxu0 %v3989
        %v3991 = vand.u32 %v3867, 4294901760
        %v3992 = vsub.f32 %v3867, %v3991
        %v3993 = vand.u32 %v3992, 4294901760
        %3994 = vmatmul.f32.gmra.mxu0 %v3993
        %v3995 = vpop.f32.mrf.mxu0
        %v3996 = vadd.f32 %v3966, %v3995
        %v3997 = vand.u32 %v3870, 4294901760
        %v3998 = vsub.f32 %v3870, %v3997
        %v3999 = vand.u32 %v3998, 4294901760
        %4000 = vmatmul.f32.gmra.mxu0 %v3999
        %v4001 = vpop.f32.mrf.mxu0
        %v4002 = vadd.f32 %v3971, %v4001
        %4003 = vdwg.mxu0
        %4004 = vmatpush.msra.mxu0 0.0
        %4005 = vmatpush.msra.mxu0 0.0
        %4006 = vmatpush.msra.mxu0 0.0
        %4007 = vmatpush.msra.mxu0 0.0
        %4008 = vmatpush.msra.mxu0 0.0
        %4009 = vmatpush.msra.mxu0 0.0
        %4010 = vmatpush.msra.mxu0 0.0
        %4011 = vmatpush.msra.mxu0 0.0
        %4012 = vmatpush.msra.mxu0 0.0
        %4013 = vmatpush.msra.mxu0 0.0
        %4014 = vmatpush.msra.mxu0 0.0
        %4015 = vmatpush.msra.mxu0 0.0
        %4016 = vmatpush.msra.mxu0 0.0
        %4017 = vmatpush.msra.mxu0 0.0
        %v4018 = vand.u32 %v3325, 4294901760
        %v4019 = vsub.f32 %v3325, %v4018
        %v4020 = vand.u32 %v4019, 4294901760
        %4021 = vmatpush.msra.mxu0 %v4020
        %v4022 = vand.u32 %v3321, 4294901760
        %v4023 = vsub.f32 %v3321, %v4022
        %v4024 = vand.u32 %v4023, 4294901760
        %4025 = vmatpush.msra.mxu0 %v4024
        %v4026 = vand.u32 %v3867, 4294901760
        %4027 = vmatmul.f32.gmra.mxu0 %v4026
        %v4028 = vpop.f32.mrf.mxu0
        %v4029 = vadd.f32 %v3996, %v4028
        %v4030 = vand.u32 %v3870, 4294901760
        %4031 = vmatmul.f32.gmra.mxu0 %v4030
        %v4032 = vpop.f32.mrf.mxu0
        %v4033 = vadd.f32 %v4002, %v4032
        %4034 = vdwg.mxu0
        %4035 = vmatpush.msra.mxu0 0.0
        %4036 = vmatpush.msra.mxu0 0.0
        %4037 = vmatpush.msra.mxu0 0.0
        %4038 = vmatpush.msra.mxu0 0.0
        %4039 = vmatpush.msra.mxu0 0.0
        %4040 = vmatpush.msra.mxu0 0.0
        %4041 = vmatpush.msra.mxu0 0.0
        %4042 = vmatpush.msra.mxu0 0.0
        %4043 = vmatpush.msra.mxu0 0.0
        %4044 = vmatpush.msra.mxu0 0.0
        %4045 = vmatpush.msra.mxu0 0.0
        %4046 = vmatpush.msra.mxu0 0.0
        %4047 = vmatpush.msra.mxu0 0.0
        %4048 = vmatpush.msra.mxu0 0.0
        %v4049 = vand.u32 %v3325, 4294901760
        %4050 = vmatpush.msra.mxu0 %v4049
        %v4051 = vand.u32 %v3321, 4294901760
        %4052 = vmatpush.msra.mxu0 %v4051
        %v4053 = vand.u32 %v3867, 4294901760
        %4054 = vmatmul.f32.gmra.mxu0 %v4053
        %v4055 = vpop.f32.mrf.mxu0
        %v4056 = vadd.f32 %v4029, %v4055
        %v4057 = vand.u32 %v3870, 4294901760
        %4058 = vmatmul.f32.gmra.mxu0 %v4057
        %v4059 = vpop.f32.mrf.mxu0
        %v4060 = vadd.f32 %v4033, %v4059
        %4061 = vdwg.mxu0
        %v4062 = vld [vmem:[#allocation17] sm:$0xff]
        %v4063 = vld [vmem:[#allocation17 + $0x8] sm:$0xff]
        %v4065 = vsel %vm3865, %v4062, 0
        %v4068 = vsel %vm3865, %v4063, 0
        %4070 = vmatpush.msra.mxu0 0.0
        %4071 = vmatpush.msra.mxu0 0.0
        %4072 = vmatpush.msra.mxu0 0.0
        %4073 = vmatpush.msra.mxu0 0.0
        %4074 = vmatpush.msra.mxu0 0.0
        %4075 = vmatpush.msra.mxu0 0.0
        %4076 = vmatpush.msra.mxu0 0.0
        %4077 = vmatpush.msra.mxu0 0.0
        %4078 = vmatpush.msra.mxu0 0.0
        %4079 = vmatpush.msra.mxu0 0.0
        %4080 = vmatpush.msra.mxu0 0.0
        %4081 = vmatpush.msra.mxu0 0.0
        %4082 = vmatpush.msra.mxu0 0.0
        %4083 = vmatpush.msra.mxu0 0.0
        %v4084 = vand.u32 %v3861, 4294901760
        %4085 = vmatpush.msra.mxu0 %v4084
        %v4086 = vand.u32 %v3857, 4294901760
        %4087 = vmatpush.msra.mxu0 %v4086
        %v4088 = vand.u32 %v4065, 4294901760
        %v4089 = vsub.f32 %v4065, %v4088
        %v4090 = vand.u32 %v4089, 4294901760
        %v4091 = vsub.f32 %v4089, %v4090
        %v4092 = vand.u32 %v4091, 4294901760
        %4093 = vmatmul.f32.gmra.mxu0 %v4092
        %v4094 = vpop.f32.mrf.mxu0
        %v4095 = vadd.f32 0.0, %v4094
        %v4096 = vand.u32 %v4068, 4294901760
        %v4097 = vsub.f32 %v4068, %v4096
        %v4098 = vand.u32 %v4097, 4294901760
        %v4099 = vsub.f32 %v4097, %v4098
        %v4100 = vand.u32 %v4099, 4294901760
        %4101 = vmatmul.f32.gmra.mxu0 %v4100
        %v4102 = vpop.f32.mrf.mxu0
        %v4103 = vadd.f32 0.0, %v4102
        %4104 = vdwg.mxu0
        %4105 = vmatpush.msra.mxu0 0.0
        %4106 = vmatpush.msra.mxu0 0.0
        %4107 = vmatpush.msra.mxu0 0.0
        %4108 = vmatpush.msra.mxu0 0.0
        %4109 = vmatpush.msra.mxu0 0.0
        %4110 = vmatpush.msra.mxu0 0.0
        %4111 = vmatpush.msra.mxu0 0.0
        %4112 = vmatpush.msra.mxu0 0.0
        %4113 = vmatpush.msra.mxu0 0.0
        %4114 = vmatpush.msra.mxu0 0.0
        %4115 = vmatpush.msra.mxu0 0.0
        %4116 = vmatpush.msra.mxu0 0.0
        %4117 = vmatpush.msra.mxu0 0.0
        %4118 = vmatpush.msra.mxu0 0.0
        %v4119 = vand.u32 %v3861, 4294901760
        %v4120 = vsub.f32 %v3861, %v4119
        %v4121 = vand.u32 %v4120, 4294901760
        %v4122 = vsub.f32 %v4120, %v4121
        %v4123 = vand.u32 %v4122, 4294901760
        %4124 = vmatpush.msra.mxu0 %v4123
        %v4125 = vand.u32 %v3857, 4294901760
        %v4126 = vsub.f32 %v3857, %v4125
        %v4127 = vand.u32 %v4126, 4294901760
        %v4128 = vsub.f32 %v4126, %v4127
        %v4129 = vand.u32 %v4128, 4294901760
        %4130 = vmatpush.msra.mxu0 %v4129
        %v4131 = vand.u32 %v4065, 4294901760
        %4132 = vmatmul.f32.gmra.mxu0 %v4131
        %v4133 = vpop.f32.mrf.mxu0
        %v4134 = vadd.f32 %v4095, %v4133
        %v4135 = vand.u32 %v4068, 4294901760
        %4136 = vmatmul.f32.gmra.mxu0 %v4135
        %v4137 = vpop.f32.mrf.mxu0
        %v4138 = vadd.f32 %v4103, %v4137
        %4139 = vdwg.mxu0
        %4140 = vmatpush.msra.mxu0 0.0
        %4141 = vmatpush.msra.mxu0 0.0
        %4142 = vmatpush.msra.mxu0 0.0
        %4143 = vmatpush.msra.mxu0 0.0
        %4144 = vmatpush.msra.mxu0 0.0
        %4145 = vmatpush.msra.mxu0 0.0
        %4146 = vmatpush.msra.mxu0 0.0
        %4147 = vmatpush.msra.mxu0 0.0
        %4148 = vmatpush.msra.mxu0 0.0
        %4149 = vmatpush.msra.mxu0 0.0
        %4150 = vmatpush.msra.mxu0 0.0
        %4151 = vmatpush.msra.mxu0 0.0
        %4152 = vmatpush.msra.mxu0 0.0
        %4153 = vmatpush.msra.mxu0 0.0
        %v4154 = vand.u32 %v3861, 4294901760
        %v4155 = vsub.f32 %v3861, %v4154
        %4156 = vmatpush.msra.mxu0 %v4155
        %v4157 = vand.u32 %v3857, 4294901760
        %v4158 = vsub.f32 %v3857, %v4157
        %4159 = vmatpush.msra.mxu0 %v4158
        %v4160 = vand.u32 %v4065, 4294901760
        %v4161 = vsub.f32 %v4065, %v4160
        %4162 = vmatmul.f32.gmra.mxu0 %v4161
        %v4163 = vpop.f32.mrf.mxu0
        %v4164 = vadd.f32 %v4134, %v4163
        %v4165 = vand.u32 %v4068, 4294901760
        %v4166 = vsub.f32 %v4068, %v4165
        %4167 = vmatmul.f32.gmra.mxu0 %v4166
        %v4168 = vpop.f32.mrf.mxu0
        %v4169 = vadd.f32 %v4138, %v4168
        %4170 = vdwg.mxu0
        %4171 = vmatpush.msra.mxu0 0.0
        %4172 = vmatpush.msra.mxu0 0.0
        %4173 = vmatpush.msra.mxu0 0.0
        %4174 = vmatpush.msra.mxu0 0.0
        %4175 = vmatpush.msra.mxu0 0.0
        %4176 = vmatpush.msra.mxu0 0.0
        %4177 = vmatpush.msra.mxu0 0.0
        %4178 = vmatpush.msra.mxu0 0.0
        %4179 = vmatpush.msra.mxu0 0.0
        %4180 = vmatpush.msra.mxu0 0.0
        %4181 = vmatpush.msra.mxu0 0.0
        %4182 = vmatpush.msra.mxu0 0.0
        %4183 = vmatpush.msra.mxu0 0.0
        %4184 = vmatpush.msra.mxu0 0.0
        %v4185 = vand.u32 %v3861, 4294901760
        %4186 = vmatpush.msra.mxu0 %v4185
        %v4187 = vand.u32 %v3857, 4294901760
        %4188 = vmatpush.msra.mxu0 %v4187
        %v4189 = vand.u32 %v4065, 4294901760
        %v4190 = vsub.f32 %v4065, %v4189
        %v4191 = vand.u32 %v4190, 4294901760
        %4192 = vmatmul.f32.gmra.mxu0 %v4191
        %v4193 = vpop.f32.mrf.mxu0
        %v4194 = vadd.f32 %v4164, %v4193
        %v4195 = vand.u32 %v4068, 4294901760
        %v4196 = vsub.f32 %v4068, %v4195
        %v4197 = vand.u32 %v4196, 4294901760
        %4198 = vmatmul.f32.gmra.mxu0 %v4197
        %v4199 = vpop.f32.mrf.mxu0
        %v4200 = vadd.f32 %v4169, %v4199
        %4201 = vdwg.mxu0
        %4202 = vmatpush.msra.mxu0 0.0
        %4203 = vmatpush.msra.mxu0 0.0
        %4204 = vmatpush.msra.mxu0 0.0
        %4205 = vmatpush.msra.mxu0 0.0
        %4206 = vmatpush.msra.mxu0 0.0
        %4207 = vmatpush.msra.mxu0 0.0
        %4208 = vmatpush.msra.mxu0 0.0
        %4209 = vmatpush.msra.mxu0 0.0
        %4210 = vmatpush.msra.mxu0 0.0
        %4211 = vmatpush.msra.mxu0 0.0
        %4212 = vmatpush.msra.mxu0 0.0
        %4213 = vmatpush.msra.mxu0 0.0
        %4214 = vmatpush.msra.mxu0 0.0
        %4215 = vmatpush.msra.mxu0 0.0
        %v4216 = vand.u32 %v3861, 4294901760
        %v4217 = vsub.f32 %v3861, %v4216
        %v4218 = vand.u32 %v4217, 4294901760
        %4219 = vmatpush.msra.mxu0 %v4218
        %v4220 = vand.u32 %v3857, 4294901760
        %v4221 = vsub.f32 %v3857, %v4220
        %v4222 = vand.u32 %v4221, 4294901760
        %4223 = vmatpush.msra.mxu0 %v4222
        %v4224 = vand.u32 %v4065, 4294901760
        %4225 = vmatmul.f32.gmra.mxu0 %v4224
        %v4226 = vpop.f32.mrf.mxu0
        %v4227 = vadd.f32 %v4194, %v4226
        %v4228 = vand.u32 %v4068, 4294901760
        %4229 = vmatmul.f32.gmra.mxu0 %v4228
        %v4230 = vpop.f32.mrf.mxu0
        %v4231 = vadd.f32 %v4200, %v4230
        %4232 = vdwg.mxu0
        %4233 = vmatpush.msra.mxu0 0.0
        %4234 = vmatpush.msra.mxu0 0.0
        %4235 = vmatpush.msra.mxu0 0.0
        %4236 = vmatpush.msra.mxu0 0.0
        %4237 = vmatpush.msra.mxu0 0.0
        %4238 = vmatpush.msra.mxu0 0.0
        %4239 = vmatpush.msra.mxu0 0.0
        %4240 = vmatpush.msra.mxu0 0.0
        %4241 = vmatpush.msra.mxu0 0.0
        %4242 = vmatpush.msra.mxu0 0.0
        %4243 = vmatpush.msra.mxu0 0.0
        %4244 = vmatpush.msra.mxu0 0.0
        %4245 = vmatpush.msra.mxu0 0.0
        %4246 = vmatpush.msra.mxu0 0.0
        %v4247 = vand.u32 %v3861, 4294901760
        %4248 = vmatpush.msra.mxu0 %v4247
        %v4249 = vand.u32 %v3857, 4294901760
        %4250 = vmatpush.msra.mxu0 %v4249
        %v4251 = vand.u32 %v4065, 4294901760
        %4252 = vmatmul.f32.gmra.mxu0 %v4251
        %v4253 = vpop.f32.mrf.mxu0
        %v4254 = vadd.f32 %v4227, %v4253
        %v4255 = vand.u32 %v4068, 4294901760
        %4256 = vmatmul.f32.gmra.mxu0 %v4255
        %v4257 = vpop.f32.mrf.mxu0
        %v4258 = vadd.f32 %v4231, %v4257
        %4259 = vdwg.mxu0
        %v4260 = vadd.f32 %v4056, %v4254
        %v4261 = vadd.f32 %v4060, %v4258
        %v4262 = vld [vmem:[%s10] sm:$0x1]
        %v4264 = vperm.slane %v4262, 0
        %v4266 = vadd.f32 %v4260, %v4264
        %v4267 = vadd.f32 %v4261, %v4264
        %v4268 = vmax.f32 %v4266, 0.0
        %v4269 = vmax.f32 %v4267, 0.0
        %v4270 = vld [vmem:[#allocation19] sm:$0xff]
        %v4271 = vld [vmem:[#allocation19 + $0x8] sm:$0xff]
        %v4273 = vsel %vm3865, %v4270, 0
        %v4276 = vsel %vm3865, %v4271, 0
        %4278 = vmatpush.msra.mxu0 0.0
        %4279 = vmatpush.msra.mxu0 0.0
        %4280 = vmatpush.msra.mxu0 0.0
        %4281 = vmatpush.msra.mxu0 0.0
        %4282 = vmatpush.msra.mxu0 0.0
        %4283 = vmatpush.msra.mxu0 0.0
        %4284 = vmatpush.msra.mxu0 0.0
        %4285 = vmatpush.msra.mxu0 0.0
        %4286 = vmatpush.msra.mxu0 0.0
        %4287 = vmatpush.msra.mxu0 0.0
        %4288 = vmatpush.msra.mxu0 0.0
        %4289 = vmatpush.msra.mxu0 0.0
        %4290 = vmatpush.msra.mxu0 0.0
        %4291 = vmatpush.msra.mxu0 0.0
        %v4292 = vand.u32 %v4269, 4294901760
        %4293 = vmatpush.msra.mxu0 %v4292
        %v4294 = vand.u32 %v4268, 4294901760
        %4295 = vmatpush.msra.mxu0 %v4294
        %v4296 = vand.u32 %v4273, 4294901760
        %v4297 = vsub.f32 %v4273, %v4296
        %v4298 = vand.u32 %v4297, 4294901760
        %v4299 = vsub.f32 %v4297, %v4298
        %v4300 = vand.u32 %v4299, 4294901760
        %4301 = vmatmul.f32.gmra.mxu0 %v4300
        %v4302 = vpop.f32.mrf.mxu0
        %v4303 = vadd.f32 0.0, %v4302
        %v4304 = vand.u32 %v4276, 4294901760
        %v4305 = vsub.f32 %v4276, %v4304
        %v4306 = vand.u32 %v4305, 4294901760
        %v4307 = vsub.f32 %v4305, %v4306
        %v4308 = vand.u32 %v4307, 4294901760
        %4309 = vmatmul.f32.gmra.mxu0 %v4308
        %v4310 = vpop.f32.mrf.mxu0
        %v4311 = vadd.f32 0.0, %v4310
        %4312 = vdwg.mxu0
        %4313 = vmatpush.msra.mxu0 0.0
        %4314 = vmatpush.msra.mxu0 0.0
        %4315 = vmatpush.msra.mxu0 0.0
        %4316 = vmatpush.msra.mxu0 0.0
        %4317 = vmatpush.msra.mxu0 0.0
        %4318 = vmatpush.msra.mxu0 0.0
        %4319 = vmatpush.msra.mxu0 0.0
        %4320 = vmatpush.msra.mxu0 0.0
        %4321 = vmatpush.msra.mxu0 0.0
        %4322 = vmatpush.msra.mxu0 0.0
        %4323 = vmatpush.msra.mxu0 0.0
        %4324 = vmatpush.msra.mxu0 0.0
        %4325 = vmatpush.msra.mxu0 0.0
        %4326 = vmatpush.msra.mxu0 0.0
        %v4327 = vand.u32 %v4269, 4294901760
        %v4328 = vsub.f32 %v4269, %v4327
        %v4329 = vand.u32 %v4328, 4294901760
        %v4330 = vsub.f32 %v4328, %v4329
        %v4331 = vand.u32 %v4330, 4294901760
        %4332 = vmatpush.msra.mxu0 %v4331
        %v4333 = vand.u32 %v4268, 4294901760
        %v4334 = vsub.f32 %v4268, %v4333
        %v4335 = vand.u32 %v4334, 4294901760
        %v4336 = vsub.f32 %v4334, %v4335
        %v4337 = vand.u32 %v4336, 4294901760
        %4338 = vmatpush.msra.mxu0 %v4337
        %v4339 = vand.u32 %v4273, 4294901760
        %4340 = vmatmul.f32.gmra.mxu0 %v4339
        %v4341 = vpop.f32.mrf.mxu0
        %v4342 = vadd.f32 %v4303, %v4341
        %v4343 = vand.u32 %v4276, 4294901760
        %4344 = vmatmul.f32.gmra.mxu0 %v4343
        %v4345 = vpop.f32.mrf.mxu0
        %v4346 = vadd.f32 %v4311, %v4345
        %4347 = vdwg.mxu0
        %4348 = vmatpush.msra.mxu0 0.0
        %4349 = vmatpush.msra.mxu0 0.0
        %4350 = vmatpush.msra.mxu0 0.0
        %4351 = vmatpush.msra.mxu0 0.0
        %4352 = vmatpush.msra.mxu0 0.0
        %4353 = vmatpush.msra.mxu0 0.0
        %4354 = vmatpush.msra.mxu0 0.0
        %4355 = vmatpush.msra.mxu0 0.0
        %4356 = vmatpush.msra.mxu0 0.0
        %4357 = vmatpush.msra.mxu0 0.0
        %4358 = vmatpush.msra.mxu0 0.0
        %4359 = vmatpush.msra.mxu0 0.0
        %4360 = vmatpush.msra.mxu0 0.0
        %4361 = vmatpush.msra.mxu0 0.0
        %v4362 = vand.u32 %v4269, 4294901760
        %v4363 = vsub.f32 %v4269, %v4362
        %4364 = vmatpush.msra.mxu0 %v4363
        %v4365 = vand.u32 %v4268, 4294901760
        %v4366 = vsub.f32 %v4268, %v4365
        %4367 = vmatpush.msra.mxu0 %v4366
        %v4368 = vand.u32 %v4273, 4294901760
        %v4369 = vsub.f32 %v4273, %v4368
        %4370 = vmatmul.f32.gmra.mxu0 %v4369
        %v4371 = vpop.f32.mrf.mxu0
        %v4372 = vadd.f32 %v4342, %v4371
        %v4373 = vand.u32 %v4276, 4294901760
        %v4374 = vsub.f32 %v4276, %v4373
        %4375 = vmatmul.f32.gmra.mxu0 %v4374
        %v4376 = vpop.f32.mrf.mxu0
        %v4377 = vadd.f32 %v4346, %v4376
        %4378 = vdwg.mxu0
        %4379 = vmatpush.msra.mxu0 0.0
        %4380 = vmatpush.msra.mxu0 0.0
        %4381 = vmatpush.msra.mxu0 0.0
        %4382 = vmatpush.msra.mxu0 0.0
        %4383 = vmatpush.msra.mxu0 0.0
        %4384 = vmatpush.msra.mxu0 0.0
        %4385 = vmatpush.msra.mxu0 0.0
        %4386 = vmatpush.msra.mxu0 0.0
        %4387 = vmatpush.msra.mxu0 0.0
        %4388 = vmatpush.msra.mxu0 0.0
        %4389 = vmatpush.msra.mxu0 0.0
        %4390 = vmatpush.msra.mxu0 0.0
        %4391 = vmatpush.msra.mxu0 0.0
        %4392 = vmatpush.msra.mxu0 0.0
        %v4393 = vand.u32 %v4269, 4294901760
        %4394 = vmatpush.msra.mxu0 %v4393
        %v4395 = vand.u32 %v4268, 4294901760
        %4396 = vmatpush.msra.mxu0 %v4395
        %v4397 = vand.u32 %v4273, 4294901760
        %v4398 = vsub.f32 %v4273, %v4397
        %v4399 = vand.u32 %v4398, 4294901760
        %4400 = vmatmul.f32.gmra.mxu0 %v4399
        %v4401 = vpop.f32.mrf.mxu0
        %v4402 = vadd.f32 %v4372, %v4401
        %v4403 = vand.u32 %v4276, 4294901760
        %v4404 = vsub.f32 %v4276, %v4403
        %v4405 = vand.u32 %v4404, 4294901760
        %4406 = vmatmul.f32.gmra.mxu0 %v4405
        %v4407 = vpop.f32.mrf.mxu0
        %v4408 = vadd.f32 %v4377, %v4407
        %4409 = vdwg.mxu0
        %4410 = vmatpush.msra.mxu0 0.0
        %4411 = vmatpush.msra.mxu0 0.0
        %4412 = vmatpush.msra.mxu0 0.0
        %4413 = vmatpush.msra.mxu0 0.0
        %4414 = vmatpush.msra.mxu0 0.0
        %4415 = vmatpush.msra.mxu0 0.0
        %4416 = vmatpush.msra.mxu0 0.0
        %4417 = vmatpush.msra.mxu0 0.0
        %4418 = vmatpush.msra.mxu0 0.0
        %4419 = vmatpush.msra.mxu0 0.0
        %4420 = vmatpush.msra.mxu0 0.0
        %4421 = vmatpush.msra.mxu0 0.0
        %4422 = vmatpush.msra.mxu0 0.0
        %4423 = vmatpush.msra.mxu0 0.0
        %v4424 = vand.u32 %v4269, 4294901760
        %v4425 = vsub.f32 %v4269, %v4424
        %v4426 = vand.u32 %v4425, 4294901760
        %4427 = vmatpush.msra.mxu0 %v4426
        %v4428 = vand.u32 %v4268, 4294901760
        %v4429 = vsub.f32 %v4268, %v4428
        %v4430 = vand.u32 %v4429, 4294901760
        %4431 = vmatpush.msra.mxu0 %v4430
        %v4432 = vand.u32 %v4273, 4294901760
        %4433 = vmatmul.f32.gmra.mxu0 %v4432
        %v4434 = vpop.f32.mrf.mxu0
        %v4435 = vadd.f32 %v4402, %v4434
        %v4436 = vand.u32 %v4276, 4294901760
        %4437 = vmatmul.f32.gmra.mxu0 %v4436
        %v4438 = vpop.f32.mrf.mxu0
        %v4439 = vadd.f32 %v4408, %v4438
        %4440 = vdwg.mxu0
        %4441 = vmatpush.msra.mxu0 0.0
        %4442 = vmatpush.msra.mxu0 0.0
        %4443 = vmatpush.msra.mxu0 0.0
        %4444 = vmatpush.msra.mxu0 0.0
        %4445 = vmatpush.msra.mxu0 0.0
        %4446 = vmatpush.msra.mxu0 0.0
        %4447 = vmatpush.msra.mxu0 0.0
        %4448 = vmatpush.msra.mxu0 0.0
        %4449 = vmatpush.msra.mxu0 0.0
        %4450 = vmatpush.msra.mxu0 0.0
        %4451 = vmatpush.msra.mxu0 0.0
        %4452 = vmatpush.msra.mxu0 0.0
        %4453 = vmatpush.msra.mxu0 0.0
        %4454 = vmatpush.msra.mxu0 0.0
        %v4455 = vand.u32 %v4269, 4294901760
        %4456 = vmatpush.msra.mxu0 %v4455
        %v4457 = vand.u32 %v4268, 4294901760
        %4458 = vmatpush.msra.mxu0 %v4457
        %v4459 = vand.u32 %v4273, 4294901760
        %4460 = vmatmul.f32.gmra.mxu0 %v4459
        %v4461 = vpop.f32.mrf.mxu0
        %v4462 = vadd.f32 %v4435, %v4461
        %v4463 = vand.u32 %v4276, 4294901760
        %4464 = vmatmul.f32.gmra.mxu0 %v4463
        %v4465 = vpop.f32.mrf.mxu0
        %v4466 = vadd.f32 %v4439, %v4465
        %4467 = vdwg.mxu0
        %v4468 = vld [vmem:[#allocation20] sm:$0xff]
        %v4469 = vld [vmem:[#allocation20 + $0x8] sm:$0xff]
        %v4470 = vld [vmem:[#allocation20 + $0x10] sm:$0xff]
        %v4471 = vld [vmem:[#allocation20 + $0x18] sm:$0xff]
        %v4472 = vld [vmem:[#allocation20 + $0x20] sm:$0xff]
        %v4473 = vld [vmem:[#allocation20 + $0x28] sm:$0xff]
        %v4474 = vld [vmem:[#allocation20 + $0x30] sm:$0xff]
        %v4475 = vld [vmem:[#allocation20 + $0x38] sm:$0xff]
        %v4476 = vld [vmem:[#allocation20 + $0x40] sm:$0xff]
        %v4477 = vld [vmem:[#allocation20 + $0x48] sm:$0xff]
        %v4478 = vld [vmem:[#allocation20 + $0x50] sm:$0xff]
        %v4479 = vld [vmem:[#allocation20 + $0x58] sm:$0xff]
        %v4480 = vld [vmem:[#allocation20 + $0x60] sm:$0xff]
        %v4481 = vld [vmem:[#allocation20 + $0x68] sm:$0xff]
        %v4482 = vld [vmem:[#allocation20 + $0x70] sm:$0xff]
        %v4483 = vld [vmem:[#allocation20 + $0x78] sm:$0xff]
        %v4484 = vand.u32 %v4483, 4294901760
        %4485 = vmatpush.msra.mxu0 %v4484
        %v4486 = vand.u32 %v4482, 4294901760
        %4487 = vmatpush.msra.mxu0 %v4486
        %v4488 = vand.u32 %v4481, 4294901760
        %4489 = vmatpush.msra.mxu0 %v4488
        %v4490 = vand.u32 %v4480, 4294901760
        %4491 = vmatpush.msra.mxu0 %v4490
        %v4492 = vand.u32 %v4479, 4294901760
        %4493 = vmatpush.msra.mxu0 %v4492
        %v4494 = vand.u32 %v4478, 4294901760
        %4495 = vmatpush.msra.mxu0 %v4494
        %v4496 = vand.u32 %v4477, 4294901760
        %4497 = vmatpush.msra.mxu0 %v4496
        %v4498 = vand.u32 %v4476, 4294901760
        %4499 = vmatpush.msra.mxu0 %v4498
        %v4500 = vand.u32 %v4475, 4294901760
        %4501 = vmatpush.msra.mxu0 %v4500
        %v4502 = vand.u32 %v4474, 4294901760
        %4503 = vmatpush.msra.mxu0 %v4502
        %v4504 = vand.u32 %v4473, 4294901760
        %4505 = vmatpush.msra.mxu0 %v4504
        %v4506 = vand.u32 %v4472, 4294901760
        %4507 = vmatpush.msra.mxu0 %v4506
        %v4508 = vand.u32 %v4471, 4294901760
        %4509 = vmatpush.msra.mxu0 %v4508
        %v4510 = vand.u32 %v4470, 4294901760
        %4511 = vmatpush.msra.mxu0 %v4510
        %v4512 = vand.u32 %v4469, 4294901760
        %4513 = vmatpush.msra.mxu0 %v4512
        %v4514 = vand.u32 %v4468, 4294901760
        %4515 = vmatpush.msra.mxu0 %v4514
        %v4516 = vand.u32 %v4462, 4294901760
        %v4517 = vsub.f32 %v4462, %v4516
        %v4518 = vand.u32 %v4517, 4294901760
        %v4519 = vsub.f32 %v4517, %v4518
        %v4520 = vand.u32 %v4519, 4294901760
        %4521 = vmatmul.f32.gmra.mxu0 %v4520
        %v4522 = vpop.f32.mrf.mxu0
        %v4523 = vadd.f32 0.0, %v4522
        %v4524 = vand.u32 %v4466, 4294901760
        %v4525 = vsub.f32 %v4466, %v4524
        %v4526 = vand.u32 %v4525, 4294901760
        %v4527 = vsub.f32 %v4525, %v4526
        %v4528 = vand.u32 %v4527, 4294901760
        %4529 = vmatmul.f32.gmra.mxu0 %v4528
        %v4530 = vpop.f32.mrf.mxu0
        %v4531 = vadd.f32 0.0, %v4530
        %4532 = vdwg.mxu0
        %v4533 = vand.u32 %v4483, 4294901760
        %v4534 = vsub.f32 %v4483, %v4533
        %v4535 = vand.u32 %v4534, 4294901760
        %v4536 = vsub.f32 %v4534, %v4535
        %v4537 = vand.u32 %v4536, 4294901760
        %4538 = vmatpush.msra.mxu0 %v4537
        %v4539 = vand.u32 %v4482, 4294901760
        %v4540 = vsub.f32 %v4482, %v4539
        %v4541 = vand.u32 %v4540, 4294901760
        %v4542 = vsub.f32 %v4540, %v4541
        %v4543 = vand.u32 %v4542, 4294901760
        %4544 = vmatpush.msra.mxu0 %v4543
        %v4545 = vand.u32 %v4481, 4294901760
        %v4546 = vsub.f32 %v4481, %v4545
        %v4547 = vand.u32 %v4546, 4294901760
        %v4548 = vsub.f32 %v4546, %v4547
        %v4549 = vand.u32 %v4548, 4294901760
        %4550 = vmatpush.msra.mxu0 %v4549
        %v4551 = vand.u32 %v4480, 4294901760
        %v4552 = vsub.f32 %v4480, %v4551
        %v4553 = vand.u32 %v4552, 4294901760
        %v4554 = vsub.f32 %v4552, %v4553
        %v4555 = vand.u32 %v4554, 4294901760
        %4556 = vmatpush.msra.mxu0 %v4555
        %v4557 = vand.u32 %v4479, 4294901760
        %v4558 = vsub.f32 %v4479, %v4557
        %v4559 = vand.u32 %v4558, 4294901760
        %v4560 = vsub.f32 %v4558, %v4559
        %v4561 = vand.u32 %v4560, 4294901760
        %4562 = vmatpush.msra.mxu0 %v4561
        %v4563 = vand.u32 %v4478, 4294901760
        %v4564 = vsub.f32 %v4478, %v4563
        %v4565 = vand.u32 %v4564, 4294901760
        %v4566 = vsub.f32 %v4564, %v4565
        %v4567 = vand.u32 %v4566, 4294901760
        %4568 = vmatpush.msra.mxu0 %v4567
        %v4569 = vand.u32 %v4477, 4294901760
        %v4570 = vsub.f32 %v4477, %v4569
        %v4571 = vand.u32 %v4570, 4294901760
        %v4572 = vsub.f32 %v4570, %v4571
        %v4573 = vand.u32 %v4572, 4294901760
        %4574 = vmatpush.msra.mxu0 %v4573
        %v4575 = vand.u32 %v4476, 4294901760
        %v4576 = vsub.f32 %v4476, %v4575
        %v4577 = vand.u32 %v4576, 4294901760
        %v4578 = vsub.f32 %v4576, %v4577
        %v4579 = vand.u32 %v4578, 4294901760
        %4580 = vmatpush.msra.mxu0 %v4579
        %v4581 = vand.u32 %v4475, 4294901760
        %v4582 = vsub.f32 %v4475, %v4581
        %v4583 = vand.u32 %v4582, 4294901760
        %v4584 = vsub.f32 %v4582, %v4583
        %v4585 = vand.u32 %v4584, 4294901760
        %4586 = vmatpush.msra.mxu0 %v4585
        %v4587 = vand.u32 %v4474, 4294901760
        %v4588 = vsub.f32 %v4474, %v4587
        %v4589 = vand.u32 %v4588, 4294901760
        %v4590 = vsub.f32 %v4588, %v4589
        %v4591 = vand.u32 %v4590, 4294901760
        %4592 = vmatpush.msra.mxu0 %v4591
        %v4593 = vand.u32 %v4473, 4294901760
        %v4594 = vsub.f32 %v4473, %v4593
        %v4595 = vand.u32 %v4594, 4294901760
        %v4596 = vsub.f32 %v4594, %v4595
        %v4597 = vand.u32 %v4596, 4294901760
        %4598 = vmatpush.msra.mxu0 %v4597
        %v4599 = vand.u32 %v4472, 4294901760
        %v4600 = vsub.f32 %v4472, %v4599
        %v4601 = vand.u32 %v4600, 4294901760
        %v4602 = vsub.f32 %v4600, %v4601
        %v4603 = vand.u32 %v4602, 4294901760
        %4604 = vmatpush.msra.mxu0 %v4603
        %v4605 = vand.u32 %v4471, 4294901760
        %v4606 = vsub.f32 %v4471, %v4605
        %v4607 = vand.u32 %v4606, 4294901760
        %v4608 = vsub.f32 %v4606, %v4607
        %v4609 = vand.u32 %v4608, 4294901760
        %4610 = vmatpush.msra.mxu0 %v4609
        %v4611 = vand.u32 %v4470, 4294901760
        %v4612 = vsub.f32 %v4470, %v4611
        %v4613 = vand.u32 %v4612, 4294901760
        %v4614 = vsub.f32 %v4612, %v4613
        %v4615 = vand.u32 %v4614, 4294901760
        %4616 = vmatpush.msra.mxu0 %v4615
        %v4617 = vand.u32 %v4469, 4294901760
        %v4618 = vsub.f32 %v4469, %v4617
        %v4619 = vand.u32 %v4618, 4294901760
        %v4620 = vsub.f32 %v4618, %v4619
        %v4621 = vand.u32 %v4620, 4294901760
        %4622 = vmatpush.msra.mxu0 %v4621
        %v4623 = vand.u32 %v4468, 4294901760
        %v4624 = vsub.f32 %v4468, %v4623
        %v4625 = vand.u32 %v4624, 4294901760
        %v4626 = vsub.f32 %v4624, %v4625
        %v4627 = vand.u32 %v4626, 4294901760
        %4628 = vmatpush.msra.mxu0 %v4627
        %v4629 = vand.u32 %v4462, 4294901760
        %4630 = vmatmul.f32.gmra.mxu0 %v4629
        %v4631 = vpop.f32.mrf.mxu0
        %v4632 = vadd.f32 %v4523, %v4631
        %v4633 = vand.u32 %v4466, 4294901760
        %4634 = vmatmul.f32.gmra.mxu0 %v4633
        %v4635 = vpop.f32.mrf.mxu0
        %v4636 = vadd.f32 %v4531, %v4635
        %4637 = vdwg.mxu0
        %v4638 = vand.u32 %v4483, 4294901760
        %v4639 = vsub.f32 %v4483, %v4638
        %4640 = vmatpush.msra.mxu0 %v4639
        %v4641 = vand.u32 %v4482, 4294901760
        %v4642 = vsub.f32 %v4482, %v4641
        %4643 = vmatpush.msra.mxu0 %v4642
        %v4644 = vand.u32 %v4481, 4294901760
        %v4645 = vsub.f32 %v4481, %v4644
        %4646 = vmatpush.msra.mxu0 %v4645
        %v4647 = vand.u32 %v4480, 4294901760
        %v4648 = vsub.f32 %v4480, %v4647
        %4649 = vmatpush.msra.mxu0 %v4648
        %v4650 = vand.u32 %v4479, 4294901760
        %v4651 = vsub.f32 %v4479, %v4650
        %4652 = vmatpush.msra.mxu0 %v4651
        %v4653 = vand.u32 %v4478, 4294901760
        %v4654 = vsub.f32 %v4478, %v4653
        %4655 = vmatpush.msra.mxu0 %v4654
        %v4656 = vand.u32 %v4477, 4294901760
        %v4657 = vsub.f32 %v4477, %v4656
        %4658 = vmatpush.msra.mxu0 %v4657
        %v4659 = vand.u32 %v4476, 4294901760
        %v4660 = vsub.f32 %v4476, %v4659
        %4661 = vmatpush.msra.mxu0 %v4660
        %v4662 = vand.u32 %v4475, 4294901760
        %v4663 = vsub.f32 %v4475, %v4662
        %4664 = vmatpush.msra.mxu0 %v4663
        %v4665 = vand.u32 %v4474, 4294901760
        %v4666 = vsub.f32 %v4474, %v4665
        %4667 = vmatpush.msra.mxu0 %v4666
        %v4668 = vand.u32 %v4473, 4294901760
        %v4669 = vsub.f32 %v4473, %v4668
        %4670 = vmatpush.msra.mxu0 %v4669
        %v4671 = vand.u32 %v4472, 4294901760
        %v4672 = vsub.f32 %v4472, %v4671
        %4673 = vmatpush.msra.mxu0 %v4672
        %v4674 = vand.u32 %v4471, 4294901760
        %v4675 = vsub.f32 %v4471, %v4674
        %4676 = vmatpush.msra.mxu0 %v4675
        %v4677 = vand.u32 %v4470, 4294901760
        %v4678 = vsub.f32 %v4470, %v4677
        %4679 = vmatpush.msra.mxu0 %v4678
        %v4680 = vand.u32 %v4469, 4294901760
        %v4681 = vsub.f32 %v4469, %v4680
        %4682 = vmatpush.msra.mxu0 %v4681
        %v4683 = vand.u32 %v4468, 4294901760
        %v4684 = vsub.f32 %v4468, %v4683
        %4685 = vmatpush.msra.mxu0 %v4684
        %v4686 = vand.u32 %v4462, 4294901760
        %v4687 = vsub.f32 %v4462, %v4686
        %4688 = vmatmul.f32.gmra.mxu0 %v4687
        %v4689 = vpop.f32.mrf.mxu0
        %v4690 = vadd.f32 %v4632, %v4689
        %v4691 = vand.u32 %v4466, 4294901760
        %v4692 = vsub.f32 %v4466, %v4691
        %4693 = vmatmul.f32.gmra.mxu0 %v4692
        %v4694 = vpop.f32.mrf.mxu0
        %v4695 = vadd.f32 %v4636, %v4694
        %4696 = vdwg.mxu0
        %v4697 = vand.u32 %v4483, 4294901760
        %4698 = vmatpush.msra.mxu0 %v4697
        %v4699 = vand.u32 %v4482, 4294901760
        %4700 = vmatpush.msra.mxu0 %v4699
        %v4701 = vand.u32 %v4481, 4294901760
        %4702 = vmatpush.msra.mxu0 %v4701
        %v4703 = vand.u32 %v4480, 4294901760
        %4704 = vmatpush.msra.mxu0 %v4703
        %v4705 = vand.u32 %v4479, 4294901760
        %4706 = vmatpush.msra.mxu0 %v4705
        %v4707 = vand.u32 %v4478, 4294901760
        %4708 = vmatpush.msra.mxu0 %v4707
        %v4709 = vand.u32 %v4477, 4294901760
        %4710 = vmatpush.msra.mxu0 %v4709
        %v4711 = vand.u32 %v4476, 4294901760
        %4712 = vmatpush.msra.mxu0 %v4711
        %v4713 = vand.u32 %v4475, 4294901760
        %4714 = vmatpush.msra.mxu0 %v4713
        %v4715 = vand.u32 %v4474, 4294901760
        %4716 = vmatpush.msra.mxu0 %v4715
        %v4717 = vand.u32 %v4473, 4294901760
        %4718 = vmatpush.msra.mxu0 %v4717
        %v4719 = vand.u32 %v4472, 4294901760
        %4720 = vmatpush.msra.mxu0 %v4719
        %v4721 = vand.u32 %v4471, 4294901760
        %4722 = vmatpush.msra.mxu0 %v4721
        %v4723 = vand.u32 %v4470, 4294901760
        %4724 = vmatpush.msra.mxu0 %v4723
        %v4725 = vand.u32 %v4469, 4294901760
        %4726 = vmatpush.msra.mxu0 %v4725
        %v4727 = vand.u32 %v4468, 4294901760
        %4728 = vmatpush.msra.mxu0 %v4727
        %v4729 = vand.u32 %v4462, 4294901760
        %v4730 = vsub.f32 %v4462, %v4729
        %v4731 = vand.u32 %v4730, 4294901760
        %4732 = vmatmul.f32.gmra.mxu0 %v4731
        %v4733 = vpop.f32.mrf.mxu0
        %v4734 = vadd.f32 %v4690, %v4733
        %v4735 = vand.u32 %v4466, 4294901760
        %v4736 = vsub.f32 %v4466, %v4735
        %v4737 = vand.u32 %v4736, 4294901760
        %4738 = vmatmul.f32.gmra.mxu0 %v4737
        %v4739 = vpop.f32.mrf.mxu0
        %v4740 = vadd.f32 %v4695, %v4739
        %4741 = vdwg.mxu0
        %v4742 = vand.u32 %v4483, 4294901760
        %v4743 = vsub.f32 %v4483, %v4742
        %v4744 = vand.u32 %v4743, 4294901760
        %4745 = vmatpush.msra.mxu0 %v4744
        %v4746 = vand.u32 %v4482, 4294901760
        %v4747 = vsub.f32 %v4482, %v4746
        %v4748 = vand.u32 %v4747, 4294901760
        %4749 = vmatpush.msra.mxu0 %v4748
        %v4750 = vand.u32 %v4481, 4294901760
        %v4751 = vsub.f32 %v4481, %v4750
        %v4752 = vand.u32 %v4751, 4294901760
        %4753 = vmatpush.msra.mxu0 %v4752
        %v4754 = vand.u32 %v4480, 4294901760
        %v4755 = vsub.f32 %v4480, %v4754
        %v4756 = vand.u32 %v4755, 4294901760
        %4757 = vmatpush.msra.mxu0 %v4756
        %v4758 = vand.u32 %v4479, 4294901760
        %v4759 = vsub.f32 %v4479, %v4758
        %v4760 = vand.u32 %v4759, 4294901760
        %4761 = vmatpush.msra.mxu0 %v4760
        %v4762 = vand.u32 %v4478, 4294901760
        %v4763 = vsub.f32 %v4478, %v4762
        %v4764 = vand.u32 %v4763, 4294901760
        %4765 = vmatpush.msra.mxu0 %v4764
        %v4766 = vand.u32 %v4477, 4294901760
        %v4767 = vsub.f32 %v4477, %v4766
        %v4768 = vand.u32 %v4767, 4294901760
        %4769 = vmatpush.msra.mxu0 %v4768
        %v4770 = vand.u32 %v4476, 4294901760
        %v4771 = vsub.f32 %v4476, %v4770
        %v4772 = vand.u32 %v4771, 4294901760
        %4773 = vmatpush.msra.mxu0 %v4772
        %v4774 = vand.u32 %v4475, 4294901760
        %v4775 = vsub.f32 %v4475, %v4774
        %v4776 = vand.u32 %v4775, 4294901760
        %4777 = vmatpush.msra.mxu0 %v4776
        %v4778 = vand.u32 %v4474, 4294901760
        %v4779 = vsub.f32 %v4474, %v4778
        %v4780 = vand.u32 %v4779, 4294901760
        %4781 = vmatpush.msra.mxu0 %v4780
        %v4782 = vand.u32 %v4473, 4294901760
        %v4783 = vsub.f32 %v4473, %v4782
        %v4784 = vand.u32 %v4783, 4294901760
        %4785 = vmatpush.msra.mxu0 %v4784
        %v4786 = vand.u32 %v4472, 4294901760
        %v4787 = vsub.f32 %v4472, %v4786
        %v4788 = vand.u32 %v4787, 4294901760
        %4789 = vmatpush.msra.mxu0 %v4788
        %v4790 = vand.u32 %v4471, 4294901760
        %v4791 = vsub.f32 %v4471, %v4790
        %v4792 = vand.u32 %v4791, 4294901760
        %4793 = vmatpush.msra.mxu0 %v4792
        %v4794 = vand.u32 %v4470, 4294901760
        %v4795 = vsub.f32 %v4470, %v4794
        %v4796 = vand.u32 %v4795, 4294901760
        %4797 = vmatpush.msra.mxu0 %v4796
        %v4798 = vand.u32 %v4469, 4294901760
        %v4799 = vsub.f32 %v4469, %v4798
        %v4800 = vand.u32 %v4799, 4294901760
        %4801 = vmatpush.msra.mxu0 %v4800
        %v4802 = vand.u32 %v4468, 4294901760
        %v4803 = vsub.f32 %v4468, %v4802
        %v4804 = vand.u32 %v4803, 4294901760
        %4805 = vmatpush.msra.mxu0 %v4804
        %v4806 = vand.u32 %v4462, 4294901760
        %4807 = vmatmul.f32.gmra.mxu0 %v4806
        %v4808 = vpop.f32.mrf.mxu0
        %v4809 = vadd.f32 %v4734, %v4808
        %v4810 = vand.u32 %v4466, 4294901760
        %4811 = vmatmul.f32.gmra.mxu0 %v4810
        %v4812 = vpop.f32.mrf.mxu0
        %v4813 = vadd.f32 %v4740, %v4812
        %4814 = vdwg.mxu0
        %v4815 = vand.u32 %v4483, 4294901760
        %4816 = vmatpush.msra.mxu0 %v4815
        %v4817 = vand.u32 %v4482, 4294901760
        %4818 = vmatpush.msra.mxu0 %v4817
        %v4819 = vand.u32 %v4481, 4294901760
        %4820 = vmatpush.msra.mxu0 %v4819
        %v4821 = vand.u32 %v4480, 4294901760
        %4822 = vmatpush.msra.mxu0 %v4821
        %v4823 = vand.u32 %v4479, 4294901760
        %4824 = vmatpush.msra.mxu0 %v4823
        %v4825 = vand.u32 %v4478, 4294901760
        %4826 = vmatpush.msra.mxu0 %v4825
        %v4827 = vand.u32 %v4477, 4294901760
        %4828 = vmatpush.msra.mxu0 %v4827
        %v4829 = vand.u32 %v4476, 4294901760
        %4830 = vmatpush.msra.mxu0 %v4829
        %v4831 = vand.u32 %v4475, 4294901760
        %4832 = vmatpush.msra.mxu0 %v4831
        %v4833 = vand.u32 %v4474, 4294901760
        %4834 = vmatpush.msra.mxu0 %v4833
        %v4835 = vand.u32 %v4473, 4294901760
        %4836 = vmatpush.msra.mxu0 %v4835
        %v4837 = vand.u32 %v4472, 4294901760
        %4838 = vmatpush.msra.mxu0 %v4837
        %v4839 = vand.u32 %v4471, 4294901760
        %4840 = vmatpush.msra.mxu0 %v4839
        %v4841 = vand.u32 %v4470, 4294901760
        %4842 = vmatpush.msra.mxu0 %v4841
        %v4843 = vand.u32 %v4469, 4294901760
        %4844 = vmatpush.msra.mxu0 %v4843
        %v4845 = vand.u32 %v4468, 4294901760
        %4846 = vmatpush.msra.mxu0 %v4845
        %v4847 = vand.u32 %v4462, 4294901760
        %4848 = vmatmul.f32.gmra.mxu0 %v4847
        %v4849 = vpop.f32.mrf.mxu0
        %v4850 = vadd.f32 %v4809, %v4849
        %v4851 = vand.u32 %v4466, 4294901760
        %4852 = vmatmul.f32.gmra.mxu0 %v4851
        %v4853 = vpop.f32.mrf.mxu0
        %v4854 = vadd.f32 %v4813, %v4853
        %4855 = vdwg.mxu0
        %4857 = vrot.lane.b32.xlu0 %v4850, 64
        %v4858 = vpop.permute.xlu0 %4857
        %v4860 = vmax.f32 %v4850, %v4858
        %4862 = vrot.lane.b32.xlu0 %v4854, 64
        %v4863 = vpop.permute.xlu0 %4862
        %v4865 = vmax.f32 %v4854, %v4863
        %v4866 = vmax.f32 %v4860, %v4865
        %v4867 = vld [vmem:[#allocation22] sm:$0xff]
        %v4868 = vld [vmem:[#allocation22 + $0x8] sm:$0xff]
        %v4869 = vld [vmem:[#allocation22 + $0x10] sm:$0xff]
        %v4870 = vld [vmem:[#allocation22 + $0x18] sm:$0xff]
        %v4871 = vld [vmem:[#allocation22 + $0x20] sm:$0xff]
        %v4872 = vld [vmem:[#allocation22 + $0x28] sm:$0xff]
        %v4873 = vld [vmem:[#allocation22 + $0x30] sm:$0xff]
        %v4874 = vld [vmem:[#allocation22 + $0x38] sm:$0xff]
        %v4876 = vsel %vm3052, %v4866, 0
        %4878 = vmatpush.msra.mxu0 0.0
        %4879 = vmatpush.msra.mxu0 0.0
        %4880 = vmatpush.msra.mxu0 0.0
        %4881 = vmatpush.msra.mxu0 0.0
        %4882 = vmatpush.msra.mxu0 0.0
        %4883 = vmatpush.msra.mxu0 0.0
        %4884 = vmatpush.msra.mxu0 0.0
        %4885 = vmatpush.msra.mxu0 0.0
        %v4886 = vand.u32 %v4874, 4294901760
        %4887 = vmatpush.msra.mxu0 %v4886
        %v4888 = vand.u32 %v4873, 4294901760
        %4889 = vmatpush.msra.mxu0 %v4888
        %v4890 = vand.u32 %v4872, 4294901760
        %4891 = vmatpush.msra.mxu0 %v4890
        %v4892 = vand.u32 %v4871, 4294901760
        %4893 = vmatpush.msra.mxu0 %v4892
        %v4894 = vand.u32 %v4870, 4294901760
        %4895 = vmatpush.msra.mxu0 %v4894
        %v4896 = vand.u32 %v4869, 4294901760
        %4897 = vmatpush.msra.mxu0 %v4896
        %v4898 = vand.u32 %v4868, 4294901760
        %4899 = vmatpush.msra.mxu0 %v4898
        %v4900 = vand.u32 %v4867, 4294901760
        %4901 = vmatpush.msra.mxu0 %v4900
        %v4902 = vand.u32 %v4876, 4294901760
        %v4903 = vsub.f32 %v4876, %v4902
        %v4904 = vand.u32 %v4903, 4294901760
        %v4905 = vsub.f32 %v4903, %v4904
        %v4906 = vand.u32 %v4905, 4294901760
        %4907 = vmatmul.f32.gmra.mxu0 %v4906
        %v4908 = vpop.f32.mrf.mxu0
        %v4909 = vadd.f32 0.0, %v4908
        %4910 = vdwg.mxu0
        %4911 = vmatpush.msra.mxu0 0.0
        %4912 = vmatpush.msra.mxu0 0.0
        %4913 = vmatpush.msra.mxu0 0.0
        %4914 = vmatpush.msra.mxu0 0.0
        %4915 = vmatpush.msra.mxu0 0.0
        %4916 = vmatpush.msra.mxu0 0.0
        %4917 = vmatpush.msra.mxu0 0.0
        %4918 = vmatpush.msra.mxu0 0.0
        %v4919 = vand.u32 %v4874, 4294901760
        %v4920 = vsub.f32 %v4874, %v4919
        %v4921 = vand.u32 %v4920, 4294901760
        %v4922 = vsub.f32 %v4920, %v4921
        %v4923 = vand.u32 %v4922, 4294901760
        %4924 = vmatpush.msra.mxu0 %v4923
        %v4925 = vand.u32 %v4873, 4294901760
        %v4926 = vsub.f32 %v4873, %v4925
        %v4927 = vand.u32 %v4926, 4294901760
        %v4928 = vsub.f32 %v4926, %v4927
        %v4929 = vand.u32 %v4928, 4294901760
        %4930 = vmatpush.msra.mxu0 %v4929
        %v4931 = vand.u32 %v4872, 4294901760
        %v4932 = vsub.f32 %v4872, %v4931
        %v4933 = vand.u32 %v4932, 4294901760
        %v4934 = vsub.f32 %v4932, %v4933
        %v4935 = vand.u32 %v4934, 4294901760
        %4936 = vmatpush.msra.mxu0 %v4935
        %v4937 = vand.u32 %v4871, 4294901760
        %v4938 = vsub.f32 %v4871, %v4937
        %v4939 = vand.u32 %v4938, 4294901760
        %v4940 = vsub.f32 %v4938, %v4939
        %v4941 = vand.u32 %v4940, 4294901760
        %4942 = vmatpush.msra.mxu0 %v4941
        %v4943 = vand.u32 %v4870, 4294901760
        %v4944 = vsub.f32 %v4870, %v4943
        %v4945 = vand.u32 %v4944, 4294901760
        %v4946 = vsub.f32 %v4944, %v4945
        %v4947 = vand.u32 %v4946, 4294901760
        %4948 = vmatpush.msra.mxu0 %v4947
        %v4949 = vand.u32 %v4869, 4294901760
        %v4950 = vsub.f32 %v4869, %v4949
        %v4951 = vand.u32 %v4950, 4294901760
        %v4952 = vsub.f32 %v4950, %v4951
        %v4953 = vand.u32 %v4952, 4294901760
        %4954 = vmatpush.msra.mxu0 %v4953
        %v4955 = vand.u32 %v4868, 4294901760
        %v4956 = vsub.f32 %v4868, %v4955
        %v4957 = vand.u32 %v4956, 4294901760
        %v4958 = vsub.f32 %v4956, %v4957
        %v4959 = vand.u32 %v4958, 4294901760
        %4960 = vmatpush.msra.mxu0 %v4959
        %v4961 = vand.u32 %v4867, 4294901760
        %v4962 = vsub.f32 %v4867, %v4961
        %v4963 = vand.u32 %v4962, 4294901760
        %v4964 = vsub.f32 %v4962, %v4963
        %v4965 = vand.u32 %v4964, 4294901760
        %4966 = vmatpush.msra.mxu0 %v4965
        %v4967 = vand.u32 %v4876, 4294901760
        %4968 = vmatmul.f32.gmra.mxu0 %v4967
        %v4969 = vpop.f32.mrf.mxu0
        %v4970 = vadd.f32 %v4909, %v4969
        %4971 = vdwg.mxu0
        %4972 = vmatpush.msra.mxu0 0.0
        %4973 = vmatpush.msra.mxu0 0.0
        %4974 = vmatpush.msra.mxu0 0.0
        %4975 = vmatpush.msra.mxu0 0.0
        %4976 = vmatpush.msra.mxu0 0.0
        %4977 = vmatpush.msra.mxu0 0.0
        %4978 = vmatpush.msra.mxu0 0.0
        %4979 = vmatpush.msra.mxu0 0.0
        %v4980 = vand.u32 %v4874, 4294901760
        %v4981 = vsub.f32 %v4874, %v4980
        %4982 = vmatpush.msra.mxu0 %v4981
        %v4983 = vand.u32 %v4873, 4294901760
        %v4984 = vsub.f32 %v4873, %v4983
        %4985 = vmatpush.msra.mxu0 %v4984
        %v4986 = vand.u32 %v4872, 4294901760
        %v4987 = vsub.f32 %v4872, %v4986
        %4988 = vmatpush.msra.mxu0 %v4987
        %v4989 = vand.u32 %v4871, 4294901760
        %v4990 = vsub.f32 %v4871, %v4989
        %4991 = vmatpush.msra.mxu0 %v4990
        %v4992 = vand.u32 %v4870, 4294901760
        %v4993 = vsub.f32 %v4870, %v4992
        %4994 = vmatpush.msra.mxu0 %v4993
        %v4995 = vand.u32 %v4869, 4294901760
        %v4996 = vsub.f32 %v4869, %v4995
        %4997 = vmatpush.msra.mxu0 %v4996
        %v4998 = vand.u32 %v4868, 4294901760
        %v4999 = vsub.f32 %v4868, %v4998
        %5000 = vmatpush.msra.mxu0 %v4999
        %v5001 = vand.u32 %v4867, 4294901760
        %v5002 = vsub.f32 %v4867, %v5001
        %5003 = vmatpush.msra.mxu0 %v5002
        %v5004 = vand.u32 %v4876, 4294901760
        %v5005 = vsub.f32 %v4876, %v5004
        %5006 = vmatmul.f32.gmra.mxu0 %v5005
        %v5007 = vpop.f32.mrf.mxu0
        %v5008 = vadd.f32 %v4970, %v5007
        %5009 = vdwg.mxu0
        %5010 = vmatpush.msra.mxu0 0.0
        %5011 = vmatpush.msra.mxu0 0.0
        %5012 = vmatpush.msra.mxu0 0.0
        %5013 = vmatpush.msra.mxu0 0.0
        %5014 = vmatpush.msra.mxu0 0.0
        %5015 = vmatpush.msra.mxu0 0.0
        %5016 = vmatpush.msra.mxu0 0.0
        %5017 = vmatpush.msra.mxu0 0.0
        %v5018 = vand.u32 %v4874, 4294901760
        %5019 = vmatpush.msra.mxu0 %v5018
        %v5020 = vand.u32 %v4873, 4294901760
        %5021 = vmatpush.msra.mxu0 %v5020
        %v5022 = vand.u32 %v4872, 4294901760
        %5023 = vmatpush.msra.mxu0 %v5022
        %v5024 = vand.u32 %v4871, 4294901760
        %5025 = vmatpush.msra.mxu0 %v5024
        %v5026 = vand.u32 %v4870, 4294901760
        %5027 = vmatpush.msra.mxu0 %v5026
        %v5028 = vand.u32 %v4869, 4294901760
        %5029 = vmatpush.msra.mxu0 %v5028
        %v5030 = vand.u32 %v4868, 4294901760
        %5031 = vmatpush.msra.mxu0 %v5030
        %v5032 = vand.u32 %v4867, 4294901760
        %5033 = vmatpush.msra.mxu0 %v5032
        %v5034 = vand.u32 %v4876, 4294901760
        %v5035 = vsub.f32 %v4876, %v5034
        %v5036 = vand.u32 %v5035, 4294901760
        %5037 = vmatmul.f32.gmra.mxu0 %v5036
        %v5038 = vpop.f32.mrf.mxu0
        %v5039 = vadd.f32 %v5008, %v5038
        %5040 = vdwg.mxu0
        %5041 = vmatpush.msra.mxu0 0.0
        %5042 = vmatpush.msra.mxu0 0.0
        %5043 = vmatpush.msra.mxu0 0.0
        %5044 = vmatpush.msra.mxu0 0.0
        %5045 = vmatpush.msra.mxu0 0.0
        %5046 = vmatpush.msra.mxu0 0.0
        %5047 = vmatpush.msra.mxu0 0.0
        %5048 = vmatpush.msra.mxu0 0.0
        %v5049 = vand.u32 %v4874, 4294901760
        %v5050 = vsub.f32 %v4874, %v5049
        %v5051 = vand.u32 %v5050, 4294901760
        %5052 = vmatpush.msra.mxu0 %v5051
        %v5053 = vand.u32 %v4873, 4294901760
        %v5054 = vsub.f32 %v4873, %v5053
        %v5055 = vand.u32 %v5054, 4294901760
        %5056 = vmatpush.msra.mxu0 %v5055
        %v5057 = vand.u32 %v4872, 4294901760
        %v5058 = vsub.f32 %v4872, %v5057
        %v5059 = vand.u32 %v5058, 4294901760
        %5060 = vmatpush.msra.mxu0 %v5059
        %v5061 = vand.u32 %v4871, 4294901760
        %v5062 = vsub.f32 %v4871, %v5061
        %v5063 = vand.u32 %v5062, 4294901760
        %5064 = vmatpush.msra.mxu0 %v5063
        %v5065 = vand.u32 %v4870, 4294901760
        %v5066 = vsub.f32 %v4870, %v5065
        %v5067 = vand.u32 %v5066, 4294901760
        %5068 = vmatpush.msra.mxu0 %v5067
        %v5069 = vand.u32 %v4869, 4294901760
        %v5070 = vsub.f32 %v4869, %v5069
        %v5071 = vand.u32 %v5070, 4294901760
        %5072 = vmatpush.msra.mxu0 %v5071
        %v5073 = vand.u32 %v4868, 4294901760
        %v5074 = vsub.f32 %v4868, %v5073
        %v5075 = vand.u32 %v5074, 4294901760
        %5076 = vmatpush.msra.mxu0 %v5075
        %v5077 = vand.u32 %v4867, 4294901760
        %v5078 = vsub.f32 %v4867, %v5077
        %v5079 = vand.u32 %v5078, 4294901760
        %5080 = vmatpush.msra.mxu0 %v5079
        %v5081 = vand.u32 %v4876, 4294901760
        %5082 = vmatmul.f32.gmra.mxu0 %v5081
        %v5083 = vpop.f32.mrf.mxu0
        %v5084 = vadd.f32 %v5039, %v5083
        %5085 = vdwg.mxu0
        %5086 = vmatpush.msra.mxu0 0.0
        %5087 = vmatpush.msra.mxu0 0.0
        %5088 = vmatpush.msra.mxu0 0.0
        %5089 = vmatpush.msra.mxu0 0.0
        %5090 = vmatpush.msra.mxu0 0.0
        %5091 = vmatpush.msra.mxu0 0.0
        %5092 = vmatpush.msra.mxu0 0.0
        %5093 = vmatpush.msra.mxu0 0.0
        %v5094 = vand.u32 %v4874, 4294901760
        %5095 = vmatpush.msra.mxu0 %v5094
        %v5096 = vand.u32 %v4873, 4294901760
        %5097 = vmatpush.msra.mxu0 %v5096
        %v5098 = vand.u32 %v4872, 4294901760
        %5099 = vmatpush.msra.mxu0 %v5098
        %v5100 = vand.u32 %v4871, 4294901760
        %5101 = vmatpush.msra.mxu0 %v5100
        %v5102 = vand.u32 %v4870, 4294901760
        %5103 = vmatpush.msra.mxu0 %v5102
        %v5104 = vand.u32 %v4869, 4294901760
        %5105 = vmatpush.msra.mxu0 %v5104
        %v5106 = vand.u32 %v4868, 4294901760
        %5107 = vmatpush.msra.mxu0 %v5106
        %v5108 = vand.u32 %v4867, 4294901760
        %5109 = vmatpush.msra.mxu0 %v5108
        %v5110 = vand.u32 %v4876, 4294901760
        %5111 = vmatmul.f32.gmra.mxu0 %v5110
        %v5112 = vpop.f32.mrf.mxu0
        %v5113 = vadd.f32 %v5084, %v5112
        %5114 = vdwg.mxu0
        %v5115 = vld [vmem:[#allocation23] sm:$0xff]
        %v5116 = vmul.f32 %v5113, %v5115
        %v5117 = vld [vmem:[#allocation25] sm:$0xff]
        %v5118 = vld [vmem:[#allocation25 + $0x8] sm:$0xff]
        %v5119 = vld [vmem:[#allocation25 + $0x10] sm:$0xff]
        %v5120 = vld [vmem:[#allocation25 + $0x18] sm:$0xff]
        %v5121 = vld [vmem:[#allocation25 + $0x20] sm:$0xff]
        %v5122 = vld [vmem:[#allocation25 + $0x28] sm:$0xff]
        %v5123 = vld [vmem:[#allocation25 + $0x30] sm:$0xff]
        %v5124 = vld [vmem:[#allocation25 + $0x38] sm:$0xff]
        %v5125 = vld [vmem:[#allocation25 + $0x40] sm:$0xff]
        %v5126 = vld [vmem:[#allocation25 + $0x48] sm:$0xff]
        %v5127 = vld [vmem:[#allocation25 + $0x50] sm:$0xff]
        %v5128 = vld [vmem:[#allocation25 + $0x58] sm:$0xff]
        %v5129 = vld [vmem:[#allocation25 + $0x60] sm:$0xff]
        %v5130 = vld [vmem:[#allocation25 + $0x68] sm:$0xff]
        %v5131 = vld [vmem:[#allocation25 + $0x70] sm:$0xff]
        %v5132 = vld [vmem:[#allocation25 + $0x78] sm:$0xff]
        %v5133 = vand.u32 %v5132, 4294901760
        %5134 = vmatpush.msra.mxu0 %v5133
        %v5135 = vand.u32 %v5131, 4294901760
        %5136 = vmatpush.msra.mxu0 %v5135
        %v5137 = vand.u32 %v5130, 4294901760
        %5138 = vmatpush.msra.mxu0 %v5137
        %v5139 = vand.u32 %v5129, 4294901760
        %5140 = vmatpush.msra.mxu0 %v5139
        %v5141 = vand.u32 %v5128, 4294901760
        %5142 = vmatpush.msra.mxu0 %v5141
        %v5143 = vand.u32 %v5127, 4294901760
        %5144 = vmatpush.msra.mxu0 %v5143
        %v5145 = vand.u32 %v5126, 4294901760
        %5146 = vmatpush.msra.mxu0 %v5145
        %v5147 = vand.u32 %v5125, 4294901760
        %5148 = vmatpush.msra.mxu0 %v5147
        %v5149 = vand.u32 %v5124, 4294901760
        %5150 = vmatpush.msra.mxu0 %v5149
        %v5151 = vand.u32 %v5123, 4294901760
        %5152 = vmatpush.msra.mxu0 %v5151
        %v5153 = vand.u32 %v5122, 4294901760
        %5154 = vmatpush.msra.mxu0 %v5153
        %v5155 = vand.u32 %v5121, 4294901760
        %5156 = vmatpush.msra.mxu0 %v5155
        %v5157 = vand.u32 %v5120, 4294901760
        %5158 = vmatpush.msra.mxu0 %v5157
        %v5159 = vand.u32 %v5119, 4294901760
        %5160 = vmatpush.msra.mxu0 %v5159
        %v5161 = vand.u32 %v5118, 4294901760
        %5162 = vmatpush.msra.mxu0 %v5161
        %v5163 = vand.u32 %v5117, 4294901760
        %5164 = vmatpush.msra.mxu0 %v5163
        %v5165 = vand.u32 %v5116, 4294901760
        %v5166 = vsub.f32 %v5116, %v5165
        %v5167 = vand.u32 %v5166, 4294901760
        %v5168 = vsub.f32 %v5166, %v5167
        %v5169 = vand.u32 %v5168, 4294901760
        %5170 = vmatmul.f32.gmra.mxu0 %v5169
        %v5171 = vpop.f32.mrf.mxu0
        %v5172 = vadd.f32 0.0, %v5171
        %5173 = vdwg.mxu0
        %v5174 = vand.u32 %v5132, 4294901760
        %v5175 = vsub.f32 %v5132, %v5174
        %v5176 = vand.u32 %v5175, 4294901760
        %v5177 = vsub.f32 %v5175, %v5176
        %v5178 = vand.u32 %v5177, 4294901760
        %5179 = vmatpush.msra.mxu0 %v5178
        %v5180 = vand.u32 %v5131, 4294901760
        %v5181 = vsub.f32 %v5131, %v5180
        %v5182 = vand.u32 %v5181, 4294901760
        %v5183 = vsub.f32 %v5181, %v5182
        %v5184 = vand.u32 %v5183, 4294901760
        %5185 = vmatpush.msra.mxu0 %v5184
        %v5186 = vand.u32 %v5130, 4294901760
        %v5187 = vsub.f32 %v5130, %v5186
        %v5188 = vand.u32 %v5187, 4294901760
        %v5189 = vsub.f32 %v5187, %v5188
        %v5190 = vand.u32 %v5189, 4294901760
        %5191 = vmatpush.msra.mxu0 %v5190
        %v5192 = vand.u32 %v5129, 4294901760
        %v5193 = vsub.f32 %v5129, %v5192
        %v5194 = vand.u32 %v5193, 4294901760
        %v5195 = vsub.f32 %v5193, %v5194
        %v5196 = vand.u32 %v5195, 4294901760
        %5197 = vmatpush.msra.mxu0 %v5196
        %v5198 = vand.u32 %v5128, 4294901760
        %v5199 = vsub.f32 %v5128, %v5198
        %v5200 = vand.u32 %v5199, 4294901760
        %v5201 = vsub.f32 %v5199, %v5200
        %v5202 = vand.u32 %v5201, 4294901760
        %5203 = vmatpush.msra.mxu0 %v5202
        %v5204 = vand.u32 %v5127, 4294901760
        %v5205 = vsub.f32 %v5127, %v5204
        %v5206 = vand.u32 %v5205, 4294901760
        %v5207 = vsub.f32 %v5205, %v5206
        %v5208 = vand.u32 %v5207, 4294901760
        %5209 = vmatpush.msra.mxu0 %v5208
        %v5210 = vand.u32 %v5126, 4294901760
        %v5211 = vsub.f32 %v5126, %v5210
        %v5212 = vand.u32 %v5211, 4294901760
        %v5213 = vsub.f32 %v5211, %v5212
        %v5214 = vand.u32 %v5213, 4294901760
        %5215 = vmatpush.msra.mxu0 %v5214
        %v5216 = vand.u32 %v5125, 4294901760
        %v5217 = vsub.f32 %v5125, %v5216
        %v5218 = vand.u32 %v5217, 4294901760
        %v5219 = vsub.f32 %v5217, %v5218
        %v5220 = vand.u32 %v5219, 4294901760
        %5221 = vmatpush.msra.mxu0 %v5220
        %v5222 = vand.u32 %v5124, 4294901760
        %v5223 = vsub.f32 %v5124, %v5222
        %v5224 = vand.u32 %v5223, 4294901760
        %v5225 = vsub.f32 %v5223, %v5224
        %v5226 = vand.u32 %v5225, 4294901760
        %5227 = vmatpush.msra.mxu0 %v5226
        %v5228 = vand.u32 %v5123, 4294901760
        %v5229 = vsub.f32 %v5123, %v5228
        %v5230 = vand.u32 %v5229, 4294901760
        %v5231 = vsub.f32 %v5229, %v5230
        %v5232 = vand.u32 %v5231, 4294901760
        %5233 = vmatpush.msra.mxu0 %v5232
        %v5234 = vand.u32 %v5122, 4294901760
        %v5235 = vsub.f32 %v5122, %v5234
        %v5236 = vand.u32 %v5235, 4294901760
        %v5237 = vsub.f32 %v5235, %v5236
        %v5238 = vand.u32 %v5237, 4294901760
        %5239 = vmatpush.msra.mxu0 %v5238
        %v5240 = vand.u32 %v5121, 4294901760
        %v5241 = vsub.f32 %v5121, %v5240
        %v5242 = vand.u32 %v5241, 4294901760
        %v5243 = vsub.f32 %v5241, %v5242
        %v5244 = vand.u32 %v5243, 4294901760
        %5245 = vmatpush.msra.mxu0 %v5244
        %v5246 = vand.u32 %v5120, 4294901760
        %v5247 = vsub.f32 %v5120, %v5246
        %v5248 = vand.u32 %v5247, 4294901760
        %v5249 = vsub.f32 %v5247, %v5248
        %v5250 = vand.u32 %v5249, 4294901760
        %5251 = vmatpush.msra.mxu0 %v5250
        %v5252 = vand.u32 %v5119, 4294901760
        %v5253 = vsub.f32 %v5119, %v5252
        %v5254 = vand.u32 %v5253, 4294901760
        %v5255 = vsub.f32 %v5253, %v5254
        %v5256 = vand.u32 %v5255, 4294901760
        %5257 = vmatpush.msra.mxu0 %v5256
        %v5258 = vand.u32 %v5118, 4294901760
        %v5259 = vsub.f32 %v5118, %v5258
        %v5260 = vand.u32 %v5259, 4294901760
        %v5261 = vsub.f32 %v5259, %v5260
        %v5262 = vand.u32 %v5261, 4294901760
        %5263 = vmatpush.msra.mxu0 %v5262
        %v5264 = vand.u32 %v5117, 4294901760
        %v5265 = vsub.f32 %v5117, %v5264
        %v5266 = vand.u32 %v5265, 4294901760
        %v5267 = vsub.f32 %v5265, %v5266
        %v5268 = vand.u32 %v5267, 4294901760
        %5269 = vmatpush.msra.mxu0 %v5268
        %v5270 = vand.u32 %v5116, 4294901760
        %5271 = vmatmul.f32.gmra.mxu0 %v5270
        %v5272 = vpop.f32.mrf.mxu0
        %v5273 = vadd.f32 %v5172, %v5272
        %5274 = vdwg.mxu0
        %v5275 = vand.u32 %v5132, 4294901760
        %v5276 = vsub.f32 %v5132, %v5275
        %5277 = vmatpush.msra.mxu0 %v5276
        %v5278 = vand.u32 %v5131, 4294901760
        %v5279 = vsub.f32 %v5131, %v5278
        %5280 = vmatpush.msra.mxu0 %v5279
        %v5281 = vand.u32 %v5130, 4294901760
        %v5282 = vsub.f32 %v5130, %v5281
        %5283 = vmatpush.msra.mxu0 %v5282
        %v5284 = vand.u32 %v5129, 4294901760
        %v5285 = vsub.f32 %v5129, %v5284
        %5286 = vmatpush.msra.mxu0 %v5285
        %v5287 = vand.u32 %v5128, 4294901760
        %v5288 = vsub.f32 %v5128, %v5287
        %5289 = vmatpush.msra.mxu0 %v5288
        %v5290 = vand.u32 %v5127, 4294901760
        %v5291 = vsub.f32 %v5127, %v5290
        %5292 = vmatpush.msra.mxu0 %v5291
        %v5293 = vand.u32 %v5126, 4294901760
        %v5294 = vsub.f32 %v5126, %v5293
        %5295 = vmatpush.msra.mxu0 %v5294
        %v5296 = vand.u32 %v5125, 4294901760
        %v5297 = vsub.f32 %v5125, %v5296
        %5298 = vmatpush.msra.mxu0 %v5297
        %v5299 = vand.u32 %v5124, 4294901760
        %v5300 = vsub.f32 %v5124, %v5299
        %5301 = vmatpush.msra.mxu0 %v5300
        %v5302 = vand.u32 %v5123, 4294901760
        %v5303 = vsub.f32 %v5123, %v5302
        %5304 = vmatpush.msra.mxu0 %v5303
        %v5305 = vand.u32 %v5122, 4294901760
        %v5306 = vsub.f32 %v5122, %v5305
        %5307 = vmatpush.msra.mxu0 %v5306
        %v5308 = vand.u32 %v5121, 4294901760
        %v5309 = vsub.f32 %v5121, %v5308
        %5310 = vmatpush.msra.mxu0 %v5309
        %v5311 = vand.u32 %v5120, 4294901760
        %v5312 = vsub.f32 %v5120, %v5311
        %5313 = vmatpush.msra.mxu0 %v5312
        %v5314 = vand.u32 %v5119, 4294901760
        %v5315 = vsub.f32 %v5119, %v5314
        %5316 = vmatpush.msra.mxu0 %v5315
        %v5317 = vand.u32 %v5118, 4294901760
        %v5318 = vsub.f32 %v5118, %v5317
        %5319 = vmatpush.msra.mxu0 %v5318
        %v5320 = vand.u32 %v5117, 4294901760
        %v5321 = vsub.f32 %v5117, %v5320
        %5322 = vmatpush.msra.mxu0 %v5321
        %v5323 = vand.u32 %v5116, 4294901760
        %v5324 = vsub.f32 %v5116, %v5323
        %5325 = vmatmul.f32.gmra.mxu0 %v5324
        %v5326 = vpop.f32.mrf.mxu0
        %v5327 = vadd.f32 %v5273, %v5326
        %5328 = vdwg.mxu0
        %v5329 = vand.u32 %v5132, 4294901760
        %5330 = vmatpush.msra.mxu0 %v5329
        %v5331 = vand.u32 %v5131, 4294901760
        %5332 = vmatpush.msra.mxu0 %v5331
        %v5333 = vand.u32 %v5130, 4294901760
        %5334 = vmatpush.msra.mxu0 %v5333
        %v5335 = vand.u32 %v5129, 4294901760
        %5336 = vmatpush.msra.mxu0 %v5335
        %v5337 = vand.u32 %v5128, 4294901760
        %5338 = vmatpush.msra.mxu0 %v5337
        %v5339 = vand.u32 %v5127, 4294901760
        %5340 = vmatpush.msra.mxu0 %v5339
        %v5341 = vand.u32 %v5126, 4294901760
        %5342 = vmatpush.msra.mxu0 %v5341
        %v5343 = vand.u32 %v5125, 4294901760
        %5344 = vmatpush.msra.mxu0 %v5343
        %v5345 = vand.u32 %v5124, 4294901760
        %5346 = vmatpush.msra.mxu0 %v5345
        %v5347 = vand.u32 %v5123, 4294901760
        %5348 = vmatpush.msra.mxu0 %v5347
        %v5349 = vand.u32 %v5122, 4294901760
        %5350 = vmatpush.msra.mxu0 %v5349
        %v5351 = vand.u32 %v5121, 4294901760
        %5352 = vmatpush.msra.mxu0 %v5351
        %v5353 = vand.u32 %v5120, 4294901760
        %5354 = vmatpush.msra.mxu0 %v5353
        %v5355 = vand.u32 %v5119, 4294901760
        %5356 = vmatpush.msra.mxu0 %v5355
        %v5357 = vand.u32 %v5118, 4294901760
        %5358 = vmatpush.msra.mxu0 %v5357
        %v5359 = vand.u32 %v5117, 4294901760
        %5360 = vmatpush.msra.mxu0 %v5359
        %v5361 = vand.u32 %v5116, 4294901760
        %v5362 = vsub.f32 %v5116, %v5361
        %v5363 = vand.u32 %v5362, 4294901760
        %5364 = vmatmul.f32.gmra.mxu0 %v5363
        %v5365 = vpop.f32.mrf.mxu0
        %v5366 = vadd.f32 %v5327, %v5365
        %5367 = vdwg.mxu0
        %v5368 = vand.u32 %v5132, 4294901760
        %v5369 = vsub.f32 %v5132, %v5368
        %v5370 = vand.u32 %v5369, 4294901760
        %5371 = vmatpush.msra.mxu0 %v5370
        %v5372 = vand.u32 %v5131, 4294901760
        %v5373 = vsub.f32 %v5131, %v5372
        %v5374 = vand.u32 %v5373, 4294901760
        %5375 = vmatpush.msra.mxu0 %v5374
        %v5376 = vand.u32 %v5130, 4294901760
        %v5377 = vsub.f32 %v5130, %v5376
        %v5378 = vand.u32 %v5377, 4294901760
        %5379 = vmatpush.msra.mxu0 %v5378
        %v5380 = vand.u32 %v5129, 4294901760
        %v5381 = vsub.f32 %v5129, %v5380
        %v5382 = vand.u32 %v5381, 4294901760
        %5383 = vmatpush.msra.mxu0 %v5382
        %v5384 = vand.u32 %v5128, 4294901760
        %v5385 = vsub.f32 %v5128, %v5384
        %v5386 = vand.u32 %v5385, 4294901760
        %5387 = vmatpush.msra.mxu0 %v5386
        %v5388 = vand.u32 %v5127, 4294901760
        %v5389 = vsub.f32 %v5127, %v5388
        %v5390 = vand.u32 %v5389, 4294901760
        %5391 = vmatpush.msra.mxu0 %v5390
        %v5392 = vand.u32 %v5126, 4294901760
        %v5393 = vsub.f32 %v5126, %v5392
        %v5394 = vand.u32 %v5393, 4294901760
        %5395 = vmatpush.msra.mxu0 %v5394
        %v5396 = vand.u32 %v5125, 4294901760
        %v5397 = vsub.f32 %v5125, %v5396
        %v5398 = vand.u32 %v5397, 4294901760
        %5399 = vmatpush.msra.mxu0 %v5398
        %v5400 = vand.u32 %v5124, 4294901760
        %v5401 = vsub.f32 %v5124, %v5400
        %v5402 = vand.u32 %v5401, 4294901760
        %5403 = vmatpush.msra.mxu0 %v5402
        %v5404 = vand.u32 %v5123, 4294901760
        %v5405 = vsub.f32 %v5123, %v5404
        %v5406 = vand.u32 %v5405, 4294901760
        %5407 = vmatpush.msra.mxu0 %v5406
        %v5408 = vand.u32 %v5122, 4294901760
        %v5409 = vsub.f32 %v5122, %v5408
        %v5410 = vand.u32 %v5409, 4294901760
        %5411 = vmatpush.msra.mxu0 %v5410
        %v5412 = vand.u32 %v5121, 4294901760
        %v5413 = vsub.f32 %v5121, %v5412
        %v5414 = vand.u32 %v5413, 4294901760
        %5415 = vmatpush.msra.mxu0 %v5414
        %v5416 = vand.u32 %v5120, 4294901760
        %v5417 = vsub.f32 %v5120, %v5416
        %v5418 = vand.u32 %v5417, 4294901760
        %5419 = vmatpush.msra.mxu0 %v5418
        %v5420 = vand.u32 %v5119, 4294901760
        %v5421 = vsub.f32 %v5119, %v5420
        %v5422 = vand.u32 %v5421, 4294901760
        %5423 = vmatpush.msra.mxu0 %v5422
        %v5424 = vand.u32 %v5118, 4294901760
        %v5425 = vsub.f32 %v5118, %v5424
        %v5426 = vand.u32 %v5425, 4294901760
        %5427 = vmatpush.msra.mxu0 %v5426
        %v5428 = vand.u32 %v5117, 4294901760
        %v5429 = vsub.f32 %v5117, %v5428
        %v5430 = vand.u32 %v5429, 4294901760
        %5431 = vmatpush.msra.mxu0 %v5430
        %v5432 = vand.u32 %v5116, 4294901760
        %5433 = vmatmul.f32.gmra.mxu0 %v5432
        %v5434 = vpop.f32.mrf.mxu0
        %v5435 = vadd.f32 %v5366, %v5434
        %5436 = vdwg.mxu0
        %v5437 = vand.u32 %v5132, 4294901760
        %5438 = vmatpush.msra.mxu0 %v5437
        %v5439 = vand.u32 %v5131, 4294901760
        %5440 = vmatpush.msra.mxu0 %v5439
        %v5441 = vand.u32 %v5130, 4294901760
        %5442 = vmatpush.msra.mxu0 %v5441
        %v5443 = vand.u32 %v5129, 4294901760
        %5444 = vmatpush.msra.mxu0 %v5443
        %v5445 = vand.u32 %v5128, 4294901760
        %5446 = vmatpush.msra.mxu0 %v5445
        %v5447 = vand.u32 %v5127, 4294901760
        %5448 = vmatpush.msra.mxu0 %v5447
        %v5449 = vand.u32 %v5126, 4294901760
        %5450 = vmatpush.msra.mxu0 %v5449
        %v5451 = vand.u32 %v5125, 4294901760
        %5452 = vmatpush.msra.mxu0 %v5451
        %v5453 = vand.u32 %v5124, 4294901760
        %5454 = vmatpush.msra.mxu0 %v5453
        %v5455 = vand.u32 %v5123, 4294901760
        %5456 = vmatpush.msra.mxu0 %v5455
        %v5457 = vand.u32 %v5122, 4294901760
        %5458 = vmatpush.msra.mxu0 %v5457
        %v5459 = vand.u32 %v5121, 4294901760
        %5460 = vmatpush.msra.mxu0 %v5459
        %v5461 = vand.u32 %v5120, 4294901760
        %5462 = vmatpush.msra.mxu0 %v5461
        %v5463 = vand.u32 %v5119, 4294901760
        %5464 = vmatpush.msra.mxu0 %v5463
        %v5465 = vand.u32 %v5118, 4294901760
        %5466 = vmatpush.msra.mxu0 %v5465
        %v5467 = vand.u32 %v5117, 4294901760
        %5468 = vmatpush.msra.mxu0 %v5467
        %v5469 = vand.u32 %v5116, 4294901760
        %5470 = vmatmul.f32.gmra.mxu0 %v5469
        %v5471 = vpop.f32.mrf.mxu0
        %v5472 = vadd.f32 %v5435, %v5471
        %5473 = vdwg.mxu0
        %v5474 = vrot.slane %v5472, 4
        %v5475 = vadd.f32 %v5472, %v5474
        %v5476 = vrot.slane %v5475, 2
        %v5477 = vadd.f32 %v5475, %v5476
        %v5478 = vrot.slane %v5477, 1
        %v5479 = vadd.f32 %v5477, %v5478
        %v5480 = vld [vmem:[%s16] sm:$0x1]
        %v5481 = vadd.f32 %v5479, %v5480
        %5482 = vst [vmem:[%s794] sm:$0x1] %v5481
        %s5483 = sand.u32 %s411, 1
        %s5484 = scalar_lea.sflag [#allocation4], %s5483
        %s5485 = sand.u32 %s411, 1
        %s5486 = scalar_lea.vmem [#allocation26], %s5485
        // Predicated region
        $region149: #{cnn_forward.1} parent=87 // pred_check
          %p5487 = pneg %p421
        $region150: #{cnn_forward.1} parent=87 // pred_check_branch
          %5489 = sbr.rel (%p5487) target = $region152
        $region151: #{cnn_forward.1} parent=87 // pred_region
          %5491 = vsyncadd %s5484, 0
          %s5492 = scalar_lea.hbm %s17, %s41
          %s5494 = sshll.u32 %s5486, 4
          %s5495 = int_to_ptr.vmem [resolvable:$true] %s5494
          %s5496 = sshll.u32 %s5492, 4
          %s5497 = int_to_ptr.hbm [resolvable:$true] %s5496
          %5499 = dma.vmem_to_hbm [thread:$0]  %s5495, 16, %s5497, %s5484
        $region152: #{cnn_forward.1} parent=87 // pred_fallthru
          _
      $region88: #{cnn_forward.1} parent=5 // pred_fallthru
        _
      %p5500 = scmp.le.s32.totalorder 2, %s36
      // Predicated region
      $region153: #{cnn_forward.1} parent=5 // pred_check
        %p5501 = pneg %p5500
      $region154: #{cnn_forward.1} parent=5 // pred_check_branch
        %5503 = sbr.rel (%p5501) target = $region156
      $region155: #{cnn_forward.1} parent=5 // pred_region
        %s5504 = ssub.s32 %s36, 2
        // Predicated region
        $region157: #{cnn_forward.1} parent=155 // pred_check
          %p5505 = pneg %p427
        $region158: #{cnn_forward.1} parent=155 // pred_check_branch
          %5507 = sbr.rel (%p5505) target = $region160
        $region159: #{cnn_forward.1} parent=155 // pred_region
          %s5508 = sand.u32 %s412, 1
          %s5509 = scalar_lea.sflag [#allocation4], %s5508
          %s5510 = sand.u32 %s412, 1
          %s5511 = scalar_lea.vmem [#allocation26], %s5510
          %5513 = dma.done %s5509, 16
        $region160: #{cnn_forward.1} parent=155 // pred_fallthru
          _
      $region156: #{cnn_forward.1} parent=5 // pred_fallthru
        _
    $region6: #{cnn_forward.1} parent=1 // loop_footer
      %s40 = sadd.s32 1, %s36
    $region7: #{cnn_forward.1} parent=1 // loop_footer_branch
      %35 = sbr.rel target = $region3
    $region8: #{cnn_forward.1} parent=1 // loop_exit
      _
    %5514 = vsyncpa [#allocation3], 1
    %s5515 = scalar_lea.sflag [#allocation3], 1
    %5516 = vsyncpa %s5515, 1
    %5517 = vsyncpa [#allocation6], 1
    %5518 = vsyncpa [#allocation9], 1
    %5519 = vsyncpa [#allocation12], 1
    %5520 = vsyncpa [#allocation15], 1
    %5521 = vsyncpa [#allocation18], 1
    %5522 = vsyncpa [#allocation21], 1
    %5523 = vsyncpa [#allocation24], 1
    %5524 = vsyncpa [#allocation4], 1
    %s5525 = scalar_lea.sflag [#allocation4], 1
    %5526 = vsyncpa %s5525, 1

</llo_original>
